<compile_context>
chip_gen: v5e
topology: v5e:2x2
jax: 0.10.0
libtpu: 0.0.40
codegen_flags: <defaults>
</compile_context>

<pallas_src>
import functools

import jax
import jax.numpy as jnp
from jax.experimental import pallas as pl
from jax.experimental.pallas import tpu as pltpu

SR = 16000
N_FFT = 1024
HOP = 512
N_MELS = 128
N_FREQS = N_FFT // 2 + 1            # 513
N_FREQS_PAD = 640                   # 5 * 128 -> lane-aligned frequency axis
OUTPUT_DIM = 512
T_TILE_MAX = 512

VMEM_SPEC = pl.BlockSpec(memory_space=pltpu.MemorySpace.VMEM)


def _round_up(x, m):
    return ((x + m - 1) // m) * m


def _conv_vmem_limit():
    """48 MiB on 128 MiB VMEM parts (v5e/v6e); <= half of VMEM on v7x."""
    try:
        cap = pltpu.get_tpu_info().vmem_capacity_bytes
    except Exception:
        cap = 64 * 1024 * 1024        # conservative fallback (v7x-sized)
    return int(min(48 * 1024 * 1024, cap // 2))


CONV_PARAMS = pltpu.CompilerParams(vmem_limit_bytes=_conv_vmem_limit())


# ----------------------------- Pallas kernels ------------------------------ #
def mel_kernel(frames_ref, dft_ref, fb_ref, out_ref):
    """Windowed DFT power spectrum + mel filterbank for one tile of frames."""
    f = frames_ref[...]                                         # (t_tile, n_fft) bf16
    # single MXU stream: [cos | sin] concatenated along the lane axis
    spec = jnp.dot(f, dft_ref[...],
                   preferred_element_type=jnp.float32)          # (t_tile, 1280) f32
    re = spec[:, :N_FREQS_PAD]                                  # layout-free splits
    im = spec[:, N_FREQS_PAD:]
    power = re * re + im * im                                   # (t_tile, 640) f32
    out_ref[...] = jnp.dot(power.astype(jnp.bfloat16), fb_ref[...],
                           preferred_element_type=jnp.float32)  # (t_tile, n_mels)


def _im2col(x_ref, col_ref, h, wp, cin):
    """Copy the 9 lane-shifted 3x3 views into the (9*Cin, H*wp) scratch."""
    n = h * wp
    for dy in range(3):
        for dx in range(3):
            k = 3 * dy + dx
            start = dy * wp + dx          # dy*wp is lane-aligned (wp % 128 == 0)
            col_ref[k * cin:(k + 1) * cin, :] = x_ref[:, start:start + n]


def conv3x3_relu_kernel(h, wp, x_ref, w_ref, b_ref, o_ref, col_ref):
    """3x3 conv (padding=1) + bias + ReLU via one im2col matmul, bf16 output."""
    cin = x_ref.shape[0]
    _im2col(x_ref, col_ref, h, wp, cin)
    acc = jnp.dot(w_ref[...], col_ref[...],
                  preferred_element_type=jnp.float32)           # (Cout, H*wp) f32
    o_ref[...] = jnp.maximum(acc + b_ref[...], 0.0).astype(o_ref.dtype)


def conv3x3_relu_c1_kernel(h, wp, x_ref, w_ref, b_ref, o_ref):
    """Cin==1 3x3 conv + ReLU: broadcast FMA on the VPU (f32 math)."""
    n = h * wp
    cout = w_ref.shape[1]
    accs = []
    for dy in range(3):
        acc = jnp.zeros((cout, n), jnp.float32)
        for dx in range(3):
            k = 3 * dy + dx
            start = dy * wp + dx
            patch = x_ref[:, start:start + n].astype(jnp.float32)   # (1, n)
            acc = acc + w_ref[k] * patch                            # (Cout, n)
        accs.append(acc)
    acc = accs[0] + accs[1] + accs[2]
    o_ref[...] = jnp.maximum(acc + b_ref[...], 0.0).astype(o_ref.dtype)


def conv3x3_relu_pool_linear_kernel(h, wp, x_ref, w_ref, b_ref, mask_ref,
                                    wlt_ref, bl_ref, o_ref, col_ref):
    """3x3 conv + bias + ReLU + AdaptiveAvgPool2d((1,1)) + Linear, fused."""
    cin = x_ref.shape[0]
    _im2col(x_ref, col_ref, h, wp, cin)
    acc = jnp.dot(w_ref[...], col_ref[...],
                  preferred_element_type=jnp.float32)           # (Cout, H*wp) f32
    act = jnp.maximum(acc + b_ref[...], 0.0)
    # masked average over valid columns (mask carries the 1/(H*W) scale)
    pooled = jnp.sum(act * mask_ref[...], axis=1, keepdims=True)    # (Cout, 1)
    # Linear(C, out): (Cin=64, out) weights * pooled, reduced over sublanes
    o_ref[...] = (jnp.sum(wlt_ref[...] * pooled, axis=0, keepdims=True)
                  + bl_ref[...])                                # (1, out_dim)


# ------------------------------ JAX glue ----------------------------------- #
def _hz_to_mel(f):
    return 2595.0 * jnp.log10(1.0 + f / 700.0)


def _mel_to_hz(m):
    return 700.0 * (10.0 ** (m / 2595.0) - 1.0)


def melscale_fbanks(n_freqs, n_mels, f_min, f_max, sr):
    """torchaudio melscale_fbanks (htk scale, norm=None)."""
    all_freqs = jnp.linspace(0.0, sr / 2.0, n_freqs)
    m_pts = jnp.linspace(_hz_to_mel(jnp.float32(f_min)),
                         _hz_to_mel(jnp.float32(f_max)), n_mels + 2)
    f_pts = _mel_to_hz(m_pts)
    f_diff = f_pts[1:] - f_pts[:-1]                      # (n_mels+1,)
    slopes = f_pts[None, :] - all_freqs[:, None]         # (n_freqs, n_mels+2)
    down = -slopes[:, :-2] / f_diff[:-1]
    up = slopes[:, 2:] / f_diff[1:]
    return jnp.maximum(0.0, jnp.minimum(down, up))       # (n_freqs, n_mels)


def mel_spectrogram(mono):
    """torchaudio.transforms.MelSpectrogram(sr=16k, n_fft=1024, hop=512, n_mels=128)."""
    pad = N_FFT // 2
    xp = jnp.pad(mono, (pad, pad), mode="reflect")       # center=True, reflect
    t = 1 + (xp.shape[0] - N_FFT) // HOP

    # Hop-chunk framing: HOP == N_FFT // 2, so frame t = [chunk t, chunk t+1].
    chunks = xp[:(t + 1) * HOP].reshape(t + 1, HOP)
    frames = jnp.concatenate([chunks[:-1], chunks[1:]], axis=1)   # (T, n_fft)

    t_tile = min(T_TILE_MAX, _round_up(t, 16))           # bf16 sublane-friendly
    t_pad = _round_up(t, t_tile)
    frames = jnp.pad(frames, ((0, t_pad - t), (0, 0))).astype(jnp.bfloat16)

    # DFT matrices with the Hann window folded in; freq axis padded 513 -> 640;
    # cos/sin concatenated into a single (1024, 1280) bf16 RHS.
    n = jnp.arange(N_FFT, dtype=jnp.float32)
    window = 0.5 - 0.5 * jnp.cos(2.0 * jnp.pi * n / N_FFT)    # periodic Hann
    nk = (jnp.arange(N_FFT, dtype=jnp.int32)[:, None]
          * jnp.arange(N_FREQS, dtype=jnp.int32)[None, :]) % N_FFT
    ang = 2.0 * jnp.pi * nk.astype(jnp.float32) / N_FFT
    fpad = N_FREQS_PAD - N_FREQS
    cos_m = jnp.pad(window[:, None] * jnp.cos(ang), ((0, 0), (0, fpad)))
    sin_m = jnp.pad(window[:, None] * jnp.sin(ang), ((0, 0), (0, fpad)))
    dft = jnp.concatenate([cos_m, sin_m], axis=1).astype(jnp.bfloat16)   # (1024, 1280)
    fb = jnp.pad(melscale_fbanks(N_FREQS, N_MELS, 0.0, SR / 2.0, SR),
                 ((0, fpad), (0, 0))).astype(jnp.bfloat16)               # (640, 128)

    mel_t = pl.pallas_call(
        mel_kernel,
        out_shape=jax.ShapeDtypeStruct((t_pad, N_MELS), jnp.float32),
        grid=(t_pad // t_tile,),
        in_specs=[
            pl.BlockSpec((t_tile, N_FFT), lambda i: (i, 0)),           # pipelined
            pl.BlockSpec((N_FFT, 2 * N_FREQS_PAD), lambda i: (0, 0)),  # resident
            pl.BlockSpec((N_FREQS_PAD, N_MELS), lambda i: (0, 0)),     # resident
        ],
        out_specs=pl.BlockSpec((t_tile, N_MELS), lambda i: (i, 0)),
        compiler_params=pltpu.CompilerParams(
            dimension_semantics=("parallel",)),
    )(frames, dft, fb)
    return mel_t[:t].T                                    # (n_mels, T) f32


def _pad_flatten(x):
    """Zero-pad (1 top, 2 bottom, 1 left, right up to a lane-aligned width)
    and row-flatten: all 9 shifted 3x3 views become lane-aligned static
    slices (only the dx in {1,2} lane shift remains). Returns bf16."""
    cin, h, wid = x.shape
    wp = _round_up(wid + 2, 128)
    xp = jnp.pad(x, ((0, 0), (1, 2), (1, wp - wid - 1)))  # (Cin, H+3, wp)
    return xp.reshape(cin, (h + 3) * wp).astype(jnp.bfloat16), wp


def conv3x3_relu(x, w, b):
    """Conv2d(Cin, Cout, 3, padding=1) + ReLU; x: (Cin, H, W) -> (Cout, H, W) bf16."""
    cin, h, wid = x.shape
    cout = w.shape[0]
    xflat, wp = _pad_flatten(x)
    n = h * wp
    if cin == 1:
        # degenerate K=1 contraction: broadcast FMA on the VPU (f32 math).
        w9 = jnp.transpose(w, (2, 3, 0, 1)).reshape(9, cout, cin).astype(jnp.float32)
        out_flat = pl.pallas_call(
            functools.partial(conv3x3_relu_c1_kernel, h, wp),
            out_shape=jax.ShapeDtypeStruct((cout, n), jnp.bfloat16),
            in_specs=[VMEM_SPEC] * 3,
            out_specs=VMEM_SPEC,
            compiler_params=CONV_PARAMS,
        )(xflat, w9, b.reshape(cout, 1).astype(jnp.float32))
    else:
        # single im2col matmul: (Cout, 9*Cin) x (9*Cin, H*wp), bf16 MXU, f32 acc
        wmat = jnp.transpose(w, (0, 2, 3, 1)).reshape(cout, 9 * cin).astype(jnp.bfloat16)
        out_flat = pl.pallas_call(
            functools.partial(conv3x3_relu_kernel, h, wp),
            out_shape=jax.ShapeDtypeStruct((cout, n), jnp.bfloat16),
            in_specs=[VMEM_SPEC] * 3,
            out_specs=VMEM_SPEC,
            scratch_shapes=[pltpu.VMEM((9 * cin, n), jnp.bfloat16)],
            compiler_params=CONV_PARAMS,
        )(xflat, wmat, b.reshape(cout, 1).astype(jnp.float32))
    # drop the zero-padded garbage columns on the right of each row
    return out_flat.reshape(cout, h, wp)[:, :, :wid]


def maxpool2(x):
    """nn.MaxPool2d(2): floor mode, stride 2 (cheap XLA reduce between kernels)."""
    c, h, wid = x.shape
    h2, w2 = h // 2, wid // 2
    return x[:, :h2 * 2, :w2 * 2].reshape(c, h2, 2, w2, 2).max(axis=(2, 4))


def conv3x3_relu_pool_linear(x, w, b, wl, bl):
    """Conv2d + ReLU + AdaptiveAvgPool2d((1,1)) + Flatten + Linear, one kernel."""
    cin, h, wid = x.shape
    cout = w.shape[0]
    out_dim = wl.shape[0]
    xflat, wp = _pad_flatten(x)
    n = h * wp
    wmat = jnp.transpose(w, (0, 2, 3, 1)).reshape(cout, 9 * cin).astype(jnp.bfloat16)
    # validity mask over flattened (H, wp) positions, with 1/(H*W) folded in
    col = jnp.arange(n, dtype=jnp.int32) % wp
    mask = jnp.where(col < wid, 1.0 / float(h * wid), 0.0)
    mask = mask.reshape(1, n).astype(jnp.float32)
    return pl.pallas_call(
        functools.partial(conv3x3_relu_pool_linear_kernel, h, wp),
        out_shape=jax.ShapeDtypeStruct((1, out_dim), jnp.float32),
        in_specs=[VMEM_SPEC] * 6,
        out_specs=VMEM_SPEC,
        scratch_shapes=[pltpu.VMEM((9 * cin, n), jnp.bfloat16)],
        compiler_params=CONV_PARAMS,
    )(xflat, wmat, b.reshape(cout, 1).astype(jnp.float32), mask,
      wl.T.astype(jnp.float32), bl.reshape(1, out_dim).astype(jnp.float32))


def audio_feature_extractor(audio, params):
    """Forward pass of AudioFeatureExtractor; audio: (channels, samples)."""
    mono = audio.mean(axis=0) if audio.shape[0] > 1 else audio[0]
    mel = mel_spectrogram(mono)                           # (128, T) f32
    x = mel[None, :, :]                                   # (Cin=1, 128, T)
    x = conv3x3_relu(x, params["w1"], params["b1"])       # (16, 128, T)    bf16
    x = maxpool2(x)                                       # (16, 64, T//2)
    x = conv3x3_relu(x, params["w2"], params["b2"])       # (32, 64, T//2)  bf16
    x = maxpool2(x)                                       # (32, 32, T//4)
    return conv3x3_relu_pool_linear(x, params["w3"], params["b3"],
                                    params["wl"], params["bl"])  # (1, OUTPUT_DIM)


# --------------------------------- main ------------------------------------ #
if __name__ == "__main__":
    key = jax.random.PRNGKey(0)
    ka, k1, k2, k3, k4, k5, k6, k7, k8 = jax.random.split(key, 9)

    # small but semantics-consistent input: 2-channel audio, 4096 samples
    # (needs samples > n_fft//2 for reflect pad, and T >= 4 for the two pools)
    audio = jax.random.normal(ka, (2, 4096), dtype=jnp.float32)

    params = {
        "w1": 0.1 * jax.random.normal(k1, (16, 1, 3, 3), jnp.float32),
        "b1": 0.05 * jax.random.normal(k2, (16,), jnp.float32),
        "w2": 0.1 * jax.random.normal(k3, (32, 16, 3, 3), jnp.float32),
        "b2": 0.05 * jax.random.normal(k4, (32,), jnp.float32),
        "w3": 0.1 * jax.random.normal(k5, (64, 32, 3, 3), jnp.float32),
        "b3": 0.05 * jax.random.normal(k6, (64,), jnp.float32),
        "wl": 0.1 * jax.random.normal(k7, (OUTPUT_DIM, 64), jnp.float32),  # (out, in)
        "bl": 0.05 * jax.random.normal(k8, (OUTPUT_DIM,), jnp.float32),
    }

    feats = audio_feature_extractor(audio, params)
    feats = jax.block_until_ready(feats)

    assert feats.shape == (1, OUTPUT_DIM), feats.shape
    assert bool(jnp.all(jnp.isfinite(feats)))
    print("KERNEL_OK")
</pallas_src>

<mosaic_0001>
module attributes {stable_mosaic.version = 11 : i64} {
  func.func @mel_kernel(%arg0: i32, %arg1: memref<16x1024xbf16, #tpu.memory_space<vmem>>, %arg2: memref<1024x1280xbf16, #tpu.memory_space<vmem>>, %arg3: memref<640x128xbf16, #tpu.memory_space<vmem>>, %arg4: memref<16x128xf32, #tpu.memory_space<vmem>>) attributes {dimension_semantics = [#tpu.dimension_semantics<parallel>], iteration_bounds = array<i64: 1>, scalar_prefetch = 0 : i64, scratch_operands = 0 : i64, tpu.core_type = #tpu.core_type<tc>, window_params = [{transform_indices = @transform_0, window_bounds = array<i64: 16, 1024>}, {pipeline_mode = #tpu.pipeline_mode<synchronous>, transform_indices = @transform_1, window_bounds = array<i64: 1024, 1280>}, {pipeline_mode = #tpu.pipeline_mode<synchronous>, transform_indices = @transform_2, window_bounds = array<i64: 640, 128>}, {transform_indices = @transform_3, window_bounds = array<i64: 16, 128>}]} {
    %c0 = arith.constant 0 : index
    %c0_0 = arith.constant 0 : index
    %0 = vector.load %arg1[%c0, %c0_0] : memref<16x1024xbf16, #tpu.memory_space<vmem>>, vector<16x1024xbf16>
    %c0_1 = arith.constant 0 : index
    %c0_2 = arith.constant 0 : index
    %1 = vector.load %arg2[%c0_1, %c0_2] : memref<1024x1280xbf16, #tpu.memory_space<vmem>>, vector<1024x1280xbf16>
    %cst = arith.constant dense<0.000000e+00> : vector<16x1280xf32>
    %2 = tpu.matmul %0, %1, %cst {dimension_numbers = #tpu.dot_dimension_numbers<[1], [0], [0], [1], [0, 0, 1, 1], [], []>} : vector<16x1024xbf16>, vector<1024x1280xbf16>, vector<16x1280xf32> -> vector<16x1280xf32>
    %3 = vector.extract_strided_slice %2 {offsets = [0, 0], sizes = [16, 640], strides = [1, 1]} : vector<16x1280xf32> to vector<16x640xf32>
    %4 = vector.extract_strided_slice %2 {offsets = [0, 640], sizes = [16, 640], strides = [1, 1]} : vector<16x1280xf32> to vector<16x640xf32>
    %5 = arith.mulf %3, %3 : vector<16x640xf32>
    %6 = arith.mulf %4, %4 : vector<16x640xf32>
    %7 = arith.addf %5, %6 : vector<16x640xf32>
    %8 = arith.truncf %7 : vector<16x640xf32> to vector<16x640xbf16>
    %c0_3 = arith.constant 0 : index
    %c0_4 = arith.constant 0 : index
    %9 = vector.load %arg3[%c0_3, %c0_4] : memref<640x128xbf16, #tpu.memory_space<vmem>>, vector<640x128xbf16>
    %cst_5 = arith.constant dense<0.000000e+00> : vector<16x128xf32>
    %10 = tpu.matmul %8, %9, %cst_5 {dimension_numbers = #tpu.dot_dimension_numbers<[1], [0], [0], [1], [0, 0, 1, 1], [], []>} : vector<16x640xbf16>, vector<640x128xbf16>, vector<16x128xf32> -> vector<16x128xf32>
    %c0_6 = arith.constant 0 : index
    %c0_7 = arith.constant 0 : index
    %11 = vector.load %arg4[%c0_6, %c0_7] : memref<16x128xf32, #tpu.memory_space<vmem>>, vector<16x128xf32>
    tpu.vector_store %arg4[%c0_6, %c0_7], %10 {strides = array<i32>} : memref<16x128xf32, #tpu.memory_space<vmem>>, vector<16x128xf32>,
    return
  }
  func.func @transform_0(%arg0: i32) -> (i32, i32) {
    %c0_i32 = arith.constant 0 : i32
    %c0_i32_0 = arith.constant 0 : i32
    return %arg0, %c0_i32 : i32, i32
  }
  func.func @transform_1(%arg0: i32) -> (i32, i32) {
    %c0_i32 = arith.constant 0 : i32
    %c0_i32_0 = arith.constant 0 : i32
    %c0_i32_1 = arith.constant 0 : i32
    return %c0_i32, %c0_i32_0 : i32, i32
  }
  func.func @transform_2(%arg0: i32) -> (i32, i32) {
    %c0_i32 = arith.constant 0 : i32
    %c0_i32_0 = arith.constant 0 : i32
    %c0_i32_1 = arith.constant 0 : i32
    return %c0_i32, %c0_i32_0 : i32, i32
  }
  func.func @transform_3(%arg0: i32) -> (i32, i32) {
    %c0_i32 = arith.constant 0 : i32
    %c0_i32_0 = arith.constant 0 : i32
    return %arg0, %c0_i32 : i32, i32
  }
}

</mosaic_0001>

<llo_original>
// kernel: tpu_custom_call.1
$region0: #{tpu_custom_call.1}
  #allocation0 [shape = 'u32[]', space=smem, size = 0x4, offset = 0x4, fixed_abs, tag = 'smem constant byte address 0x4 - core index']
  #allocation1 [shape = 'u32[72,128]{1,0:T(1,128)}', space=vmem, size = 0x9000, scoped, tag = 'internal scratch']
  %s0 = inlined_call_operand.hbm [shape: bf16[16,1024], index: 0, kind: input, shape index: {}]
  %s1 = inlined_call_operand.hbm [shape: bf16[1024,1280], index: 1, kind: input, shape index: {}]
  %s2 = inlined_call_operand.hbm [shape: bf16[640,128], index: 2, kind: input, shape index: {}]
  %s3 = inlined_call_operand.hbm [shape: f32[16,128], index: 3, kind: output, shape index: {}]
  %s4 = sld [smem:[#allocation0]]
  $region34: #{tpu_custom_call.1} parent=0
    _
  %s6 = ssub.s32 1, %s4
  %s7 = scalar_select 0, %s6, %s4
  $region1: #{tpu_custom_call.1} parent=0
    #allocation2 [shape = 'u8[32768]{0}', space=vmem, size = 0x8000, scoped, tag = 'input window, operand 0, single buffered']
    #allocation3 [shape = 's32[1]{0}', space=sflag, size = 0x4, scoped, tag = 'scoped memory for tpu_custom_call.1']
    #allocation4 [shape = 's32[1]{0}', space=sflag, size = 0x4, scoped, tag = 'scoped memory for tpu_custom_call.1']
    #allocation5 [shape = 'u8[2621440]{0}', space=vmem, size = 0x280000, scoped, tag = 'input window, operand 1, single buffered']
    #allocation6 [shape = 's32[1]{0}', space=sflag, size = 0x4, scoped, tag = 'scoped memory for tpu_custom_call.1']
    #allocation7 [shape = 'u8[163840]{0}', space=vmem, size = 0x28000, scoped, tag = 'input window, operand 2, single buffered']
    #allocation8 [shape = 'u8[8192]{0}', space=vmem, size = 0x2000, scoped, tag = 'output window, operand 0, single buffered']
    %8 = vsyncpa [#allocation3], 0
    %9 = vsyncpa [#allocation6], 0
    %10 = vsyncpa [#allocation4], 0
    // Predicated region
    $region2: #{tpu_custom_call.1} parent=1 // pred_check
      _
    $region3: #{tpu_custom_call.1} parent=1 // pred_check_branch
      %12 = sbr.rel (0) target = $region5
    $region4: #{tpu_custom_call.1} parent=1 // pred_region
      %14 = vsyncadd [#allocation3], 0
      %s15 = sshll.u32 %s0, 4
      %s16 = int_to_ptr.hbm [resolvable:$true] %s15
      %s17 = sshll.u32 [#allocation2], 4
      %s18 = int_to_ptr.vmem [resolvable:$true] %s17
      %23 = dma.hbm_to_vmem [thread:$0]  %s16, 1024, %s18, [#allocation3], 512, 512, 32
    $region5: #{tpu_custom_call.1} parent=1 // pred_fallthru
      _
    // Predicated region
    $region6: #{tpu_custom_call.1} parent=1 // pred_check
      _
    $region7: #{tpu_custom_call.1} parent=1 // pred_check_branch
      %25 = sbr.rel (0) target = $region9
    $region8: #{tpu_custom_call.1} parent=1 // pred_region
      %27 = vsyncadd [#allocation6], 0
      %s28 = sshll.u32 %s1, 4
      %s29 = int_to_ptr.hbm [resolvable:$true] %s28
      %s30 = sshll.u32 [#allocation5], 4
      %s31 = int_to_ptr.vmem [resolvable:$true] %s30
      %36 = dma.hbm_to_vmem [thread:$0]  %s29, 81920, %s31, [#allocation6], 640, 640, 40
    $region9: #{tpu_custom_call.1} parent=1 // pred_fallthru
      _
    // Predicated region
    $region10: #{tpu_custom_call.1} parent=1 // pred_check
      _
    $region11: #{tpu_custom_call.1} parent=1 // pred_check_branch
      %38 = sbr.rel (0) target = $region13
    $region12: #{tpu_custom_call.1} parent=1 // pred_region
      %40 = vsyncadd [#allocation6], 0
      %s41 = sshll.u32 %s2, 4
      %s42 = int_to_ptr.hbm [resolvable:$true] %s41
      %s43 = sshll.u32 [#allocation7], 4
      %s44 = int_to_ptr.vmem [resolvable:$true] %s43
      %49 = dma.hbm_to_vmem [thread:$0]  %s42, 5120, %s44, [#allocation6], 64, 64, 4
    $region13: #{tpu_custom_call.1} parent=1 // pred_fallthru
      _
    // Predicated region
    $region14: #{tpu_custom_call.1} parent=1 // pred_check
      _
    $region15: #{tpu_custom_call.1} parent=1 // pred_check_branch
      %51 = sbr.rel (0) target = $region17
    $region16: #{tpu_custom_call.1} parent=1 // pred_region
      %53 = dma.done [#allocation3], 1024
    $region17: #{tpu_custom_call.1} parent=1 // pred_fallthru
      _
    // Predicated region
    $region18: #{tpu_custom_call.1} parent=1 // pred_check
      _
    $region19: #{tpu_custom_call.1} parent=1 // pred_check_branch
      %55 = sbr.rel (0) target = $region21
    $region20: #{tpu_custom_call.1} parent=1 // pred_region
      %57 = dma.done [#allocation6], 81920
    $region21: #{tpu_custom_call.1} parent=1 // pred_fallthru
      _
    // Predicated region
    $region22: #{tpu_custom_call.1} parent=1 // pred_check
      _
    $region23: #{tpu_custom_call.1} parent=1 // pred_check_branch
      %59 = sbr.rel (0) target = $region25
    $region24: #{tpu_custom_call.1} parent=1 // pred_region
      %61 = dma.done [#allocation6], 5120
    $region25: #{tpu_custom_call.1} parent=1 // pred_fallthru
      _
    %v62 = vld [vmem:[#allocation2] sm:$0xff]
    %v63 = vld [vmem:[#allocation2 + $0x8] sm:$0xff]
    %v64 = vld [vmem:[#allocation2 + $0x10] sm:$0xff]
    %v65 = vld [vmem:[#allocation2 + $0x18] sm:$0xff]
    %v66 = vld [vmem:[#allocation2 + $0x20] sm:$0xff]
    %v67 = vld [vmem:[#allocation2 + $0x28] sm:$0xff]
    %v68 = vld [vmem:[#allocation2 + $0x30] sm:$0xff]
    %v69 = vld [vmem:[#allocation2 + $0x38] sm:$0xff]
    %v70 = vld [vmem:[#allocation5] sm:$0xff]
    %v71 = vld [vmem:[#allocation5 + $0x8] sm:$0xff]
    %v72 = vld [vmem:[#allocation5 + $0x10] sm:$0xff]
    %v73 = vld [vmem:[#allocation5 + $0x18] sm:$0xff]
    %v74 = vld [vmem:[#allocation5 + $0x20] sm:$0xff]
    %v75 = vld [vmem:[#allocation5 + $0x28] sm:$0xff]
    %v76 = vld [vmem:[#allocation5 + $0x30] sm:$0xff]
    %v77 = vld [vmem:[#allocation5 + $0x38] sm:$0xff]
    %v78 = vld [vmem:[#allocation5 + $0x40] sm:$0xff]
    %v79 = vld [vmem:[#allocation5 + $0x48] sm:$0xff]
    %v80 = vld [vmem:[#allocation5 + $0x50] sm:$0xff]
    %v81 = vld [vmem:[#allocation5 + $0x58] sm:$0xff]
    %v82 = vld [vmem:[#allocation5 + $0x60] sm:$0xff]
    %v83 = vld [vmem:[#allocation5 + $0x68] sm:$0xff]
    %v84 = vld [vmem:[#allocation5 + $0x70] sm:$0xff]
    %v85 = vld [vmem:[#allocation5 + $0x78] sm:$0xff]
    %v86 = vld [vmem:[#allocation5 + $0x80] sm:$0xff]
    %v87 = vld [vmem:[#allocation5 + $0x88] sm:$0xff]
    %v88 = vld [vmem:[#allocation5 + $0x90] sm:$0xff]
    %v89 = vld [vmem:[#allocation5 + $0x98] sm:$0xff]
    %v90 = vld [vmem:[#allocation5 + $0xa0] sm:$0xff]
    %v91 = vld [vmem:[#allocation5 + $0xa8] sm:$0xff]
    %v92 = vld [vmem:[#allocation5 + $0xb0] sm:$0xff]
    %v93 = vld [vmem:[#allocation5 + $0xb8] sm:$0xff]
    %v94 = vld [vmem:[#allocation5 + $0xc0] sm:$0xff]
    %v95 = vld [vmem:[#allocation5 + $0xc8] sm:$0xff]
    %v96 = vld [vmem:[#allocation5 + $0xd0] sm:$0xff]
    %v97 = vld [vmem:[#allocation5 + $0xd8] sm:$0xff]
    %v98 = vld [vmem:[#allocation5 + $0xe0] sm:$0xff]
    %v99 = vld [vmem:[#allocation5 + $0xe8] sm:$0xff]
    %v100 = vld [vmem:[#allocation5 + $0xf0] sm:$0xff]
    %v101 = vld [vmem:[#allocation5 + $0xf8] sm:$0xff]
    %v102 = vld [vmem:[#allocation5 + $0x100] sm:$0xff]
    %v103 = vld [vmem:[#allocation5 + $0x108] sm:$0xff]
    %v104 = vld [vmem:[#allocation5 + $0x110] sm:$0xff]
    %v105 = vld [vmem:[#allocation5 + $0x118] sm:$0xff]
    %v106 = vld [vmem:[#allocation5 + $0x120] sm:$0xff]
    %v107 = vld [vmem:[#allocation5 + $0x128] sm:$0xff]
    %v108 = vld [vmem:[#allocation5 + $0x130] sm:$0xff]
    %v109 = vld [vmem:[#allocation5 + $0x138] sm:$0xff]
    %v110 = vld [vmem:[#allocation5 + $0x140] sm:$0xff]
    %v111 = vld [vmem:[#allocation5 + $0x148] sm:$0xff]
    %v112 = vld [vmem:[#allocation5 + $0x150] sm:$0xff]
    %v113 = vld [vmem:[#allocation5 + $0x158] sm:$0xff]
    %v114 = vld [vmem:[#allocation5 + $0x160] sm:$0xff]
    %v115 = vld [vmem:[#allocation5 + $0x168] sm:$0xff]
    %v116 = vld [vmem:[#allocation5 + $0x170] sm:$0xff]
    %v117 = vld [vmem:[#allocation5 + $0x178] sm:$0xff]
    %v118 = vld [vmem:[#allocation5 + $0x180] sm:$0xff]
    %v119 = vld [vmem:[#allocation5 + $0x188] sm:$0xff]
    %v120 = vld [vmem:[#allocation5 + $0x190] sm:$0xff]
    %v121 = vld [vmem:[#allocation5 + $0x198] sm:$0xff]
    %v122 = vld [vmem:[#allocation5 + $0x1a0] sm:$0xff]
    %v123 = vld [vmem:[#allocation5 + $0x1a8] sm:$0xff]
    %v124 = vld [vmem:[#allocation5 + $0x1b0] sm:$0xff]
    %v125 = vld [vmem:[#allocation5 + $0x1b8] sm:$0xff]
    %v126 = vld [vmem:[#allocation5 + $0x1c0] sm:$0xff]
    %v127 = vld [vmem:[#allocation5 + $0x1c8] sm:$0xff]
    %v128 = vld [vmem:[#allocation5 + $0x1d0] sm:$0xff]
    %v129 = vld [vmem:[#allocation5 + $0x1d8] sm:$0xff]
    %v130 = vld [vmem:[#allocation5 + $0x1e0] sm:$0xff]
    %v131 = vld [vmem:[#allocation5 + $0x1e8] sm:$0xff]
    %v132 = vld [vmem:[#allocation5 + $0x1f0] sm:$0xff]
    %v133 = vld [vmem:[#allocation5 + $0x1f8] sm:$0xff]
    %v134 = vld [vmem:[#allocation5 + $0x200] sm:$0xff]
    %v135 = vld [vmem:[#allocation5 + $0x208] sm:$0xff]
    %v136 = vld [vmem:[#allocation5 + $0x210] sm:$0xff]
    %v137 = vld [vmem:[#allocation5 + $0x218] sm:$0xff]
    %v138 = vld [vmem:[#allocation5 + $0x220] sm:$0xff]
    %v139 = vld [vmem:[#allocation5 + $0x228] sm:$0xff]
    %v140 = vld [vmem:[#allocation5 + $0x230] sm:$0xff]
    %v141 = vld [vmem:[#allocation5 + $0x238] sm:$0xff]
    %v142 = vld [vmem:[#allocation5 + $0x240] sm:$0xff]
    %v143 = vld [vmem:[#allocation5 + $0x248] sm:$0xff]
    %v144 = vld [vmem:[#allocation5 + $0x250] sm:$0xff]
    %v145 = vld [vmem:[#allocation5 + $0x258] sm:$0xff]
    %v146 = vld [vmem:[#allocation5 + $0x260] sm:$0xff]
    %v147 = vld [vmem:[#allocation5 + $0x268] sm:$0xff]
    %v148 = vld [vmem:[#allocation5 + $0x270] sm:$0xff]
    %v149 = vld [vmem:[#allocation5 + $0x278] sm:$0xff]
    %v150 = vld [vmem:[#allocation5 + $0x280] sm:$0xff]
    %v151 = vld [vmem:[#allocation5 + $0x288] sm:$0xff]
    %v152 = vld [vmem:[#allocation5 + $0x290] sm:$0xff]
    %v153 = vld [vmem:[#allocation5 + $0x298] sm:$0xff]
    %v154 = vld [vmem:[#allocation5 + $0x2a0] sm:$0xff]
    %v155 = vld [vmem:[#allocation5 + $0x2a8] sm:$0xff]
    %v156 = vld [vmem:[#allocation5 + $0x2b0] sm:$0xff]
    %v157 = vld [vmem:[#allocation5 + $0x2b8] sm:$0xff]
    %v158 = vld [vmem:[#allocation5 + $0x2c0] sm:$0xff]
    %v159 = vld [vmem:[#allocation5 + $0x2c8] sm:$0xff]
    %v160 = vld [vmem:[#allocation5 + $0x2d0] sm:$0xff]
    %v161 = vld [vmem:[#allocation5 + $0x2d8] sm:$0xff]
    %v162 = vld [vmem:[#allocation5 + $0x2e0] sm:$0xff]
    %v163 = vld [vmem:[#allocation5 + $0x2e8] sm:$0xff]
    %v164 = vld [vmem:[#allocation5 + $0x2f0] sm:$0xff]
    %v165 = vld [vmem:[#allocation5 + $0x2f8] sm:$0xff]
    %v166 = vld [vmem:[#allocation5 + $0x300] sm:$0xff]
    %v167 = vld [vmem:[#allocation5 + $0x308] sm:$0xff]
    %v168 = vld [vmem:[#allocation5 + $0x310] sm:$0xff]
    %v169 = vld [vmem:[#allocation5 + $0x318] sm:$0xff]
    %v170 = vld [vmem:[#allocation5 + $0x320] sm:$0xff]
    %v171 = vld [vmem:[#allocation5 + $0x328] sm:$0xff]
    %v172 = vld [vmem:[#allocation5 + $0x330] sm:$0xff]
    %v173 = vld [vmem:[#allocation5 + $0x338] sm:$0xff]
    %v174 = vld [vmem:[#allocation5 + $0x340] sm:$0xff]
    %v175 = vld [vmem:[#allocation5 + $0x348] sm:$0xff]
    %v176 = vld [vmem:[#allocation5 + $0x350] sm:$0xff]
    %v177 = vld [vmem:[#allocation5 + $0x358] sm:$0xff]
    %v178 = vld [vmem:[#allocation5 + $0x360] sm:$0xff]
    %v179 = vld [vmem:[#allocation5 + $0x368] sm:$0xff]
    %v180 = vld [vmem:[#allocation5 + $0x370] sm:$0xff]
    %v181 = vld [vmem:[#allocation5 + $0x378] sm:$0xff]
    %v182 = vld [vmem:[#allocation5 + $0x380] sm:$0xff]
    %v183 = vld [vmem:[#allocation5 + $0x388] sm:$0xff]
    %v184 = vld [vmem:[#allocation5 + $0x390] sm:$0xff]
    %v185 = vld [vmem:[#allocation5 + $0x398] sm:$0xff]
    %v186 = vld [vmem:[#allocation5 + $0x3a0] sm:$0xff]
    %v187 = vld [vmem:[#allocation5 + $0x3a8] sm:$0xff]
    %v188 = vld [vmem:[#allocation5 + $0x3b0] sm:$0xff]
    %v189 = vld [vmem:[#allocation5 + $0x3b8] sm:$0xff]
    %v190 = vld [vmem:[#allocation5 + $0x3c0] sm:$0xff]
    %v191 = vld [vmem:[#allocation5 + $0x3c8] sm:$0xff]
    %v192 = vld [vmem:[#allocation5 + $0x3d0] sm:$0xff]
    %v193 = vld [vmem:[#allocation5 + $0x3d8] sm:$0xff]
    %v194 = vld [vmem:[#allocation5 + $0x3e0] sm:$0xff]
    %v195 = vld [vmem:[#allocation5 + $0x3e8] sm:$0xff]
    %v196 = vld [vmem:[#allocation5 + $0x3f0] sm:$0xff]
    %v197 = vld [vmem:[#allocation5 + $0x3f8] sm:$0xff]
    %v198 = vld [vmem:[#allocation5 + $0x400] sm:$0xff]
    %v199 = vld [vmem:[#allocation5 + $0x408] sm:$0xff]
    %v200 = vld [vmem:[#allocation5 + $0x410] sm:$0xff]
    %v201 = vld [vmem:[#allocation5 + $0x418] sm:$0xff]
    %v202 = vld [vmem:[#allocation5 + $0x420] sm:$0xff]
    %v203 = vld [vmem:[#allocation5 + $0x428] sm:$0xff]
    %v204 = vld [vmem:[#allocation5 + $0x430] sm:$0xff]
    %v205 = vld [vmem:[#allocation5 + $0x438] sm:$0xff]
    %v206 = vld [vmem:[#allocation5 + $0x440] sm:$0xff]
    %v207 = vld [vmem:[#allocation5 + $0x448] sm:$0xff]
    %v208 = vld [vmem:[#allocation5 + $0x450] sm:$0xff]
    %v209 = vld [vmem:[#allocation5 + $0x458] sm:$0xff]
    %v210 = vld [vmem:[#allocation5 + $0x460] sm:$0xff]
    %v211 = vld [vmem:[#allocation5 + $0x468] sm:$0xff]
    %v212 = vld [vmem:[#allocation5 + $0x470] sm:$0xff]
    %v213 = vld [vmem:[#allocation5 + $0x478] sm:$0xff]
    %v214 = vld [vmem:[#allocation5 + $0x480] sm:$0xff]
    %v215 = vld [vmem:[#allocation5 + $0x488] sm:$0xff]
    %v216 = vld [vmem:[#allocation5 + $0x490] sm:$0xff]
    %v217 = vld [vmem:[#allocation5 + $0x498] sm:$0xff]
    %v218 = vld [vmem:[#allocation5 + $0x4a0] sm:$0xff]
    %v219 = vld [vmem:[#allocation5 + $0x4a8] sm:$0xff]
    %v220 = vld [vmem:[#allocation5 + $0x4b0] sm:$0xff]
    %v221 = vld [vmem:[#allocation5 + $0x4b8] sm:$0xff]
    %v222 = vld [vmem:[#allocation5 + $0x4c0] sm:$0xff]
    %v223 = vld [vmem:[#allocation5 + $0x4c8] sm:$0xff]
    %v224 = vld [vmem:[#allocation5 + $0x4d0] sm:$0xff]
    %v225 = vld [vmem:[#allocation5 + $0x4d8] sm:$0xff]
    %v226 = vld [vmem:[#allocation5 + $0x4e0] sm:$0xff]
    %v227 = vld [vmem:[#allocation5 + $0x4e8] sm:$0xff]
    %v228 = vld [vmem:[#allocation5 + $0x4f0] sm:$0xff]
    %v229 = vld [vmem:[#allocation5 + $0x4f8] sm:$0xff]
    %v230 = vld [vmem:[#allocation5 + $0x500] sm:$0xff]
    %v231 = vld [vmem:[#allocation5 + $0x508] sm:$0xff]
    %v232 = vld [vmem:[#allocation5 + $0x510] sm:$0xff]
    %v233 = vld [vmem:[#allocation5 + $0x518] sm:$0xff]
    %v234 = vld [vmem:[#allocation5 + $0x520] sm:$0xff]
    %v235 = vld [vmem:[#allocation5 + $0x528] sm:$0xff]
    %v236 = vld [vmem:[#allocation5 + $0x530] sm:$0xff]
    %v237 = vld [vmem:[#allocation5 + $0x538] sm:$0xff]
    %v238 = vld [vmem:[#allocation5 + $0x540] sm:$0xff]
    %v239 = vld [vmem:[#allocation5 + $0x548] sm:$0xff]
    %v240 = vld [vmem:[#allocation5 + $0x550] sm:$0xff]
    %v241 = vld [vmem:[#allocation5 + $0x558] sm:$0xff]
    %v242 = vld [vmem:[#allocation5 + $0x560] sm:$0xff]
    %v243 = vld [vmem:[#allocation5 + $0x568] sm:$0xff]
    %v244 = vld [vmem:[#allocation5 + $0x570] sm:$0xff]
    %v245 = vld [vmem:[#allocation5 + $0x578] sm:$0xff]
    %v246 = vld [vmem:[#allocation5 + $0x580] sm:$0xff]
    %v247 = vld [vmem:[#allocation5 + $0x588] sm:$0xff]
    %v248 = vld [vmem:[#allocation5 + $0x590] sm:$0xff]
    %v249 = vld [vmem:[#allocation5 + $0x598] sm:$0xff]
    %v250 = vld [vmem:[#allocation5 + $0x5a0] sm:$0xff]
    %v251 = vld [vmem:[#allocation5 + $0x5a8] sm:$0xff]
    %v252 = vld [vmem:[#allocation5 + $0x5b0] sm:$0xff]
    %v253 = vld [vmem:[#allocation5 + $0x5b8] sm:$0xff]
    %v254 = vld [vmem:[#allocation5 + $0x5c0] sm:$0xff]
    %v255 = vld [vmem:[#allocation5 + $0x5c8] sm:$0xff]
    %v256 = vld [vmem:[#allocation5 + $0x5d0] sm:$0xff]
    %v257 = vld [vmem:[#allocation5 + $0x5d8] sm:$0xff]
    %v258 = vld [vmem:[#allocation5 + $0x5e0] sm:$0xff]
    %v259 = vld [vmem:[#allocation5 + $0x5e8] sm:$0xff]
    %v260 = vld [vmem:[#allocation5 + $0x5f0] sm:$0xff]
    %v261 = vld [vmem:[#allocation5 + $0x5f8] sm:$0xff]
    %v262 = vld [vmem:[#allocation5 + $0x600] sm:$0xff]
    %v263 = vld [vmem:[#allocation5 + $0x608] sm:$0xff]
    %v264 = vld [vmem:[#allocation5 + $0x610] sm:$0xff]
    %v265 = vld [vmem:[#allocation5 + $0x618] sm:$0xff]
    %v266 = vld [vmem:[#allocation5 + $0x620] sm:$0xff]
    %v267 = vld [vmem:[#allocation5 + $0x628] sm:$0xff]
    %v268 = vld [vmem:[#allocation5 + $0x630] sm:$0xff]
    %v269 = vld [vmem:[#allocation5 + $0x638] sm:$0xff]
    %v270 = vld [vmem:[#allocation5 + $0x640] sm:$0xff]
    %v271 = vld [vmem:[#allocation5 + $0x648] sm:$0xff]
    %v272 = vld [vmem:[#allocation5 + $0x650] sm:$0xff]
    %v273 = vld [vmem:[#allocation5 + $0x658] sm:$0xff]
    %v274 = vld [vmem:[#allocation5 + $0x660] sm:$0xff]
    %v275 = vld [vmem:[#allocation5 + $0x668] sm:$0xff]
    %v276 = vld [vmem:[#allocation5 + $0x670] sm:$0xff]
    %v277 = vld [vmem:[#allocation5 + $0x678] sm:$0xff]
    %v278 = vld [vmem:[#allocation5 + $0x680] sm:$0xff]
    %v279 = vld [vmem:[#allocation5 + $0x688] sm:$0xff]
    %v280 = vld [vmem:[#allocation5 + $0x690] sm:$0xff]
    %v281 = vld [vmem:[#allocation5 + $0x698] sm:$0xff]
    %v282 = vld [vmem:[#allocation5 + $0x6a0] sm:$0xff]
    %v283 = vld [vmem:[#allocation5 + $0x6a8] sm:$0xff]
    %v284 = vld [vmem:[#allocation5 + $0x6b0] sm:$0xff]
    %v285 = vld [vmem:[#allocation5 + $0x6b8] sm:$0xff]
    %v286 = vld [vmem:[#allocation5 + $0x6c0] sm:$0xff]
    %v287 = vld [vmem:[#allocation5 + $0x6c8] sm:$0xff]
    %v288 = vld [vmem:[#allocation5 + $0x6d0] sm:$0xff]
    %v289 = vld [vmem:[#allocation5 + $0x6d8] sm:$0xff]
    %v290 = vld [vmem:[#allocation5 + $0x6e0] sm:$0xff]
    %v291 = vld [vmem:[#allocation5 + $0x6e8] sm:$0xff]
    %v292 = vld [vmem:[#allocation5 + $0x6f0] sm:$0xff]
    %v293 = vld [vmem:[#allocation5 + $0x6f8] sm:$0xff]
    %v294 = vld [vmem:[#allocation5 + $0x700] sm:$0xff]
    %v295 = vld [vmem:[#allocation5 + $0x708] sm:$0xff]
    %v296 = vld [vmem:[#allocation5 + $0x710] sm:$0xff]
    %v297 = vld [vmem:[#allocation5 + $0x718] sm:$0xff]
    %v298 = vld [vmem:[#allocation5 + $0x720] sm:$0xff]
    %v299 = vld [vmem:[#allocation5 + $0x728] sm:$0xff]
    %v300 = vld [vmem:[#allocation5 + $0x730] sm:$0xff]
    %v301 = vld [vmem:[#allocation5 + $0x738] sm:$0xff]
    %v302 = vld [vmem:[#allocation5 + $0x740] sm:$0xff]
    %v303 = vld [vmem:[#allocation5 + $0x748] sm:$0xff]
    %v304 = vld [vmem:[#allocation5 + $0x750] sm:$0xff]
    %v305 = vld [vmem:[#allocation5 + $0x758] sm:$0xff]
    %v306 = vld [vmem:[#allocation5 + $0x760] sm:$0xff]
    %v307 = vld [vmem:[#allocation5 + $0x768] sm:$0xff]
    %v308 = vld [vmem:[#allocation5 + $0x770] sm:$0xff]
    %v309 = vld [vmem:[#allocation5 + $0x778] sm:$0xff]
    %v310 = vld [vmem:[#allocation5 + $0x780] sm:$0xff]
    %v311 = vld [vmem:[#allocation5 + $0x788] sm:$0xff]
    %v312 = vld [vmem:[#allocation5 + $0x790] sm:$0xff]
    %v313 = vld [vmem:[#allocation5 + $0x798] sm:$0xff]
    %v314 = vld [vmem:[#allocation5 + $0x7a0] sm:$0xff]
    %v315 = vld [vmem:[#allocation5 + $0x7a8] sm:$0xff]
    %v316 = vld [vmem:[#allocation5 + $0x7b0] sm:$0xff]
    %v317 = vld [vmem:[#allocation5 + $0x7b8] sm:$0xff]
    %v318 = vld [vmem:[#allocation5 + $0x7c0] sm:$0xff]
    %v319 = vld [vmem:[#allocation5 + $0x7c8] sm:$0xff]
    %v320 = vld [vmem:[#allocation5 + $0x7d0] sm:$0xff]
    %v321 = vld [vmem:[#allocation5 + $0x7d8] sm:$0xff]
    %v322 = vld [vmem:[#allocation5 + $0x7e0] sm:$0xff]
    %v323 = vld [vmem:[#allocation5 + $0x7e8] sm:$0xff]
    %v324 = vld [vmem:[#allocation5 + $0x7f0] sm:$0xff]
    %v325 = vld [vmem:[#allocation5 + $0x7f8] sm:$0xff]
    %v326 = vld [vmem:[#allocation5 + $0x800] sm:$0xff]
    %v327 = vld [vmem:[#allocation5 + $0x808] sm:$0xff]
    %v328 = vld [vmem:[#allocation5 + $0x810] sm:$0xff]
    %v329 = vld [vmem:[#allocation5 + $0x818] sm:$0xff]
    %v330 = vld [vmem:[#allocation5 + $0x820] sm:$0xff]
    %v331 = vld [vmem:[#allocation5 + $0x828] sm:$0xff]
    %v332 = vld [vmem:[#allocation5 + $0x830] sm:$0xff]
    %v333 = vld [vmem:[#allocation5 + $0x838] sm:$0xff]
    %v334 = vld [vmem:[#allocation5 + $0x840] sm:$0xff]
    %v335 = vld [vmem:[#allocation5 + $0x848] sm:$0xff]
    %v336 = vld [vmem:[#allocation5 + $0x850] sm:$0xff]
    %v337 = vld [vmem:[#allocation5 + $0x858] sm:$0xff]
    %v338 = vld [vmem:[#allocation5 + $0x860] sm:$0xff]
    %v339 = vld [vmem:[#allocation5 + $0x868] sm:$0xff]
    %v340 = vld [vmem:[#allocation5 + $0x870] sm:$0xff]
    %v341 = vld [vmem:[#allocation5 + $0x878] sm:$0xff]
    %v342 = vld [vmem:[#allocation5 + $0x880] sm:$0xff]
    %v343 = vld [vmem:[#allocation5 + $0x888] sm:$0xff]
    %v344 = vld [vmem:[#allocation5 + $0x890] sm:$0xff]
    %v345 = vld [vmem:[#allocation5 + $0x898] sm:$0xff]
    %v346 = vld [vmem:[#allocation5 + $0x8a0] sm:$0xff]
    %v347 = vld [vmem:[#allocation5 + $0x8a8] sm:$0xff]
    %v348 = vld [vmem:[#allocation5 + $0x8b0] sm:$0xff]
    %v349 = vld [vmem:[#allocation5 + $0x8b8] sm:$0xff]
    %v350 = vld [vmem:[#allocation5 + $0x8c0] sm:$0xff]
    %v351 = vld [vmem:[#allocation5 + $0x8c8] sm:$0xff]
    %v352 = vld [vmem:[#allocation5 + $0x8d0] sm:$0xff]
    %v353 = vld [vmem:[#allocation5 + $0x8d8] sm:$0xff]
    %v354 = vld [vmem:[#allocation5 + $0x8e0] sm:$0xff]
    %v355 = vld [vmem:[#allocation5 + $0x8e8] sm:$0xff]
    %v356 = vld [vmem:[#allocation5 + $0x8f0] sm:$0xff]
    %v357 = vld [vmem:[#allocation5 + $0x8f8] sm:$0xff]
    %v358 = vld [vmem:[#allocation5 + $0x900] sm:$0xff]
    %v359 = vld [vmem:[#allocation5 + $0x908] sm:$0xff]
    %v360 = vld [vmem:[#allocation5 + $0x910] sm:$0xff]
    %v361 = vld [vmem:[#allocation5 + $0x918] sm:$0xff]
    %v362 = vld [vmem:[#allocation5 + $0x920] sm:$0xff]
    %v363 = vld [vmem:[#allocation5 + $0x928] sm:$0xff]
    %v364 = vld [vmem:[#allocation5 + $0x930] sm:$0xff]
    %v365 = vld [vmem:[#allocation5 + $0x938] sm:$0xff]
    %v366 = vld [vmem:[#allocation5 + $0x940] sm:$0xff]
    %v367 = vld [vmem:[#allocation5 + $0x948] sm:$0xff]
    %v368 = vld [vmem:[#allocation5 + $0x950] sm:$0xff]
    %v369 = vld [vmem:[#allocation5 + $0x958] sm:$0xff]
    %v370 = vld [vmem:[#allocation5 + $0x960] sm:$0xff]
    %v371 = vld [vmem:[#allocation5 + $0x968] sm:$0xff]
    %v372 = vld [vmem:[#allocation5 + $0x970] sm:$0xff]
    %v373 = vld [vmem:[#allocation5 + $0x978] sm:$0xff]
    %v374 = vld [vmem:[#allocation5 + $0x980] sm:$0xff]
    %v375 = vld [vmem:[#allocation5 + $0x988] sm:$0xff]
    %v376 = vld [vmem:[#allocation5 + $0x990] sm:$0xff]
    %v377 = vld [vmem:[#allocation5 + $0x998] sm:$0xff]
    %v378 = vld [vmem:[#allocation5 + $0x9a0] sm:$0xff]
    %v379 = vld [vmem:[#allocation5 + $0x9a8] sm:$0xff]
    %v380 = vld [vmem:[#allocation5 + $0x9b0] sm:$0xff]
    %v381 = vld [vmem:[#allocation5 + $0x9b8] sm:$0xff]
    %v382 = vld [vmem:[#allocation5 + $0x9c0] sm:$0xff]
    %v383 = vld [vmem:[#allocation5 + $0x9c8] sm:$0xff]
    %v384 = vld [vmem:[#allocation5 + $0x9d0] sm:$0xff]
    %v385 = vld [vmem:[#allocation5 + $0x9d8] sm:$0xff]
    %v386 = vld [vmem:[#allocation5 + $0x9e0] sm:$0xff]
    %v387 = vld [vmem:[#allocation5 + $0x9e8] sm:$0xff]
    %v388 = vld [vmem:[#allocation5 + $0x9f0] sm:$0xff]
    %v389 = vld [vmem:[#allocation5 + $0x9f8] sm:$0xff]
    %v390 = vld [vmem:[#allocation5 + $0xa00] sm:$0xff]
    %v391 = vld [vmem:[#allocation5 + $0xa08] sm:$0xff]
    %v392 = vld [vmem:[#allocation5 + $0xa10] sm:$0xff]
    %v393 = vld [vmem:[#allocation5 + $0xa18] sm:$0xff]
    %v394 = vld [vmem:[#allocation5 + $0xa20] sm:$0xff]
    %v395 = vld [vmem:[#allocation5 + $0xa28] sm:$0xff]
    %v396 = vld [vmem:[#allocation5 + $0xa30] sm:$0xff]
    %v397 = vld [vmem:[#allocation5 + $0xa38] sm:$0xff]
    %v398 = vld [vmem:[#allocation5 + $0xa40] sm:$0xff]
    %v399 = vld [vmem:[#allocation5 + $0xa48] sm:$0xff]
    %v400 = vld [vmem:[#allocation5 + $0xa50] sm:$0xff]
    %v401 = vld [vmem:[#allocation5 + $0xa58] sm:$0xff]
    %v402 = vld [vmem:[#allocation5 + $0xa60] sm:$0xff]
    %v403 = vld [vmem:[#allocation5 + $0xa68] sm:$0xff]
    %v404 = vld [vmem:[#allocation5 + $0xa70] sm:$0xff]
    %v405 = vld [vmem:[#allocation5 + $0xa78] sm:$0xff]
    %v406 = vld [vmem:[#allocation5 + $0xa80] sm:$0xff]
    %v407 = vld [vmem:[#allocation5 + $0xa88] sm:$0xff]
    %v408 = vld [vmem:[#allocation5 + $0xa90] sm:$0xff]
    %v409 = vld [vmem:[#allocation5 + $0xa98] sm:$0xff]
    %v410 = vld [vmem:[#allocation5 + $0xaa0] sm:$0xff]
    %v411 = vld [vmem:[#allocation5 + $0xaa8] sm:$0xff]
    %v412 = vld [vmem:[#allocation5 + $0xab0] sm:$0xff]
    %v413 = vld [vmem:[#allocation5 + $0xab8] sm:$0xff]
    %v414 = vld [vmem:[#allocation5 + $0xac0] sm:$0xff]
    %v415 = vld [vmem:[#allocation5 + $0xac8] sm:$0xff]
    %v416 = vld [vmem:[#allocation5 + $0xad0] sm:$0xff]
    %v417 = vld [vmem:[#allocation5 + $0xad8] sm:$0xff]
    %v418 = vld [vmem:[#allocation5 + $0xae0] sm:$0xff]
    %v419 = vld [vmem:[#allocation5 + $0xae8] sm:$0xff]
    %v420 = vld [vmem:[#allocation5 + $0xaf0] sm:$0xff]
    %v421 = vld [vmem:[#allocation5 + $0xaf8] sm:$0xff]
    %v422 = vld [vmem:[#allocation5 + $0xb00] sm:$0xff]
    %v423 = vld [vmem:[#allocation5 + $0xb08] sm:$0xff]
    %v424 = vld [vmem:[#allocation5 + $0xb10] sm:$0xff]
    %v425 = vld [vmem:[#allocation5 + $0xb18] sm:$0xff]
    %v426 = vld [vmem:[#allocation5 + $0xb20] sm:$0xff]
    %v427 = vld [vmem:[#allocation5 + $0xb28] sm:$0xff]
    %v428 = vld [vmem:[#allocation5 + $0xb30] sm:$0xff]
    %v429 = vld [vmem:[#allocation5 + $0xb38] sm:$0xff]
    %v430 = vld [vmem:[#allocation5 + $0xb40] sm:$0xff]
    %v431 = vld [vmem:[#allocation5 + $0xb48] sm:$0xff]
    %v432 = vld [vmem:[#allocation5 + $0xb50] sm:$0xff]
    %v433 = vld [vmem:[#allocation5 + $0xb58] sm:$0xff]
    %v434 = vld [vmem:[#allocation5 + $0xb60] sm:$0xff]
    %v435 = vld [vmem:[#allocation5 + $0xb68] sm:$0xff]
    %v436 = vld [vmem:[#allocation5 + $0xb70] sm:$0xff]
    %v437 = vld [vmem:[#allocation5 + $0xb78] sm:$0xff]
    %v438 = vld [vmem:[#allocation5 + $0xb80] sm:$0xff]
    %v439 = vld [vmem:[#allocation5 + $0xb88] sm:$0xff]
    %v440 = vld [vmem:[#allocation5 + $0xb90] sm:$0xff]
    %v441 = vld [vmem:[#allocation5 + $0xb98] sm:$0xff]
    %v442 = vld [vmem:[#allocation5 + $0xba0] sm:$0xff]
    %v443 = vld [vmem:[#allocation5 + $0xba8] sm:$0xff]
    %v444 = vld [vmem:[#allocation5 + $0xbb0] sm:$0xff]
    %v445 = vld [vmem:[#allocation5 + $0xbb8] sm:$0xff]
    %v446 = vld [vmem:[#allocation5 + $0xbc0] sm:$0xff]
    %v447 = vld [vmem:[#allocation5 + $0xbc8] sm:$0xff]
    %v448 = vld [vmem:[#allocation5 + $0xbd0] sm:$0xff]
    %v449 = vld [vmem:[#allocation5 + $0xbd8] sm:$0xff]
    %v450 = vld [vmem:[#allocation5 + $0xbe0] sm:$0xff]
    %v451 = vld [vmem:[#allocation5 + $0xbe8] sm:$0xff]
    %v452 = vld [vmem:[#allocation5 + $0xbf0] sm:$0xff]
    %v453 = vld [vmem:[#allocation5 + $0xbf8] sm:$0xff]
    %v454 = vld [vmem:[#allocation5 + $0xc00] sm:$0xff]
    %v455 = vld [vmem:[#allocation5 + $0xc08] sm:$0xff]
    %v456 = vld [vmem:[#allocation5 + $0xc10] sm:$0xff]
    %v457 = vld [vmem:[#allocation5 + $0xc18] sm:$0xff]
    %v458 = vld [vmem:[#allocation5 + $0xc20] sm:$0xff]
    %v459 = vld [vmem:[#allocation5 + $0xc28] sm:$0xff]
    %v460 = vld [vmem:[#allocation5 + $0xc30] sm:$0xff]
    %v461 = vld [vmem:[#allocation5 + $0xc38] sm:$0xff]
    %v462 = vld [vmem:[#allocation5 + $0xc40] sm:$0xff]
    %v463 = vld [vmem:[#allocation5 + $0xc48] sm:$0xff]
    %v464 = vld [vmem:[#allocation5 + $0xc50] sm:$0xff]
    %v465 = vld [vmem:[#allocation5 + $0xc58] sm:$0xff]
    %v466 = vld [vmem:[#allocation5 + $0xc60] sm:$0xff]
    %v467 = vld [vmem:[#allocation5 + $0xc68] sm:$0xff]
    %v468 = vld [vmem:[#allocation5 + $0xc70] sm:$0xff]
    %v469 = vld [vmem:[#allocation5 + $0xc78] sm:$0xff]
    %v470 = vld [vmem:[#allocation5 + $0xc80] sm:$0xff]
    %v471 = vld [vmem:[#allocation5 + $0xc88] sm:$0xff]
    %v472 = vld [vmem:[#allocation5 + $0xc90] sm:$0xff]
    %v473 = vld [vmem:[#allocation5 + $0xc98] sm:$0xff]
    %v474 = vld [vmem:[#allocation5 + $0xca0] sm:$0xff]
    %v475 = vld [vmem:[#allocation5 + $0xca8] sm:$0xff]
    %v476 = vld [vmem:[#allocation5 + $0xcb0] sm:$0xff]
    %v477 = vld [vmem:[#allocation5 + $0xcb8] sm:$0xff]
    %v478 = vld [vmem:[#allocation5 + $0xcc0] sm:$0xff]
    %v479 = vld [vmem:[#allocation5 + $0xcc8] sm:$0xff]
    %v480 = vld [vmem:[#allocation5 + $0xcd0] sm:$0xff]
    %v481 = vld [vmem:[#allocation5 + $0xcd8] sm:$0xff]
    %v482 = vld [vmem:[#allocation5 + $0xce0] sm:$0xff]
    %v483 = vld [vmem:[#allocation5 + $0xce8] sm:$0xff]
    %v484 = vld [vmem:[#allocation5 + $0xcf0] sm:$0xff]
    %v485 = vld [vmem:[#allocation5 + $0xcf8] sm:$0xff]
    %v486 = vld [vmem:[#allocation5 + $0xd00] sm:$0xff]
    %v487 = vld [vmem:[#allocation5 + $0xd08] sm:$0xff]
    %v488 = vld [vmem:[#allocation5 + $0xd10] sm:$0xff]
    %v489 = vld [vmem:[#allocation5 + $0xd18] sm:$0xff]
    %v490 = vld [vmem:[#allocation5 + $0xd20] sm:$0xff]
    %v491 = vld [vmem:[#allocation5 + $0xd28] sm:$0xff]
    %v492 = vld [vmem:[#allocation5 + $0xd30] sm:$0xff]
    %v493 = vld [vmem:[#allocation5 + $0xd38] sm:$0xff]
    %v494 = vld [vmem:[#allocation5 + $0xd40] sm:$0xff]
    %v495 = vld [vmem:[#allocation5 + $0xd48] sm:$0xff]
    %v496 = vld [vmem:[#allocation5 + $0xd50] sm:$0xff]
    %v497 = vld [vmem:[#allocation5 + $0xd58] sm:$0xff]
    %v498 = vld [vmem:[#allocation5 + $0xd60] sm:$0xff]
    %v499 = vld [vmem:[#allocation5 + $0xd68] sm:$0xff]
    %v500 = vld [vmem:[#allocation5 + $0xd70] sm:$0xff]
    %v501 = vld [vmem:[#allocation5 + $0xd78] sm:$0xff]
    %v502 = vld [vmem:[#allocation5 + $0xd80] sm:$0xff]
    %v503 = vld [vmem:[#allocation5 + $0xd88] sm:$0xff]
    %v504 = vld [vmem:[#allocation5 + $0xd90] sm:$0xff]
    %v505 = vld [vmem:[#allocation5 + $0xd98] sm:$0xff]
    %v506 = vld [vmem:[#allocation5 + $0xda0] sm:$0xff]
    %v507 = vld [vmem:[#allocation5 + $0xda8] sm:$0xff]
    %v508 = vld [vmem:[#allocation5 + $0xdb0] sm:$0xff]
    %v509 = vld [vmem:[#allocation5 + $0xdb8] sm:$0xff]
    %v510 = vld [vmem:[#allocation5 + $0xdc0] sm:$0xff]
    %v511 = vld [vmem:[#allocation5 + $0xdc8] sm:$0xff]
    %v512 = vld [vmem:[#allocation5 + $0xdd0] sm:$0xff]
    %v513 = vld [vmem:[#allocation5 + $0xdd8] sm:$0xff]
    %v514 = vld [vmem:[#allocation5 + $0xde0] sm:$0xff]
    %v515 = vld [vmem:[#allocation5 + $0xde8] sm:$0xff]
    %v516 = vld [vmem:[#allocation5 + $0xdf0] sm:$0xff]
    %v517 = vld [vmem:[#allocation5 + $0xdf8] sm:$0xff]
    %v518 = vld [vmem:[#allocation5 + $0xe00] sm:$0xff]
    %v519 = vld [vmem:[#allocation5 + $0xe08] sm:$0xff]
    %v520 = vld [vmem:[#allocation5 + $0xe10] sm:$0xff]
    %v521 = vld [vmem:[#allocation5 + $0xe18] sm:$0xff]
    %v522 = vld [vmem:[#allocation5 + $0xe20] sm:$0xff]
    %v523 = vld [vmem:[#allocation5 + $0xe28] sm:$0xff]
    %v524 = vld [vmem:[#allocation5 + $0xe30] sm:$0xff]
    %v525 = vld [vmem:[#allocation5 + $0xe38] sm:$0xff]
    %v526 = vld [vmem:[#allocation5 + $0xe40] sm:$0xff]
    %v527 = vld [vmem:[#allocation5 + $0xe48] sm:$0xff]
    %v528 = vld [vmem:[#allocation5 + $0xe50] sm:$0xff]
    %v529 = vld [vmem:[#allocation5 + $0xe58] sm:$0xff]
    %v530 = vld [vmem:[#allocation5 + $0xe60] sm:$0xff]
    %v531 = vld [vmem:[#allocation5 + $0xe68] sm:$0xff]
    %v532 = vld [vmem:[#allocation5 + $0xe70] sm:$0xff]
    %v533 = vld [vmem:[#allocation5 + $0xe78] sm:$0xff]
    %v534 = vld [vmem:[#allocation5 + $0xe80] sm:$0xff]
    %v535 = vld [vmem:[#allocation5 + $0xe88] sm:$0xff]
    %v536 = vld [vmem:[#allocation5 + $0xe90] sm:$0xff]
    %v537 = vld [vmem:[#allocation5 + $0xe98] sm:$0xff]
    %v538 = vld [vmem:[#allocation5 + $0xea0] sm:$0xff]
    %v539 = vld [vmem:[#allocation5 + $0xea8] sm:$0xff]
    %v540 = vld [vmem:[#allocation5 + $0xeb0] sm:$0xff]
    %v541 = vld [vmem:[#allocation5 + $0xeb8] sm:$0xff]
    %v542 = vld [vmem:[#allocation5 + $0xec0] sm:$0xff]
    %v543 = vld [vmem:[#allocation5 + $0xec8] sm:$0xff]
    %v544 = vld [vmem:[#allocation5 + $0xed0] sm:$0xff]
    %v545 = vld [vmem:[#allocation5 + $0xed8] sm:$0xff]
    %v546 = vld [vmem:[#allocation5 + $0xee0] sm:$0xff]
    %v547 = vld [vmem:[#allocation5 + $0xee8] sm:$0xff]
    %v548 = vld [vmem:[#allocation5 + $0xef0] sm:$0xff]
    %v549 = vld [vmem:[#allocation5 + $0xef8] sm:$0xff]
    %v550 = vld [vmem:[#allocation5 + $0xf00] sm:$0xff]
    %v551 = vld [vmem:[#allocation5 + $0xf08] sm:$0xff]
    %v552 = vld [vmem:[#allocation5 + $0xf10] sm:$0xff]
    %v553 = vld [vmem:[#allocation5 + $0xf18] sm:$0xff]
    %v554 = vld [vmem:[#allocation5 + $0xf20] sm:$0xff]
    %v555 = vld [vmem:[#allocation5 + $0xf28] sm:$0xff]
    %v556 = vld [vmem:[#allocation5 + $0xf30] sm:$0xff]
    %v557 = vld [vmem:[#allocation5 + $0xf38] sm:$0xff]
    %v558 = vld [vmem:[#allocation5 + $0xf40] sm:$0xff]
    %v559 = vld [vmem:[#allocation5 + $0xf48] sm:$0xff]
    %v560 = vld [vmem:[#allocation5 + $0xf50] sm:$0xff]
    %v561 = vld [vmem:[#allocation5 + $0xf58] sm:$0xff]
    %v562 = vld [vmem:[#allocation5 + $0xf60] sm:$0xff]
    %v563 = vld [vmem:[#allocation5 + $0xf68] sm:$0xff]
    %v564 = vld [vmem:[#allocation5 + $0xf70] sm:$0xff]
    %v565 = vld [vmem:[#allocation5 + $0xf78] sm:$0xff]
    %v566 = vld [vmem:[#allocation5 + $0xf80] sm:$0xff]
    %v567 = vld [vmem:[#allocation5 + $0xf88] sm:$0xff]
    %v568 = vld [vmem:[#allocation5 + $0xf90] sm:$0xff]
    %v569 = vld [vmem:[#allocation5 + $0xf98] sm:$0xff]
    %v570 = vld [vmem:[#allocation5 + $0xfa0] sm:$0xff]
    %v571 = vld [vmem:[#allocation5 + $0xfa8] sm:$0xff]
    %v572 = vld [vmem:[#allocation5 + $0xfb0] sm:$0xff]
    %v573 = vld [vmem:[#allocation5 + $0xfb8] sm:$0xff]
    %v574 = vld [vmem:[#allocation5 + $0xfc0] sm:$0xff]
    %v575 = vld [vmem:[#allocation5 + $0xfc8] sm:$0xff]
    %v576 = vld [vmem:[#allocation5 + $0xfd0] sm:$0xff]
    %v577 = vld [vmem:[#allocation5 + $0xfd8] sm:$0xff]
    %v578 = vld [vmem:[#allocation5 + $0xfe0] sm:$0xff]
    %v579 = vld [vmem:[#allocation5 + $0xfe8] sm:$0xff]
    %v580 = vld [vmem:[#allocation5 + $0xff0] sm:$0xff]
    %v581 = vld [vmem:[#allocation5 + $0xff8] sm:$0xff]
    %v582 = vld [vmem:[#allocation5 + $0x1000] sm:$0xff]
    %v583 = vld [vmem:[#allocation5 + $0x1008] sm:$0xff]
    %v584 = vld [vmem:[#allocation5 + $0x1010] sm:$0xff]
    %v585 = vld [vmem:[#allocation5 + $0x1018] sm:$0xff]
    %v586 = vld [vmem:[#allocation5 + $0x1020] sm:$0xff]
    %v587 = vld [vmem:[#allocation5 + $0x1028] sm:$0xff]
    %v588 = vld [vmem:[#allocation5 + $0x1030] sm:$0xff]
    %v589 = vld [vmem:[#allocation5 + $0x1038] sm:$0xff]
    %v590 = vld [vmem:[#allocation5 + $0x1040] sm:$0xff]
    %v591 = vld [vmem:[#allocation5 + $0x1048] sm:$0xff]
    %v592 = vld [vmem:[#allocation5 + $0x1050] sm:$0xff]
    %v593 = vld [vmem:[#allocation5 + $0x1058] sm:$0xff]
    %v594 = vld [vmem:[#allocation5 + $0x1060] sm:$0xff]
    %v595 = vld [vmem:[#allocation5 + $0x1068] sm:$0xff]
    %v596 = vld [vmem:[#allocation5 + $0x1070] sm:$0xff]
    %v597 = vld [vmem:[#allocation5 + $0x1078] sm:$0xff]
    %v598 = vld [vmem:[#allocation5 + $0x1080] sm:$0xff]
    %v599 = vld [vmem:[#allocation5 + $0x1088] sm:$0xff]
    %v600 = vld [vmem:[#allocation5 + $0x1090] sm:$0xff]
    %v601 = vld [vmem:[#allocation5 + $0x1098] sm:$0xff]
    %v602 = vld [vmem:[#allocation5 + $0x10a0] sm:$0xff]
    %v603 = vld [vmem:[#allocation5 + $0x10a8] sm:$0xff]
    %v604 = vld [vmem:[#allocation5 + $0x10b0] sm:$0xff]
    %v605 = vld [vmem:[#allocation5 + $0x10b8] sm:$0xff]
    %v606 = vld [vmem:[#allocation5 + $0x10c0] sm:$0xff]
    %v607 = vld [vmem:[#allocation5 + $0x10c8] sm:$0xff]
    %v608 = vld [vmem:[#allocation5 + $0x10d0] sm:$0xff]
    %v609 = vld [vmem:[#allocation5 + $0x10d8] sm:$0xff]
    %v610 = vld [vmem:[#allocation5 + $0x10e0] sm:$0xff]
    %v611 = vld [vmem:[#allocation5 + $0x10e8] sm:$0xff]
    %v612 = vld [vmem:[#allocation5 + $0x10f0] sm:$0xff]
    %v613 = vld [vmem:[#allocation5 + $0x10f8] sm:$0xff]
    %v614 = vld [vmem:[#allocation5 + $0x1100] sm:$0xff]
    %v615 = vld [vmem:[#allocation5 + $0x1108] sm:$0xff]
    %v616 = vld [vmem:[#allocation5 + $0x1110] sm:$0xff]
    %v617 = vld [vmem:[#allocation5 + $0x1118] sm:$0xff]
    %v618 = vld [vmem:[#allocation5 + $0x1120] sm:$0xff]
    %v619 = vld [vmem:[#allocation5 + $0x1128] sm:$0xff]
    %v620 = vld [vmem:[#allocation5 + $0x1130] sm:$0xff]
    %v621 = vld [vmem:[#allocation5 + $0x1138] sm:$0xff]
    %v622 = vld [vmem:[#allocation5 + $0x1140] sm:$0xff]
    %v623 = vld [vmem:[#allocation5 + $0x1148] sm:$0xff]
    %v624 = vld [vmem:[#allocation5 + $0x1150] sm:$0xff]
    %v625 = vld [vmem:[#allocation5 + $0x1158] sm:$0xff]
    %v626 = vld [vmem:[#allocation5 + $0x1160] sm:$0xff]
    %v627 = vld [vmem:[#allocation5 + $0x1168] sm:$0xff]
    %v628 = vld [vmem:[#allocation5 + $0x1170] sm:$0xff]
    %v629 = vld [vmem:[#allocation5 + $0x1178] sm:$0xff]
    %v630 = vld [vmem:[#allocation5 + $0x1180] sm:$0xff]
    %v631 = vld [vmem:[#allocation5 + $0x1188] sm:$0xff]
    %v632 = vld [vmem:[#allocation5 + $0x1190] sm:$0xff]
    %v633 = vld [vmem:[#allocation5 + $0x1198] sm:$0xff]
    %v634 = vld [vmem:[#allocation5 + $0x11a0] sm:$0xff]
    %v635 = vld [vmem:[#allocation5 + $0x11a8] sm:$0xff]
    %v636 = vld [vmem:[#allocation5 + $0x11b0] sm:$0xff]
    %v637 = vld [vmem:[#allocation5 + $0x11b8] sm:$0xff]
    %v638 = vld [vmem:[#allocation5 + $0x11c0] sm:$0xff]
    %v639 = vld [vmem:[#allocation5 + $0x11c8] sm:$0xff]
    %v640 = vld [vmem:[#allocation5 + $0x11d0] sm:$0xff]
    %v641 = vld [vmem:[#allocation5 + $0x11d8] sm:$0xff]
    %v642 = vld [vmem:[#allocation5 + $0x11e0] sm:$0xff]
    %v643 = vld [vmem:[#allocation5 + $0x11e8] sm:$0xff]
    %v644 = vld [vmem:[#allocation5 + $0x11f0] sm:$0xff]
    %v645 = vld [vmem:[#allocation5 + $0x11f8] sm:$0xff]
    %v646 = vld [vmem:[#allocation5 + $0x1200] sm:$0xff]
    %v647 = vld [vmem:[#allocation5 + $0x1208] sm:$0xff]
    %v648 = vld [vmem:[#allocation5 + $0x1210] sm:$0xff]
    %v649 = vld [vmem:[#allocation5 + $0x1218] sm:$0xff]
    %v650 = vld [vmem:[#allocation5 + $0x1220] sm:$0xff]
    %v651 = vld [vmem:[#allocation5 + $0x1228] sm:$0xff]
    %v652 = vld [vmem:[#allocation5 + $0x1230] sm:$0xff]
    %v653 = vld [vmem:[#allocation5 + $0x1238] sm:$0xff]
    %v654 = vld [vmem:[#allocation5 + $0x1240] sm:$0xff]
    %v655 = vld [vmem:[#allocation5 + $0x1248] sm:$0xff]
    %v656 = vld [vmem:[#allocation5 + $0x1250] sm:$0xff]
    %v657 = vld [vmem:[#allocation5 + $0x1258] sm:$0xff]
    %v658 = vld [vmem:[#allocation5 + $0x1260] sm:$0xff]
    %v659 = vld [vmem:[#allocation5 + $0x1268] sm:$0xff]
    %v660 = vld [vmem:[#allocation5 + $0x1270] sm:$0xff]
    %v661 = vld [vmem:[#allocation5 + $0x1278] sm:$0xff]
    %v662 = vld [vmem:[#allocation5 + $0x1280] sm:$0xff]
    %v663 = vld [vmem:[#allocation5 + $0x1288] sm:$0xff]
    %v664 = vld [vmem:[#allocation5 + $0x1290] sm:$0xff]
    %v665 = vld [vmem:[#allocation5 + $0x1298] sm:$0xff]
    %v666 = vld [vmem:[#allocation5 + $0x12a0] sm:$0xff]
    %v667 = vld [vmem:[#allocation5 + $0x12a8] sm:$0xff]
    %v668 = vld [vmem:[#allocation5 + $0x12b0] sm:$0xff]
    %v669 = vld [vmem:[#allocation5 + $0x12b8] sm:$0xff]
    %v670 = vld [vmem:[#allocation5 + $0x12c0] sm:$0xff]
    %v671 = vld [vmem:[#allocation5 + $0x12c8] sm:$0xff]
    %v672 = vld [vmem:[#allocation5 + $0x12d0] sm:$0xff]
    %v673 = vld [vmem:[#allocation5 + $0x12d8] sm:$0xff]
    %v674 = vld [vmem:[#allocation5 + $0x12e0] sm:$0xff]
    %v675 = vld [vmem:[#allocation5 + $0x12e8] sm:$0xff]
    %v676 = vld [vmem:[#allocation5 + $0x12f0] sm:$0xff]
    %v677 = vld [vmem:[#allocation5 + $0x12f8] sm:$0xff]
    %v678 = vld [vmem:[#allocation5 + $0x1300] sm:$0xff]
    %v679 = vld [vmem:[#allocation5 + $0x1308] sm:$0xff]
    %v680 = vld [vmem:[#allocation5 + $0x1310] sm:$0xff]
    %v681 = vld [vmem:[#allocation5 + $0x1318] sm:$0xff]
    %v682 = vld [vmem:[#allocation5 + $0x1320] sm:$0xff]
    %v683 = vld [vmem:[#allocation5 + $0x1328] sm:$0xff]
    %v684 = vld [vmem:[#allocation5 + $0x1330] sm:$0xff]
    %v685 = vld [vmem:[#allocation5 + $0x1338] sm:$0xff]
    %v686 = vld [vmem:[#allocation5 + $0x1340] sm:$0xff]
    %v687 = vld [vmem:[#allocation5 + $0x1348] sm:$0xff]
    %v688 = vld [vmem:[#allocation5 + $0x1350] sm:$0xff]
    %v689 = vld [vmem:[#allocation5 + $0x1358] sm:$0xff]
    %v690 = vld [vmem:[#allocation5 + $0x1360] sm:$0xff]
    %v691 = vld [vmem:[#allocation5 + $0x1368] sm:$0xff]
    %v692 = vld [vmem:[#allocation5 + $0x1370] sm:$0xff]
    %v693 = vld [vmem:[#allocation5 + $0x1378] sm:$0xff]
    %v694 = vld [vmem:[#allocation5 + $0x1380] sm:$0xff]
    %v695 = vld [vmem:[#allocation5 + $0x1388] sm:$0xff]
    %v696 = vld [vmem:[#allocation5 + $0x1390] sm:$0xff]
    %v697 = vld [vmem:[#allocation5 + $0x1398] sm:$0xff]
    %v698 = vld [vmem:[#allocation5 + $0x13a0] sm:$0xff]
    %v699 = vld [vmem:[#allocation5 + $0x13a8] sm:$0xff]
    %v700 = vld [vmem:[#allocation5 + $0x13b0] sm:$0xff]
    %v701 = vld [vmem:[#allocation5 + $0x13b8] sm:$0xff]
    %v702 = vld [vmem:[#allocation5 + $0x13c0] sm:$0xff]
    %v703 = vld [vmem:[#allocation5 + $0x13c8] sm:$0xff]
    %v704 = vld [vmem:[#allocation5 + $0x13d0] sm:$0xff]
    %v705 = vld [vmem:[#allocation5 + $0x13d8] sm:$0xff]
    %v706 = vld [vmem:[#allocation5 + $0x13e0] sm:$0xff]
    %v707 = vld [vmem:[#allocation5 + $0x13e8] sm:$0xff]
    %v708 = vld [vmem:[#allocation5 + $0x13f0] sm:$0xff]
    %v709 = vld [vmem:[#allocation5 + $0x13f8] sm:$0xff]
    %v718 = vunpack.c.l.b16 %v62
    %v719 = vunpack.c.h.b16 %v62
    %v720 = vunpack.c.l.b16 %v63
    %v721 = vunpack.c.h.b16 %v63
    %v722 = vunpack.c.l.b16 %v64
    %v723 = vunpack.c.h.b16 %v64
    %v724 = vunpack.c.l.b16 %v65
    %v725 = vunpack.c.h.b16 %v65
    %v726 = vunpack.c.l.b16 %v66
    %v727 = vunpack.c.h.b16 %v66
    %v728 = vunpack.c.l.b16 %v67
    %v729 = vunpack.c.h.b16 %v67
    %v730 = vunpack.c.l.b16 %v68
    %v731 = vunpack.c.h.b16 %v68
    %v732 = vunpack.c.l.b16 %v69
    %v733 = vunpack.c.h.b16 %v69
    %v734 = vpack.c.b16 %v726, %v718
    %v735 = vpack.c.b16 %v727, %v719
    %v736 = vpack.c.b16 %v728, %v720
    %v737 = vpack.c.b16 %v729, %v721
    %v738 = vpack.c.b16 %v730, %v722
    %v739 = vpack.c.b16 %v731, %v723
    %v740 = vpack.c.b16 %v732, %v724
    %v741 = vpack.c.b16 %v733, %v725
    %v1390 = vunpack.c.l.b16 %v70
    %v1391 = vunpack.c.h.b16 %v70
    %v1392 = vunpack.c.l.b16 %v71
    %v1393 = vunpack.c.h.b16 %v71
    %v1394 = vunpack.c.l.b16 %v72
    %v1395 = vunpack.c.h.b16 %v72
    %v1396 = vunpack.c.l.b16 %v73
    %v1397 = vunpack.c.h.b16 %v73
    %v1398 = vunpack.c.l.b16 %v74
    %v1399 = vunpack.c.h.b16 %v74
    %v1400 = vunpack.c.l.b16 %v75
    %v1401 = vunpack.c.h.b16 %v75
    %v1402 = vunpack.c.l.b16 %v76
    %v1403 = vunpack.c.h.b16 %v76
    %v1404 = vunpack.c.l.b16 %v77
    %v1405 = vunpack.c.h.b16 %v77
    %v1406 = vunpack.c.l.b16 %v78
    %v1407 = vunpack.c.h.b16 %v78
    %v1408 = vunpack.c.l.b16 %v79
    %v1409 = vunpack.c.h.b16 %v79
    %v1410 = vunpack.c.l.b16 %v80
    %v1411 = vunpack.c.h.b16 %v80
    %v1412 = vunpack.c.l.b16 %v81
    %v1413 = vunpack.c.h.b16 %v81
    %v1414 = vunpack.c.l.b16 %v82
    %v1415 = vunpack.c.h.b16 %v82
    %v1416 = vunpack.c.l.b16 %v83
    %v1417 = vunpack.c.h.b16 %v83
    %v1418 = vunpack.c.l.b16 %v84
    %v1419 = vunpack.c.h.b16 %v84
    %v1420 = vunpack.c.l.b16 %v85
    %v1421 = vunpack.c.h.b16 %v85
    %v1422 = vunpack.c.l.b16 %v86
    %v1423 = vunpack.c.h.b16 %v86
    %v1424 = vunpack.c.l.b16 %v87
    %v1425 = vunpack.c.h.b16 %v87
    %v1426 = vunpack.c.l.b16 %v88
    %v1427 = vunpack.c.h.b16 %v88
    %v1428 = vunpack.c.l.b16 %v89
    %v1429 = vunpack.c.h.b16 %v89
    %v1430 = vunpack.c.l.b16 %v90
    %v1431 = vunpack.c.h.b16 %v90
    %v1432 = vunpack.c.l.b16 %v91
    %v1433 = vunpack.c.h.b16 %v91
    %v1434 = vunpack.c.l.b16 %v92
    %v1435 = vunpack.c.h.b16 %v92
    %v1436 = vunpack.c.l.b16 %v93
    %v1437 = vunpack.c.h.b16 %v93
    %v1438 = vunpack.c.l.b16 %v94
    %v1439 = vunpack.c.h.b16 %v94
    %v1440 = vunpack.c.l.b16 %v95
    %v1441 = vunpack.c.h.b16 %v95
    %v1442 = vunpack.c.l.b16 %v96
    %v1443 = vunpack.c.h.b16 %v96
    %v1444 = vunpack.c.l.b16 %v97
    %v1445 = vunpack.c.h.b16 %v97
    %v1446 = vunpack.c.l.b16 %v98
    %v1447 = vunpack.c.h.b16 %v98
    %v1448 = vunpack.c.l.b16 %v99
    %v1449 = vunpack.c.h.b16 %v99
    %v1450 = vunpack.c.l.b16 %v100
    %v1451 = vunpack.c.h.b16 %v100
    %v1452 = vunpack.c.l.b16 %v101
    %v1453 = vunpack.c.h.b16 %v101
    %v1454 = vunpack.c.l.b16 %v102
    %v1455 = vunpack.c.h.b16 %v102
    %v1456 = vunpack.c.l.b16 %v103
    %v1457 = vunpack.c.h.b16 %v103
    %v1458 = vunpack.c.l.b16 %v104
    %v1459 = vunpack.c.h.b16 %v104
    %v1460 = vunpack.c.l.b16 %v105
    %v1461 = vunpack.c.h.b16 %v105
    %v1462 = vunpack.c.l.b16 %v106
    %v1463 = vunpack.c.h.b16 %v106
    %v1464 = vunpack.c.l.b16 %v107
    %v1465 = vunpack.c.h.b16 %v107
    %v1466 = vunpack.c.l.b16 %v108
    %v1467 = vunpack.c.h.b16 %v108
    %v1468 = vunpack.c.l.b16 %v109
    %v1469 = vunpack.c.h.b16 %v109
    %v1470 = vunpack.c.l.b16 %v110
    %v1471 = vunpack.c.h.b16 %v110
    %v1472 = vunpack.c.l.b16 %v111
    %v1473 = vunpack.c.h.b16 %v111
    %v1474 = vunpack.c.l.b16 %v112
    %v1475 = vunpack.c.h.b16 %v112
    %v1476 = vunpack.c.l.b16 %v113
    %v1477 = vunpack.c.h.b16 %v113
    %v1478 = vunpack.c.l.b16 %v114
    %v1479 = vunpack.c.h.b16 %v114
    %v1480 = vunpack.c.l.b16 %v115
    %v1481 = vunpack.c.h.b16 %v115
    %v1482 = vunpack.c.l.b16 %v116
    %v1483 = vunpack.c.h.b16 %v116
    %v1484 = vunpack.c.l.b16 %v117
    %v1485 = vunpack.c.h.b16 %v117
    %v1486 = vunpack.c.l.b16 %v118
    %v1487 = vunpack.c.h.b16 %v118
    %v1488 = vunpack.c.l.b16 %v119
    %v1489 = vunpack.c.h.b16 %v119
    %v1490 = vunpack.c.l.b16 %v120
    %v1491 = vunpack.c.h.b16 %v120
    %v1492 = vunpack.c.l.b16 %v121
    %v1493 = vunpack.c.h.b16 %v121
    %v1494 = vunpack.c.l.b16 %v122
    %v1495 = vunpack.c.h.b16 %v122
    %v1496 = vunpack.c.l.b16 %v123
    %v1497 = vunpack.c.h.b16 %v123
    %v1498 = vunpack.c.l.b16 %v124
    %v1499 = vunpack.c.h.b16 %v124
    %v1500 = vunpack.c.l.b16 %v125
    %v1501 = vunpack.c.h.b16 %v125
    %v1502 = vunpack.c.l.b16 %v126
    %v1503 = vunpack.c.h.b16 %v126
    %v1504 = vunpack.c.l.b16 %v127
    %v1505 = vunpack.c.h.b16 %v127
    %v1506 = vunpack.c.l.b16 %v128
    %v1507 = vunpack.c.h.b16 %v128
    %v1508 = vunpack.c.l.b16 %v129
    %v1509 = vunpack.c.h.b16 %v129
    %v1510 = vunpack.c.l.b16 %v130
    %v1511 = vunpack.c.h.b16 %v130
    %v1512 = vunpack.c.l.b16 %v131
    %v1513 = vunpack.c.h.b16 %v131
    %v1514 = vunpack.c.l.b16 %v132
    %v1515 = vunpack.c.h.b16 %v132
    %v1516 = vunpack.c.l.b16 %v133
    %v1517 = vunpack.c.h.b16 %v133
    %v1518 = vunpack.c.l.b16 %v134
    %v1519 = vunpack.c.h.b16 %v134
    %v1520 = vunpack.c.l.b16 %v135
    %v1521 = vunpack.c.h.b16 %v135
    %v1522 = vunpack.c.l.b16 %v136
    %v1523 = vunpack.c.h.b16 %v136
    %v1524 = vunpack.c.l.b16 %v137
    %v1525 = vunpack.c.h.b16 %v137
    %v1526 = vunpack.c.l.b16 %v138
    %v1527 = vunpack.c.h.b16 %v138
    %v1528 = vunpack.c.l.b16 %v139
    %v1529 = vunpack.c.h.b16 %v139
    %v1530 = vunpack.c.l.b16 %v140
    %v1531 = vunpack.c.h.b16 %v140
    %v1532 = vunpack.c.l.b16 %v141
    %v1533 = vunpack.c.h.b16 %v141
    %v1534 = vunpack.c.l.b16 %v142
    %v1535 = vunpack.c.h.b16 %v142
    %v1536 = vunpack.c.l.b16 %v143
    %v1537 = vunpack.c.h.b16 %v143
    %v1538 = vunpack.c.l.b16 %v144
    %v1539 = vunpack.c.h.b16 %v144
    %v1540 = vunpack.c.l.b16 %v145
    %v1541 = vunpack.c.h.b16 %v145
    %v1542 = vunpack.c.l.b16 %v146
    %v1543 = vunpack.c.h.b16 %v146
    %v1544 = vunpack.c.l.b16 %v147
    %v1545 = vunpack.c.h.b16 %v147
    %v1546 = vunpack.c.l.b16 %v148
    %v1547 = vunpack.c.h.b16 %v148
    %v1548 = vunpack.c.l.b16 %v149
    %v1549 = vunpack.c.h.b16 %v149
    %v1550 = vunpack.c.l.b16 %v150
    %v1551 = vunpack.c.h.b16 %v150
    %v1552 = vunpack.c.l.b16 %v151
    %v1553 = vunpack.c.h.b16 %v151
    %v1554 = vunpack.c.l.b16 %v152
    %v1555 = vunpack.c.h.b16 %v152
    %v1556 = vunpack.c.l.b16 %v153
    %v1557 = vunpack.c.h.b16 %v153
    %v1558 = vunpack.c.l.b16 %v154
    %v1559 = vunpack.c.h.b16 %v154
    %v1560 = vunpack.c.l.b16 %v155
    %v1561 = vunpack.c.h.b16 %v155
    %v1562 = vunpack.c.l.b16 %v156
    %v1563 = vunpack.c.h.b16 %v156
    %v1564 = vunpack.c.l.b16 %v157
    %v1565 = vunpack.c.h.b16 %v157
    %v1566 = vunpack.c.l.b16 %v158
    %v1567 = vunpack.c.h.b16 %v158
    %v1568 = vunpack.c.l.b16 %v159
    %v1569 = vunpack.c.h.b16 %v159
    %v1570 = vunpack.c.l.b16 %v160
    %v1571 = vunpack.c.h.b16 %v160
    %v1572 = vunpack.c.l.b16 %v161
    %v1573 = vunpack.c.h.b16 %v161
    %v1574 = vunpack.c.l.b16 %v162
    %v1575 = vunpack.c.h.b16 %v162
    %v1576 = vunpack.c.l.b16 %v163
    %v1577 = vunpack.c.h.b16 %v163
    %v1578 = vunpack.c.l.b16 %v164
    %v1579 = vunpack.c.h.b16 %v164
    %v1580 = vunpack.c.l.b16 %v165
    %v1581 = vunpack.c.h.b16 %v165
    %v1582 = vunpack.c.l.b16 %v166
    %v1583 = vunpack.c.h.b16 %v166
    %v1584 = vunpack.c.l.b16 %v167
    %v1585 = vunpack.c.h.b16 %v167
    %v1586 = vunpack.c.l.b16 %v168
    %v1587 = vunpack.c.h.b16 %v168
    %v1588 = vunpack.c.l.b16 %v169
    %v1589 = vunpack.c.h.b16 %v169
    %v1590 = vunpack.c.l.b16 %v170
    %v1591 = vunpack.c.h.b16 %v170
    %v1592 = vunpack.c.l.b16 %v171
    %v1593 = vunpack.c.h.b16 %v171
    %v1594 = vunpack.c.l.b16 %v172
    %v1595 = vunpack.c.h.b16 %v172
    %v1596 = vunpack.c.l.b16 %v173
    %v1597 = vunpack.c.h.b16 %v173
    %v1598 = vunpack.c.l.b16 %v174
    %v1599 = vunpack.c.h.b16 %v174
    %v1600 = vunpack.c.l.b16 %v175
    %v1601 = vunpack.c.h.b16 %v175
    %v1602 = vunpack.c.l.b16 %v176
    %v1603 = vunpack.c.h.b16 %v176
    %v1604 = vunpack.c.l.b16 %v177
    %v1605 = vunpack.c.h.b16 %v177
    %v1606 = vunpack.c.l.b16 %v178
    %v1607 = vunpack.c.h.b16 %v178
    %v1608 = vunpack.c.l.b16 %v179
    %v1609 = vunpack.c.h.b16 %v179
    %v1610 = vunpack.c.l.b16 %v180
    %v1611 = vunpack.c.h.b16 %v180
    %v1612 = vunpack.c.l.b16 %v181
    %v1613 = vunpack.c.h.b16 %v181
    %v1614 = vunpack.c.l.b16 %v182
    %v1615 = vunpack.c.h.b16 %v182
    %v1616 = vunpack.c.l.b16 %v183
    %v1617 = vunpack.c.h.b16 %v183
    %v1618 = vunpack.c.l.b16 %v184
    %v1619 = vunpack.c.h.b16 %v184
    %v1620 = vunpack.c.l.b16 %v185
    %v1621 = vunpack.c.h.b16 %v185
    %v1622 = vunpack.c.l.b16 %v186
    %v1623 = vunpack.c.h.b16 %v186
    %v1624 = vunpack.c.l.b16 %v187
    %v1625 = vunpack.c.h.b16 %v187
    %v1626 = vunpack.c.l.b16 %v188
    %v1627 = vunpack.c.h.b16 %v188
    %v1628 = vunpack.c.l.b16 %v189
    %v1629 = vunpack.c.h.b16 %v189
    %v1630 = vunpack.c.l.b16 %v190
    %v1631 = vunpack.c.h.b16 %v190
    %v1632 = vunpack.c.l.b16 %v191
    %v1633 = vunpack.c.h.b16 %v191
    %v1634 = vunpack.c.l.b16 %v192
    %v1635 = vunpack.c.h.b16 %v192
    %v1636 = vunpack.c.l.b16 %v193
    %v1637 = vunpack.c.h.b16 %v193
    %v1638 = vunpack.c.l.b16 %v194
    %v1639 = vunpack.c.h.b16 %v194
    %v1640 = vunpack.c.l.b16 %v195
    %v1641 = vunpack.c.h.b16 %v195
    %v1642 = vunpack.c.l.b16 %v196
    %v1643 = vunpack.c.h.b16 %v196
    %v1644 = vunpack.c.l.b16 %v197
    %v1645 = vunpack.c.h.b16 %v197
    %v1646 = vunpack.c.l.b16 %v198
    %v1647 = vunpack.c.h.b16 %v198
    %v1648 = vunpack.c.l.b16 %v199
    %v1649 = vunpack.c.h.b16 %v199
    %v1650 = vunpack.c.l.b16 %v200
    %v1651 = vunpack.c.h.b16 %v200
    %v1652 = vunpack.c.l.b16 %v201
    %v1653 = vunpack.c.h.b16 %v201
    %v1654 = vunpack.c.l.b16 %v202
    %v1655 = vunpack.c.h.b16 %v202
    %v1656 = vunpack.c.l.b16 %v203
    %v1657 = vunpack.c.h.b16 %v203
    %v1658 = vunpack.c.l.b16 %v204
    %v1659 = vunpack.c.h.b16 %v204
    %v1660 = vunpack.c.l.b16 %v205
    %v1661 = vunpack.c.h.b16 %v205
    %v1662 = vunpack.c.l.b16 %v206
    %v1663 = vunpack.c.h.b16 %v206
    %v1664 = vunpack.c.l.b16 %v207
    %v1665 = vunpack.c.h.b16 %v207
    %v1666 = vunpack.c.l.b16 %v208
    %v1667 = vunpack.c.h.b16 %v208
    %v1668 = vunpack.c.l.b16 %v209
    %v1669 = vunpack.c.h.b16 %v209
    %v1670 = vunpack.c.l.b16 %v210
    %v1671 = vunpack.c.h.b16 %v210
    %v1672 = vunpack.c.l.b16 %v211
    %v1673 = vunpack.c.h.b16 %v211
    %v1674 = vunpack.c.l.b16 %v212
    %v1675 = vunpack.c.h.b16 %v212
    %v1676 = vunpack.c.l.b16 %v213
    %v1677 = vunpack.c.h.b16 %v213
    %v1678 = vunpack.c.l.b16 %v214
    %v1679 = vunpack.c.h.b16 %v214
    %v1680 = vunpack.c.l.b16 %v215
    %v1681 = vunpack.c.h.b16 %v215
    %v1682 = vunpack.c.l.b16 %v216
    %v1683 = vunpack.c.h.b16 %v216
    %v1684 = vunpack.c.l.b16 %v217
    %v1685 = vunpack.c.h.b16 %v217
    %v1686 = vunpack.c.l.b16 %v218
    %v1687 = vunpack.c.h.b16 %v218
    %v1688 = vunpack.c.l.b16 %v219
    %v1689 = vunpack.c.h.b16 %v219
    %v1690 = vunpack.c.l.b16 %v220
    %v1691 = vunpack.c.h.b16 %v220
    %v1692 = vunpack.c.l.b16 %v221
    %v1693 = vunpack.c.h.b16 %v221
    %v1694 = vunpack.c.l.b16 %v222
    %v1695 = vunpack.c.h.b16 %v222
    %v1696 = vunpack.c.l.b16 %v223
    %v1697 = vunpack.c.h.b16 %v223
    %v1698 = vunpack.c.l.b16 %v224
    %v1699 = vunpack.c.h.b16 %v224
    %v1700 = vunpack.c.l.b16 %v225
    %v1701 = vunpack.c.h.b16 %v225
    %v1702 = vunpack.c.l.b16 %v226
    %v1703 = vunpack.c.h.b16 %v226
    %v1704 = vunpack.c.l.b16 %v227
    %v1705 = vunpack.c.h.b16 %v227
    %v1706 = vunpack.c.l.b16 %v228
    %v1707 = vunpack.c.h.b16 %v228
    %v1708 = vunpack.c.l.b16 %v229
    %v1709 = vunpack.c.h.b16 %v229
    %v1710 = vunpack.c.l.b16 %v230
    %v1711 = vunpack.c.h.b16 %v230
    %v1712 = vunpack.c.l.b16 %v231
    %v1713 = vunpack.c.h.b16 %v231
    %v1714 = vunpack.c.l.b16 %v232
    %v1715 = vunpack.c.h.b16 %v232
    %v1716 = vunpack.c.l.b16 %v233
    %v1717 = vunpack.c.h.b16 %v233
    %v1718 = vunpack.c.l.b16 %v234
    %v1719 = vunpack.c.h.b16 %v234
    %v1720 = vunpack.c.l.b16 %v235
    %v1721 = vunpack.c.h.b16 %v235
    %v1722 = vunpack.c.l.b16 %v236
    %v1723 = vunpack.c.h.b16 %v236
    %v1724 = vunpack.c.l.b16 %v237
    %v1725 = vunpack.c.h.b16 %v237
    %v1726 = vunpack.c.l.b16 %v238
    %v1727 = vunpack.c.h.b16 %v238
    %v1728 = vunpack.c.l.b16 %v239
    %v1729 = vunpack.c.h.b16 %v239
    %v1730 = vunpack.c.l.b16 %v240
    %v1731 = vunpack.c.h.b16 %v240
    %v1732 = vunpack.c.l.b16 %v241
    %v1733 = vunpack.c.h.b16 %v241
    %v1734 = vunpack.c.l.b16 %v242
    %v1735 = vunpack.c.h.b16 %v242
    %v1736 = vunpack.c.l.b16 %v243
    %v1737 = vunpack.c.h.b16 %v243
    %v1738 = vunpack.c.l.b16 %v244
    %v1739 = vunpack.c.h.b16 %v244
    %v1740 = vunpack.c.l.b16 %v245
    %v1741 = vunpack.c.h.b16 %v245
    %v1742 = vunpack.c.l.b16 %v246
    %v1743 = vunpack.c.h.b16 %v246
    %v1744 = vunpack.c.l.b16 %v247
    %v1745 = vunpack.c.h.b16 %v247
    %v1746 = vunpack.c.l.b16 %v248
    %v1747 = vunpack.c.h.b16 %v248
    %v1748 = vunpack.c.l.b16 %v249
    %v1749 = vunpack.c.h.b16 %v249
    %v1750 = vunpack.c.l.b16 %v250
    %v1751 = vunpack.c.h.b16 %v250
    %v1752 = vunpack.c.l.b16 %v251
    %v1753 = vunpack.c.h.b16 %v251
    %v1754 = vunpack.c.l.b16 %v252
    %v1755 = vunpack.c.h.b16 %v252
    %v1756 = vunpack.c.l.b16 %v253
    %v1757 = vunpack.c.h.b16 %v253
    %v1758 = vunpack.c.l.b16 %v254
    %v1759 = vunpack.c.h.b16 %v254
    %v1760 = vunpack.c.l.b16 %v255
    %v1761 = vunpack.c.h.b16 %v255
    %v1762 = vunpack.c.l.b16 %v256
    %v1763 = vunpack.c.h.b16 %v256
    %v1764 = vunpack.c.l.b16 %v257
    %v1765 = vunpack.c.h.b16 %v257
    %v1766 = vunpack.c.l.b16 %v258
    %v1767 = vunpack.c.h.b16 %v258
    %v1768 = vunpack.c.l.b16 %v259
    %v1769 = vunpack.c.h.b16 %v259
    %v1770 = vunpack.c.l.b16 %v260
    %v1771 = vunpack.c.h.b16 %v260
    %v1772 = vunpack.c.l.b16 %v261
    %v1773 = vunpack.c.h.b16 %v261
    %v1774 = vunpack.c.l.b16 %v262
    %v1775 = vunpack.c.h.b16 %v262
    %v1776 = vunpack.c.l.b16 %v263
    %v1777 = vunpack.c.h.b16 %v263
    %v1778 = vunpack.c.l.b16 %v264
    %v1779 = vunpack.c.h.b16 %v264
    %v1780 = vunpack.c.l.b16 %v265
    %v1781 = vunpack.c.h.b16 %v265
    %v1782 = vunpack.c.l.b16 %v266
    %v1783 = vunpack.c.h.b16 %v266
    %v1784 = vunpack.c.l.b16 %v267
    %v1785 = vunpack.c.h.b16 %v267
    %v1786 = vunpack.c.l.b16 %v268
    %v1787 = vunpack.c.h.b16 %v268
    %v1788 = vunpack.c.l.b16 %v269
    %v1789 = vunpack.c.h.b16 %v269
    %v1790 = vunpack.c.l.b16 %v270
    %v1791 = vunpack.c.h.b16 %v270
    %v1792 = vunpack.c.l.b16 %v271
    %v1793 = vunpack.c.h.b16 %v271
    %v1794 = vunpack.c.l.b16 %v272
    %v1795 = vunpack.c.h.b16 %v272
    %v1796 = vunpack.c.l.b16 %v273
    %v1797 = vunpack.c.h.b16 %v273
    %v1798 = vunpack.c.l.b16 %v274
    %v1799 = vunpack.c.h.b16 %v274
    %v1800 = vunpack.c.l.b16 %v275
    %v1801 = vunpack.c.h.b16 %v275
    %v1802 = vunpack.c.l.b16 %v276
    %v1803 = vunpack.c.h.b16 %v276
    %v1804 = vunpack.c.l.b16 %v277
    %v1805 = vunpack.c.h.b16 %v277
    %v1806 = vunpack.c.l.b16 %v278
    %v1807 = vunpack.c.h.b16 %v278
    %v1808 = vunpack.c.l.b16 %v279
    %v1809 = vunpack.c.h.b16 %v279
    %v1810 = vunpack.c.l.b16 %v280
    %v1811 = vunpack.c.h.b16 %v280
    %v1812 = vunpack.c.l.b16 %v281
    %v1813 = vunpack.c.h.b16 %v281
    %v1814 = vunpack.c.l.b16 %v282
    %v1815 = vunpack.c.h.b16 %v282
    %v1816 = vunpack.c.l.b16 %v283
    %v1817 = vunpack.c.h.b16 %v283
    %v1818 = vunpack.c.l.b16 %v284
    %v1819 = vunpack.c.h.b16 %v284
    %v1820 = vunpack.c.l.b16 %v285
    %v1821 = vunpack.c.h.b16 %v285
    %v1822 = vunpack.c.l.b16 %v286
    %v1823 = vunpack.c.h.b16 %v286
    %v1824 = vunpack.c.l.b16 %v287
    %v1825 = vunpack.c.h.b16 %v287
    %v1826 = vunpack.c.l.b16 %v288
    %v1827 = vunpack.c.h.b16 %v288
    %v1828 = vunpack.c.l.b16 %v289
    %v1829 = vunpack.c.h.b16 %v289
    %v1830 = vunpack.c.l.b16 %v290
    %v1831 = vunpack.c.h.b16 %v290
    %v1832 = vunpack.c.l.b16 %v291
    %v1833 = vunpack.c.h.b16 %v291
    %v1834 = vunpack.c.l.b16 %v292
    %v1835 = vunpack.c.h.b16 %v292
    %v1836 = vunpack.c.l.b16 %v293
    %v1837 = vunpack.c.h.b16 %v293
    %v1838 = vunpack.c.l.b16 %v294
    %v1839 = vunpack.c.h.b16 %v294
    %v1840 = vunpack.c.l.b16 %v295
    %v1841 = vunpack.c.h.b16 %v295
    %v1842 = vunpack.c.l.b16 %v296
    %v1843 = vunpack.c.h.b16 %v296
    %v1844 = vunpack.c.l.b16 %v297
    %v1845 = vunpack.c.h.b16 %v297
    %v1846 = vunpack.c.l.b16 %v298
    %v1847 = vunpack.c.h.b16 %v298
    %v1848 = vunpack.c.l.b16 %v299
    %v1849 = vunpack.c.h.b16 %v299
    %v1850 = vunpack.c.l.b16 %v300
    %v1851 = vunpack.c.h.b16 %v300
    %v1852 = vunpack.c.l.b16 %v301
    %v1853 = vunpack.c.h.b16 %v301
    %v1854 = vunpack.c.l.b16 %v302
    %v1855 = vunpack.c.h.b16 %v302
    %v1856 = vunpack.c.l.b16 %v303
    %v1857 = vunpack.c.h.b16 %v303
    %v1858 = vunpack.c.l.b16 %v304
    %v1859 = vunpack.c.h.b16 %v304
    %v1860 = vunpack.c.l.b16 %v305
    %v1861 = vunpack.c.h.b16 %v305
    %v1862 = vunpack.c.l.b16 %v306
    %v1863 = vunpack.c.h.b16 %v306
    %v1864 = vunpack.c.l.b16 %v307
    %v1865 = vunpack.c.h.b16 %v307
    %v1866 = vunpack.c.l.b16 %v308
    %v1867 = vunpack.c.h.b16 %v308
    %v1868 = vunpack.c.l.b16 %v309
    %v1869 = vunpack.c.h.b16 %v309
    %v1870 = vunpack.c.l.b16 %v310
    %v1871 = vunpack.c.h.b16 %v310
    %v1872 = vunpack.c.l.b16 %v311
    %v1873 = vunpack.c.h.b16 %v311
    %v1874 = vunpack.c.l.b16 %v312
    %v1875 = vunpack.c.h.b16 %v312
    %v1876 = vunpack.c.l.b16 %v313
    %v1877 = vunpack.c.h.b16 %v313
    %v1878 = vunpack.c.l.b16 %v314
    %v1879 = vunpack.c.h.b16 %v314
    %v1880 = vunpack.c.l.b16 %v315
    %v1881 = vunpack.c.h.b16 %v315
    %v1882 = vunpack.c.l.b16 %v316
    %v1883 = vunpack.c.h.b16 %v316
    %v1884 = vunpack.c.l.b16 %v317
    %v1885 = vunpack.c.h.b16 %v317
    %v1886 = vunpack.c.l.b16 %v318
    %v1887 = vunpack.c.h.b16 %v318
    %v1888 = vunpack.c.l.b16 %v319
    %v1889 = vunpack.c.h.b16 %v319
    %v1890 = vunpack.c.l.b16 %v320
    %v1891 = vunpack.c.h.b16 %v320
    %v1892 = vunpack.c.l.b16 %v321
    %v1893 = vunpack.c.h.b16 %v321
    %v1894 = vunpack.c.l.b16 %v322
    %v1895 = vunpack.c.h.b16 %v322
    %v1896 = vunpack.c.l.b16 %v323
    %v1897 = vunpack.c.h.b16 %v323
    %v1898 = vunpack.c.l.b16 %v324
    %v1899 = vunpack.c.h.b16 %v324
    %v1900 = vunpack.c.l.b16 %v325
    %v1901 = vunpack.c.h.b16 %v325
    %v1902 = vunpack.c.l.b16 %v326
    %v1903 = vunpack.c.h.b16 %v326
    %v1904 = vunpack.c.l.b16 %v327
    %v1905 = vunpack.c.h.b16 %v327
    %v1906 = vunpack.c.l.b16 %v328
    %v1907 = vunpack.c.h.b16 %v328
    %v1908 = vunpack.c.l.b16 %v329
    %v1909 = vunpack.c.h.b16 %v329
    %v1910 = vunpack.c.l.b16 %v330
    %v1911 = vunpack.c.h.b16 %v330
    %v1912 = vunpack.c.l.b16 %v331
    %v1913 = vunpack.c.h.b16 %v331
    %v1914 = vunpack.c.l.b16 %v332
    %v1915 = vunpack.c.h.b16 %v332
    %v1916 = vunpack.c.l.b16 %v333
    %v1917 = vunpack.c.h.b16 %v333
    %v1918 = vunpack.c.l.b16 %v334
    %v1919 = vunpack.c.h.b16 %v334
    %v1920 = vunpack.c.l.b16 %v335
    %v1921 = vunpack.c.h.b16 %v335
    %v1922 = vunpack.c.l.b16 %v336
    %v1923 = vunpack.c.h.b16 %v336
    %v1924 = vunpack.c.l.b16 %v337
    %v1925 = vunpack.c.h.b16 %v337
    %v1926 = vunpack.c.l.b16 %v338
    %v1927 = vunpack.c.h.b16 %v338
    %v1928 = vunpack.c.l.b16 %v339
    %v1929 = vunpack.c.h.b16 %v339
    %v1930 = vunpack.c.l.b16 %v340
    %v1931 = vunpack.c.h.b16 %v340
    %v1932 = vunpack.c.l.b16 %v341
    %v1933 = vunpack.c.h.b16 %v341
    %v1934 = vunpack.c.l.b16 %v342
    %v1935 = vunpack.c.h.b16 %v342
    %v1936 = vunpack.c.l.b16 %v343
    %v1937 = vunpack.c.h.b16 %v343
    %v1938 = vunpack.c.l.b16 %v344
    %v1939 = vunpack.c.h.b16 %v344
    %v1940 = vunpack.c.l.b16 %v345
    %v1941 = vunpack.c.h.b16 %v345
    %v1942 = vunpack.c.l.b16 %v346
    %v1943 = vunpack.c.h.b16 %v346
    %v1944 = vunpack.c.l.b16 %v347
    %v1945 = vunpack.c.h.b16 %v347
    %v1946 = vunpack.c.l.b16 %v348
    %v1947 = vunpack.c.h.b16 %v348
    %v1948 = vunpack.c.l.b16 %v349
    %v1949 = vunpack.c.h.b16 %v349
    %v1950 = vunpack.c.l.b16 %v350
    %v1951 = vunpack.c.h.b16 %v350
    %v1952 = vunpack.c.l.b16 %v351
    %v1953 = vunpack.c.h.b16 %v351
    %v1954 = vunpack.c.l.b16 %v352
    %v1955 = vunpack.c.h.b16 %v352
    %v1956 = vunpack.c.l.b16 %v353
    %v1957 = vunpack.c.h.b16 %v353
    %v1958 = vunpack.c.l.b16 %v354
    %v1959 = vunpack.c.h.b16 %v354
    %v1960 = vunpack.c.l.b16 %v355
    %v1961 = vunpack.c.h.b16 %v355
    %v1962 = vunpack.c.l.b16 %v356
    %v1963 = vunpack.c.h.b16 %v356
    %v1964 = vunpack.c.l.b16 %v357
    %v1965 = vunpack.c.h.b16 %v357
    %v1966 = vunpack.c.l.b16 %v358
    %v1967 = vunpack.c.h.b16 %v358
    %v1968 = vunpack.c.l.b16 %v359
    %v1969 = vunpack.c.h.b16 %v359
    %v1970 = vunpack.c.l.b16 %v360
    %v1971 = vunpack.c.h.b16 %v360
    %v1972 = vunpack.c.l.b16 %v361
    %v1973 = vunpack.c.h.b16 %v361
    %v1974 = vunpack.c.l.b16 %v362
    %v1975 = vunpack.c.h.b16 %v362
    %v1976 = vunpack.c.l.b16 %v363
    %v1977 = vunpack.c.h.b16 %v363
    %v1978 = vunpack.c.l.b16 %v364
    %v1979 = vunpack.c.h.b16 %v364
    %v1980 = vunpack.c.l.b16 %v365
    %v1981 = vunpack.c.h.b16 %v365
    %v1982 = vunpack.c.l.b16 %v366
    %v1983 = vunpack.c.h.b16 %v366
    %v1984 = vunpack.c.l.b16 %v367
    %v1985 = vunpack.c.h.b16 %v367
    %v1986 = vunpack.c.l.b16 %v368
    %v1987 = vunpack.c.h.b16 %v368
    %v1988 = vunpack.c.l.b16 %v369
    %v1989 = vunpack.c.h.b16 %v369
    %v1990 = vunpack.c.l.b16 %v370
    %v1991 = vunpack.c.h.b16 %v370
    %v1992 = vunpack.c.l.b16 %v371
    %v1993 = vunpack.c.h.b16 %v371
    %v1994 = vunpack.c.l.b16 %v372
    %v1995 = vunpack.c.h.b16 %v372
    %v1996 = vunpack.c.l.b16 %v373
    %v1997 = vunpack.c.h.b16 %v373
    %v1998 = vunpack.c.l.b16 %v374
    %v1999 = vunpack.c.h.b16 %v374
    %v2000 = vunpack.c.l.b16 %v375
    %v2001 = vunpack.c.h.b16 %v375
    %v2002 = vunpack.c.l.b16 %v376
    %v2003 = vunpack.c.h.b16 %v376
    %v2004 = vunpack.c.l.b16 %v377
    %v2005 = vunpack.c.h.b16 %v377
    %v2006 = vunpack.c.l.b16 %v378
    %v2007 = vunpack.c.h.b16 %v378
    %v2008 = vunpack.c.l.b16 %v379
    %v2009 = vunpack.c.h.b16 %v379
    %v2010 = vunpack.c.l.b16 %v380
    %v2011 = vunpack.c.h.b16 %v380
    %v2012 = vunpack.c.l.b16 %v381
    %v2013 = vunpack.c.h.b16 %v381
    %v2014 = vunpack.c.l.b16 %v382
    %v2015 = vunpack.c.h.b16 %v382
    %v2016 = vunpack.c.l.b16 %v383
    %v2017 = vunpack.c.h.b16 %v383
    %v2018 = vunpack.c.l.b16 %v384
    %v2019 = vunpack.c.h.b16 %v384
    %v2020 = vunpack.c.l.b16 %v385
    %v2021 = vunpack.c.h.b16 %v385
    %v2022 = vunpack.c.l.b16 %v386
    %v2023 = vunpack.c.h.b16 %v386
    %v2024 = vunpack.c.l.b16 %v387
    %v2025 = vunpack.c.h.b16 %v387
    %v2026 = vunpack.c.l.b16 %v388
    %v2027 = vunpack.c.h.b16 %v388
    %v2028 = vunpack.c.l.b16 %v389
    %v2029 = vunpack.c.h.b16 %v389
    %v2030 = vunpack.c.l.b16 %v390
    %v2031 = vunpack.c.h.b16 %v390
    %v2032 = vunpack.c.l.b16 %v391
    %v2033 = vunpack.c.h.b16 %v391
    %v2034 = vunpack.c.l.b16 %v392
    %v2035 = vunpack.c.h.b16 %v392
    %v2036 = vunpack.c.l.b16 %v393
    %v2037 = vunpack.c.h.b16 %v393
    %v2038 = vunpack.c.l.b16 %v394
    %v2039 = vunpack.c.h.b16 %v394
    %v2040 = vunpack.c.l.b16 %v395
    %v2041 = vunpack.c.h.b16 %v395
    %v2042 = vunpack.c.l.b16 %v396
    %v2043 = vunpack.c.h.b16 %v396
    %v2044 = vunpack.c.l.b16 %v397
    %v2045 = vunpack.c.h.b16 %v397
    %v2046 = vunpack.c.l.b16 %v398
    %v2047 = vunpack.c.h.b16 %v398
    %v2048 = vunpack.c.l.b16 %v399
    %v2049 = vunpack.c.h.b16 %v399
    %v2050 = vunpack.c.l.b16 %v400
    %v2051 = vunpack.c.h.b16 %v400
    %v2052 = vunpack.c.l.b16 %v401
    %v2053 = vunpack.c.h.b16 %v401
    %v2054 = vunpack.c.l.b16 %v402
    %v2055 = vunpack.c.h.b16 %v402
    %v2056 = vunpack.c.l.b16 %v403
    %v2057 = vunpack.c.h.b16 %v403
    %v2058 = vunpack.c.l.b16 %v404
    %v2059 = vunpack.c.h.b16 %v404
    %v2060 = vunpack.c.l.b16 %v405
    %v2061 = vunpack.c.h.b16 %v405
    %v2062 = vunpack.c.l.b16 %v406
    %v2063 = vunpack.c.h.b16 %v406
    %v2064 = vunpack.c.l.b16 %v407
    %v2065 = vunpack.c.h.b16 %v407
    %v2066 = vunpack.c.l.b16 %v408
    %v2067 = vunpack.c.h.b16 %v408
    %v2068 = vunpack.c.l.b16 %v409
    %v2069 = vunpack.c.h.b16 %v409
    %v2070 = vunpack.c.l.b16 %v410
    %v2071 = vunpack.c.h.b16 %v410
    %v2072 = vunpack.c.l.b16 %v411
    %v2073 = vunpack.c.h.b16 %v411
    %v2074 = vunpack.c.l.b16 %v412
    %v2075 = vunpack.c.h.b16 %v412
    %v2076 = vunpack.c.l.b16 %v413
    %v2077 = vunpack.c.h.b16 %v413
    %v2078 = vunpack.c.l.b16 %v414
    %v2079 = vunpack.c.h.b16 %v414
    %v2080 = vunpack.c.l.b16 %v415
    %v2081 = vunpack.c.h.b16 %v415
    %v2082 = vunpack.c.l.b16 %v416
    %v2083 = vunpack.c.h.b16 %v416
    %v2084 = vunpack.c.l.b16 %v417
    %v2085 = vunpack.c.h.b16 %v417
    %v2086 = vunpack.c.l.b16 %v418
    %v2087 = vunpack.c.h.b16 %v418
    %v2088 = vunpack.c.l.b16 %v419
    %v2089 = vunpack.c.h.b16 %v419
    %v2090 = vunpack.c.l.b16 %v420
    %v2091 = vunpack.c.h.b16 %v420
    %v2092 = vunpack.c.l.b16 %v421
    %v2093 = vunpack.c.h.b16 %v421
    %v2094 = vunpack.c.l.b16 %v422
    %v2095 = vunpack.c.h.b16 %v422
    %v2096 = vunpack.c.l.b16 %v423
    %v2097 = vunpack.c.h.b16 %v423
    %v2098 = vunpack.c.l.b16 %v424
    %v2099 = vunpack.c.h.b16 %v424
    %v2100 = vunpack.c.l.b16 %v425
    %v2101 = vunpack.c.h.b16 %v425
    %v2102 = vunpack.c.l.b16 %v426
    %v2103 = vunpack.c.h.b16 %v426
    %v2104 = vunpack.c.l.b16 %v427
    %v2105 = vunpack.c.h.b16 %v427
    %v2106 = vunpack.c.l.b16 %v428
    %v2107 = vunpack.c.h.b16 %v428
    %v2108 = vunpack.c.l.b16 %v429
    %v2109 = vunpack.c.h.b16 %v429
    %v2110 = vunpack.c.l.b16 %v430
    %v2111 = vunpack.c.h.b16 %v430
    %v2112 = vunpack.c.l.b16 %v431
    %v2113 = vunpack.c.h.b16 %v431
    %v2114 = vunpack.c.l.b16 %v432
    %v2115 = vunpack.c.h.b16 %v432
    %v2116 = vunpack.c.l.b16 %v433
    %v2117 = vunpack.c.h.b16 %v433
    %v2118 = vunpack.c.l.b16 %v434
    %v2119 = vunpack.c.h.b16 %v434
    %v2120 = vunpack.c.l.b16 %v435
    %v2121 = vunpack.c.h.b16 %v435
    %v2122 = vunpack.c.l.b16 %v436
    %v2123 = vunpack.c.h.b16 %v436
    %v2124 = vunpack.c.l.b16 %v437
    %v2125 = vunpack.c.h.b16 %v437
    %v2126 = vunpack.c.l.b16 %v438
    %v2127 = vunpack.c.h.b16 %v438
    %v2128 = vunpack.c.l.b16 %v439
    %v2129 = vunpack.c.h.b16 %v439
    %v2130 = vunpack.c.l.b16 %v440
    %v2131 = vunpack.c.h.b16 %v440
    %v2132 = vunpack.c.l.b16 %v441
    %v2133 = vunpack.c.h.b16 %v441
    %v2134 = vunpack.c.l.b16 %v442
    %v2135 = vunpack.c.h.b16 %v442
    %v2136 = vunpack.c.l.b16 %v443
    %v2137 = vunpack.c.h.b16 %v443
    %v2138 = vunpack.c.l.b16 %v444
    %v2139 = vunpack.c.h.b16 %v444
    %v2140 = vunpack.c.l.b16 %v445
    %v2141 = vunpack.c.h.b16 %v445
    %v2142 = vunpack.c.l.b16 %v446
    %v2143 = vunpack.c.h.b16 %v446
    %v2144 = vunpack.c.l.b16 %v447
    %v2145 = vunpack.c.h.b16 %v447
    %v2146 = vunpack.c.l.b16 %v448
    %v2147 = vunpack.c.h.b16 %v448
    %v2148 = vunpack.c.l.b16 %v449
    %v2149 = vunpack.c.h.b16 %v449
    %v2150 = vunpack.c.l.b16 %v450
    %v2151 = vunpack.c.h.b16 %v450
    %v2152 = vunpack.c.l.b16 %v451
    %v2153 = vunpack.c.h.b16 %v451
    %v2154 = vunpack.c.l.b16 %v452
    %v2155 = vunpack.c.h.b16 %v452
    %v2156 = vunpack.c.l.b16 %v453
    %v2157 = vunpack.c.h.b16 %v453
    %v2158 = vunpack.c.l.b16 %v454
    %v2159 = vunpack.c.h.b16 %v454
    %v2160 = vunpack.c.l.b16 %v455
    %v2161 = vunpack.c.h.b16 %v455
    %v2162 = vunpack.c.l.b16 %v456
    %v2163 = vunpack.c.h.b16 %v456
    %v2164 = vunpack.c.l.b16 %v457
    %v2165 = vunpack.c.h.b16 %v457
    %v2166 = vunpack.c.l.b16 %v458
    %v2167 = vunpack.c.h.b16 %v458
    %v2168 = vunpack.c.l.b16 %v459
    %v2169 = vunpack.c.h.b16 %v459
    %v2170 = vunpack.c.l.b16 %v460
    %v2171 = vunpack.c.h.b16 %v460
    %v2172 = vunpack.c.l.b16 %v461
    %v2173 = vunpack.c.h.b16 %v461
    %v2174 = vunpack.c.l.b16 %v462
    %v2175 = vunpack.c.h.b16 %v462
    %v2176 = vunpack.c.l.b16 %v463
    %v2177 = vunpack.c.h.b16 %v463
    %v2178 = vunpack.c.l.b16 %v464
    %v2179 = vunpack.c.h.b16 %v464
    %v2180 = vunpack.c.l.b16 %v465
    %v2181 = vunpack.c.h.b16 %v465
    %v2182 = vunpack.c.l.b16 %v466
    %v2183 = vunpack.c.h.b16 %v466
    %v2184 = vunpack.c.l.b16 %v467
    %v2185 = vunpack.c.h.b16 %v467
    %v2186 = vunpack.c.l.b16 %v468
    %v2187 = vunpack.c.h.b16 %v468
    %v2188 = vunpack.c.l.b16 %v469
    %v2189 = vunpack.c.h.b16 %v469
    %v2190 = vunpack.c.l.b16 %v470
    %v2191 = vunpack.c.h.b16 %v470
    %v2192 = vunpack.c.l.b16 %v471
    %v2193 = vunpack.c.h.b16 %v471
    %v2194 = vunpack.c.l.b16 %v472
    %v2195 = vunpack.c.h.b16 %v472
    %v2196 = vunpack.c.l.b16 %v473
    %v2197 = vunpack.c.h.b16 %v473
    %v2198 = vunpack.c.l.b16 %v474
    %v2199 = vunpack.c.h.b16 %v474
    %v2200 = vunpack.c.l.b16 %v475
    %v2201 = vunpack.c.h.b16 %v475
    %v2202 = vunpack.c.l.b16 %v476
    %v2203 = vunpack.c.h.b16 %v476
    %v2204 = vunpack.c.l.b16 %v477
    %v2205 = vunpack.c.h.b16 %v477
    %v2206 = vunpack.c.l.b16 %v478
    %v2207 = vunpack.c.h.b16 %v478
    %v2208 = vunpack.c.l.b16 %v479
    %v2209 = vunpack.c.h.b16 %v479
    %v2210 = vunpack.c.l.b16 %v480
    %v2211 = vunpack.c.h.b16 %v480
    %v2212 = vunpack.c.l.b16 %v481
    %v2213 = vunpack.c.h.b16 %v481
    %v2214 = vunpack.c.l.b16 %v482
    %v2215 = vunpack.c.h.b16 %v482
    %v2216 = vunpack.c.l.b16 %v483
    %v2217 = vunpack.c.h.b16 %v483
    %v2218 = vunpack.c.l.b16 %v484
    %v2219 = vunpack.c.h.b16 %v484
    %v2220 = vunpack.c.l.b16 %v485
    %v2221 = vunpack.c.h.b16 %v485
    %v2222 = vunpack.c.l.b16 %v486
    %v2223 = vunpack.c.h.b16 %v486
    %v2224 = vunpack.c.l.b16 %v487
    %v2225 = vunpack.c.h.b16 %v487
    %v2226 = vunpack.c.l.b16 %v488
    %v2227 = vunpack.c.h.b16 %v488
    %v2228 = vunpack.c.l.b16 %v489
    %v2229 = vunpack.c.h.b16 %v489
    %v2230 = vunpack.c.l.b16 %v490
    %v2231 = vunpack.c.h.b16 %v490
    %v2232 = vunpack.c.l.b16 %v491
    %v2233 = vunpack.c.h.b16 %v491
    %v2234 = vunpack.c.l.b16 %v492
    %v2235 = vunpack.c.h.b16 %v492
    %v2236 = vunpack.c.l.b16 %v493
    %v2237 = vunpack.c.h.b16 %v493
    %v2238 = vunpack.c.l.b16 %v494
    %v2239 = vunpack.c.h.b16 %v494
    %v2240 = vunpack.c.l.b16 %v495
    %v2241 = vunpack.c.h.b16 %v495
    %v2242 = vunpack.c.l.b16 %v496
    %v2243 = vunpack.c.h.b16 %v496
    %v2244 = vunpack.c.l.b16 %v497
    %v2245 = vunpack.c.h.b16 %v497
    %v2246 = vunpack.c.l.b16 %v498
    %v2247 = vunpack.c.h.b16 %v498
    %v2248 = vunpack.c.l.b16 %v499
    %v2249 = vunpack.c.h.b16 %v499
    %v2250 = vunpack.c.l.b16 %v500
    %v2251 = vunpack.c.h.b16 %v500
    %v2252 = vunpack.c.l.b16 %v501
    %v2253 = vunpack.c.h.b16 %v501
    %v2254 = vunpack.c.l.b16 %v502
    %v2255 = vunpack.c.h.b16 %v502
    %v2256 = vunpack.c.l.b16 %v503
    %v2257 = vunpack.c.h.b16 %v503
    %v2258 = vunpack.c.l.b16 %v504
    %v2259 = vunpack.c.h.b16 %v504
    %v2260 = vunpack.c.l.b16 %v505
    %v2261 = vunpack.c.h.b16 %v505
    %v2262 = vunpack.c.l.b16 %v506
    %v2263 = vunpack.c.h.b16 %v506
    %v2264 = vunpack.c.l.b16 %v507
    %v2265 = vunpack.c.h.b16 %v507
    %v2266 = vunpack.c.l.b16 %v508
    %v2267 = vunpack.c.h.b16 %v508
    %v2268 = vunpack.c.l.b16 %v509
    %v2269 = vunpack.c.h.b16 %v509
    %v2270 = vunpack.c.l.b16 %v510
    %v2271 = vunpack.c.h.b16 %v510
    %v2272 = vunpack.c.l.b16 %v511
    %v2273 = vunpack.c.h.b16 %v511
    %v2274 = vunpack.c.l.b16 %v512
    %v2275 = vunpack.c.h.b16 %v512
    %v2276 = vunpack.c.l.b16 %v513
    %v2277 = vunpack.c.h.b16 %v513
    %v2278 = vunpack.c.l.b16 %v514
    %v2279 = vunpack.c.h.b16 %v514
    %v2280 = vunpack.c.l.b16 %v515
    %v2281 = vunpack.c.h.b16 %v515
    %v2282 = vunpack.c.l.b16 %v516
    %v2283 = vunpack.c.h.b16 %v516
    %v2284 = vunpack.c.l.b16 %v517
    %v2285 = vunpack.c.h.b16 %v517
    %v2286 = vunpack.c.l.b16 %v518
    %v2287 = vunpack.c.h.b16 %v518
    %v2288 = vunpack.c.l.b16 %v519
    %v2289 = vunpack.c.h.b16 %v519
    %v2290 = vunpack.c.l.b16 %v520
    %v2291 = vunpack.c.h.b16 %v520
    %v2292 = vunpack.c.l.b16 %v521
    %v2293 = vunpack.c.h.b16 %v521
    %v2294 = vunpack.c.l.b16 %v522
    %v2295 = vunpack.c.h.b16 %v522
    %v2296 = vunpack.c.l.b16 %v523
    %v2297 = vunpack.c.h.b16 %v523
    %v2298 = vunpack.c.l.b16 %v524
    %v2299 = vunpack.c.h.b16 %v524
    %v2300 = vunpack.c.l.b16 %v525
    %v2301 = vunpack.c.h.b16 %v525
    %v2302 = vunpack.c.l.b16 %v526
    %v2303 = vunpack.c.h.b16 %v526
    %v2304 = vunpack.c.l.b16 %v527
    %v2305 = vunpack.c.h.b16 %v527
    %v2306 = vunpack.c.l.b16 %v528
    %v2307 = vunpack.c.h.b16 %v528
    %v2308 = vunpack.c.l.b16 %v529
    %v2309 = vunpack.c.h.b16 %v529
    %v2310 = vunpack.c.l.b16 %v530
    %v2311 = vunpack.c.h.b16 %v530
    %v2312 = vunpack.c.l.b16 %v531
    %v2313 = vunpack.c.h.b16 %v531
    %v2314 = vunpack.c.l.b16 %v532
    %v2315 = vunpack.c.h.b16 %v532
    %v2316 = vunpack.c.l.b16 %v533
    %v2317 = vunpack.c.h.b16 %v533
    %v2318 = vunpack.c.l.b16 %v534
    %v2319 = vunpack.c.h.b16 %v534
    %v2320 = vunpack.c.l.b16 %v535
    %v2321 = vunpack.c.h.b16 %v535
    %v2322 = vunpack.c.l.b16 %v536
    %v2323 = vunpack.c.h.b16 %v536
    %v2324 = vunpack.c.l.b16 %v537
    %v2325 = vunpack.c.h.b16 %v537
    %v2326 = vunpack.c.l.b16 %v538
    %v2327 = vunpack.c.h.b16 %v538
    %v2328 = vunpack.c.l.b16 %v539
    %v2329 = vunpack.c.h.b16 %v539
    %v2330 = vunpack.c.l.b16 %v540
    %v2331 = vunpack.c.h.b16 %v540
    %v2332 = vunpack.c.l.b16 %v541
    %v2333 = vunpack.c.h.b16 %v541
    %v2334 = vunpack.c.l.b16 %v542
    %v2335 = vunpack.c.h.b16 %v542
    %v2336 = vunpack.c.l.b16 %v543
    %v2337 = vunpack.c.h.b16 %v543
    %v2338 = vunpack.c.l.b16 %v544
    %v2339 = vunpack.c.h.b16 %v544
    %v2340 = vunpack.c.l.b16 %v545
    %v2341 = vunpack.c.h.b16 %v545
    %v2342 = vunpack.c.l.b16 %v546
    %v2343 = vunpack.c.h.b16 %v546
    %v2344 = vunpack.c.l.b16 %v547
    %v2345 = vunpack.c.h.b16 %v547
    %v2346 = vunpack.c.l.b16 %v548
    %v2347 = vunpack.c.h.b16 %v548
    %v2348 = vunpack.c.l.b16 %v549
    %v2349 = vunpack.c.h.b16 %v549
    %v2350 = vunpack.c.l.b16 %v550
    %v2351 = vunpack.c.h.b16 %v550
    %v2352 = vunpack.c.l.b16 %v551
    %v2353 = vunpack.c.h.b16 %v551
    %v2354 = vunpack.c.l.b16 %v552
    %v2355 = vunpack.c.h.b16 %v552
    %v2356 = vunpack.c.l.b16 %v553
    %v2357 = vunpack.c.h.b16 %v553
    %v2358 = vunpack.c.l.b16 %v554
    %v2359 = vunpack.c.h.b16 %v554
    %v2360 = vunpack.c.l.b16 %v555
    %v2361 = vunpack.c.h.b16 %v555
    %v2362 = vunpack.c.l.b16 %v556
    %v2363 = vunpack.c.h.b16 %v556
    %v2364 = vunpack.c.l.b16 %v557
    %v2365 = vunpack.c.h.b16 %v557
    %v2366 = vunpack.c.l.b16 %v558
    %v2367 = vunpack.c.h.b16 %v558
    %v2368 = vunpack.c.l.b16 %v559
    %v2369 = vunpack.c.h.b16 %v559
    %v2370 = vunpack.c.l.b16 %v560
    %v2371 = vunpack.c.h.b16 %v560
    %v2372 = vunpack.c.l.b16 %v561
    %v2373 = vunpack.c.h.b16 %v561
    %v2374 = vunpack.c.l.b16 %v562
    %v2375 = vunpack.c.h.b16 %v562
    %v2376 = vunpack.c.l.b16 %v563
    %v2377 = vunpack.c.h.b16 %v563
    %v2378 = vunpack.c.l.b16 %v564
    %v2379 = vunpack.c.h.b16 %v564
    %v2380 = vunpack.c.l.b16 %v565
    %v2381 = vunpack.c.h.b16 %v565
    %v2382 = vunpack.c.l.b16 %v566
    %v2383 = vunpack.c.h.b16 %v566
    %v2384 = vunpack.c.l.b16 %v567
    %v2385 = vunpack.c.h.b16 %v567
    %v2386 = vunpack.c.l.b16 %v568
    %v2387 = vunpack.c.h.b16 %v568
    %v2388 = vunpack.c.l.b16 %v569
    %v2389 = vunpack.c.h.b16 %v569
    %v2390 = vunpack.c.l.b16 %v570
    %v2391 = vunpack.c.h.b16 %v570
    %v2392 = vunpack.c.l.b16 %v571
    %v2393 = vunpack.c.h.b16 %v571
    %v2394 = vunpack.c.l.b16 %v572
    %v2395 = vunpack.c.h.b16 %v572
    %v2396 = vunpack.c.l.b16 %v573
    %v2397 = vunpack.c.h.b16 %v573
    %v2398 = vunpack.c.l.b16 %v574
    %v2399 = vunpack.c.h.b16 %v574
    %v2400 = vunpack.c.l.b16 %v575
    %v2401 = vunpack.c.h.b16 %v575
    %v2402 = vunpack.c.l.b16 %v576
    %v2403 = vunpack.c.h.b16 %v576
    %v2404 = vunpack.c.l.b16 %v577
    %v2405 = vunpack.c.h.b16 %v577
    %v2406 = vunpack.c.l.b16 %v578
    %v2407 = vunpack.c.h.b16 %v578
    %v2408 = vunpack.c.l.b16 %v579
    %v2409 = vunpack.c.h.b16 %v579
    %v2410 = vunpack.c.l.b16 %v580
    %v2411 = vunpack.c.h.b16 %v580
    %v2412 = vunpack.c.l.b16 %v581
    %v2413 = vunpack.c.h.b16 %v581
    %v2414 = vunpack.c.l.b16 %v582
    %v2415 = vunpack.c.h.b16 %v582
    %v2416 = vunpack.c.l.b16 %v583
    %v2417 = vunpack.c.h.b16 %v583
    %v2418 = vunpack.c.l.b16 %v584
    %v2419 = vunpack.c.h.b16 %v584
    %v2420 = vunpack.c.l.b16 %v585
    %v2421 = vunpack.c.h.b16 %v585
    %v2422 = vunpack.c.l.b16 %v586
    %v2423 = vunpack.c.h.b16 %v586
    %v2424 = vunpack.c.l.b16 %v587
    %v2425 = vunpack.c.h.b16 %v587
    %v2426 = vunpack.c.l.b16 %v588
    %v2427 = vunpack.c.h.b16 %v588
    %v2428 = vunpack.c.l.b16 %v589
    %v2429 = vunpack.c.h.b16 %v589
    %v2430 = vunpack.c.l.b16 %v590
    %v2431 = vunpack.c.h.b16 %v590
    %v2432 = vunpack.c.l.b16 %v591
    %v2433 = vunpack.c.h.b16 %v591
    %v2434 = vunpack.c.l.b16 %v592
    %v2435 = vunpack.c.h.b16 %v592
    %v2436 = vunpack.c.l.b16 %v593
    %v2437 = vunpack.c.h.b16 %v593
    %v2438 = vunpack.c.l.b16 %v594
    %v2439 = vunpack.c.h.b16 %v594
    %v2440 = vunpack.c.l.b16 %v595
    %v2441 = vunpack.c.h.b16 %v595
    %v2442 = vunpack.c.l.b16 %v596
    %v2443 = vunpack.c.h.b16 %v596
    %v2444 = vunpack.c.l.b16 %v597
    %v2445 = vunpack.c.h.b16 %v597
    %v2446 = vunpack.c.l.b16 %v598
    %v2447 = vunpack.c.h.b16 %v598
    %v2448 = vunpack.c.l.b16 %v599
    %v2449 = vunpack.c.h.b16 %v599
    %v2450 = vunpack.c.l.b16 %v600
    %v2451 = vunpack.c.h.b16 %v600
    %v2452 = vunpack.c.l.b16 %v601
    %v2453 = vunpack.c.h.b16 %v601
    %v2454 = vunpack.c.l.b16 %v602
    %v2455 = vunpack.c.h.b16 %v602
    %v2456 = vunpack.c.l.b16 %v603
    %v2457 = vunpack.c.h.b16 %v603
    %v2458 = vunpack.c.l.b16 %v604
    %v2459 = vunpack.c.h.b16 %v604
    %v2460 = vunpack.c.l.b16 %v605
    %v2461 = vunpack.c.h.b16 %v605
    %v2462 = vunpack.c.l.b16 %v606
    %v2463 = vunpack.c.h.b16 %v606
    %v2464 = vunpack.c.l.b16 %v607
    %v2465 = vunpack.c.h.b16 %v607
    %v2466 = vunpack.c.l.b16 %v608
    %v2467 = vunpack.c.h.b16 %v608
    %v2468 = vunpack.c.l.b16 %v609
    %v2469 = vunpack.c.h.b16 %v609
    %v2470 = vunpack.c.l.b16 %v610
    %v2471 = vunpack.c.h.b16 %v610
    %v2472 = vunpack.c.l.b16 %v611
    %v2473 = vunpack.c.h.b16 %v611
    %v2474 = vunpack.c.l.b16 %v612
    %v2475 = vunpack.c.h.b16 %v612
    %v2476 = vunpack.c.l.b16 %v613
    %v2477 = vunpack.c.h.b16 %v613
    %v2478 = vunpack.c.l.b16 %v614
    %v2479 = vunpack.c.h.b16 %v614
    %v2480 = vunpack.c.l.b16 %v615
    %v2481 = vunpack.c.h.b16 %v615
    %v2482 = vunpack.c.l.b16 %v616
    %v2483 = vunpack.c.h.b16 %v616
    %v2484 = vunpack.c.l.b16 %v617
    %v2485 = vunpack.c.h.b16 %v617
    %v2486 = vunpack.c.l.b16 %v618
    %v2487 = vunpack.c.h.b16 %v618
    %v2488 = vunpack.c.l.b16 %v619
    %v2489 = vunpack.c.h.b16 %v619
    %v2490 = vunpack.c.l.b16 %v620
    %v2491 = vunpack.c.h.b16 %v620
    %v2492 = vunpack.c.l.b16 %v621
    %v2493 = vunpack.c.h.b16 %v621
    %v2494 = vunpack.c.l.b16 %v622
    %v2495 = vunpack.c.h.b16 %v622
    %v2496 = vunpack.c.l.b16 %v623
    %v2497 = vunpack.c.h.b16 %v623
    %v2498 = vunpack.c.l.b16 %v624
    %v2499 = vunpack.c.h.b16 %v624
    %v2500 = vunpack.c.l.b16 %v625
    %v2501 = vunpack.c.h.b16 %v625
    %v2502 = vunpack.c.l.b16 %v626
    %v2503 = vunpack.c.h.b16 %v626
    %v2504 = vunpack.c.l.b16 %v627
    %v2505 = vunpack.c.h.b16 %v627
    %v2506 = vunpack.c.l.b16 %v628
    %v2507 = vunpack.c.h.b16 %v628
    %v2508 = vunpack.c.l.b16 %v629
    %v2509 = vunpack.c.h.b16 %v629
    %v2510 = vunpack.c.l.b16 %v630
    %v2511 = vunpack.c.h.b16 %v630
    %v2512 = vunpack.c.l.b16 %v631
    %v2513 = vunpack.c.h.b16 %v631
    %v2514 = vunpack.c.l.b16 %v632
    %v2515 = vunpack.c.h.b16 %v632
    %v2516 = vunpack.c.l.b16 %v633
    %v2517 = vunpack.c.h.b16 %v633
    %v2518 = vunpack.c.l.b16 %v634
    %v2519 = vunpack.c.h.b16 %v634
    %v2520 = vunpack.c.l.b16 %v635
    %v2521 = vunpack.c.h.b16 %v635
    %v2522 = vunpack.c.l.b16 %v636
    %v2523 = vunpack.c.h.b16 %v636
    %v2524 = vunpack.c.l.b16 %v637
    %v2525 = vunpack.c.h.b16 %v637
    %v2526 = vunpack.c.l.b16 %v638
    %v2527 = vunpack.c.h.b16 %v638
    %v2528 = vunpack.c.l.b16 %v639
    %v2529 = vunpack.c.h.b16 %v639
    %v2530 = vunpack.c.l.b16 %v640
    %v2531 = vunpack.c.h.b16 %v640
    %v2532 = vunpack.c.l.b16 %v641
    %v2533 = vunpack.c.h.b16 %v641
    %v2534 = vunpack.c.l.b16 %v642
    %v2535 = vunpack.c.h.b16 %v642
    %v2536 = vunpack.c.l.b16 %v643
    %v2537 = vunpack.c.h.b16 %v643
    %v2538 = vunpack.c.l.b16 %v644
    %v2539 = vunpack.c.h.b16 %v644
    %v2540 = vunpack.c.l.b16 %v645
    %v2541 = vunpack.c.h.b16 %v645
    %v2542 = vunpack.c.l.b16 %v646
    %v2543 = vunpack.c.h.b16 %v646
    %v2544 = vunpack.c.l.b16 %v647
    %v2545 = vunpack.c.h.b16 %v647
    %v2546 = vunpack.c.l.b16 %v648
    %v2547 = vunpack.c.h.b16 %v648
    %v2548 = vunpack.c.l.b16 %v649
    %v2549 = vunpack.c.h.b16 %v649
    %v2550 = vunpack.c.l.b16 %v650
    %v2551 = vunpack.c.h.b16 %v650
    %v2552 = vunpack.c.l.b16 %v651
    %v2553 = vunpack.c.h.b16 %v651
    %v2554 = vunpack.c.l.b16 %v652
    %v2555 = vunpack.c.h.b16 %v652
    %v2556 = vunpack.c.l.b16 %v653
    %v2557 = vunpack.c.h.b16 %v653
    %v2558 = vunpack.c.l.b16 %v654
    %v2559 = vunpack.c.h.b16 %v654
    %v2560 = vunpack.c.l.b16 %v655
    %v2561 = vunpack.c.h.b16 %v655
    %v2562 = vunpack.c.l.b16 %v656
    %v2563 = vunpack.c.h.b16 %v656
    %v2564 = vunpack.c.l.b16 %v657
    %v2565 = vunpack.c.h.b16 %v657
    %v2566 = vunpack.c.l.b16 %v658
    %v2567 = vunpack.c.h.b16 %v658
    %v2568 = vunpack.c.l.b16 %v659
    %v2569 = vunpack.c.h.b16 %v659
    %v2570 = vunpack.c.l.b16 %v660
    %v2571 = vunpack.c.h.b16 %v660
    %v2572 = vunpack.c.l.b16 %v661
    %v2573 = vunpack.c.h.b16 %v661
    %v2574 = vunpack.c.l.b16 %v662
    %v2575 = vunpack.c.h.b16 %v662
    %v2576 = vunpack.c.l.b16 %v663
    %v2577 = vunpack.c.h.b16 %v663
    %v2578 = vunpack.c.l.b16 %v664
    %v2579 = vunpack.c.h.b16 %v664
    %v2580 = vunpack.c.l.b16 %v665
    %v2581 = vunpack.c.h.b16 %v665
    %v2582 = vunpack.c.l.b16 %v666
    %v2583 = vunpack.c.h.b16 %v666
    %v2584 = vunpack.c.l.b16 %v667
    %v2585 = vunpack.c.h.b16 %v667
    %v2586 = vunpack.c.l.b16 %v668
    %v2587 = vunpack.c.h.b16 %v668
    %v2588 = vunpack.c.l.b16 %v669
    %v2589 = vunpack.c.h.b16 %v669
    %v2590 = vunpack.c.l.b16 %v670
    %v2591 = vunpack.c.h.b16 %v670
    %v2592 = vunpack.c.l.b16 %v671
    %v2593 = vunpack.c.h.b16 %v671
    %v2594 = vunpack.c.l.b16 %v672
    %v2595 = vunpack.c.h.b16 %v672
    %v2596 = vunpack.c.l.b16 %v673
    %v2597 = vunpack.c.h.b16 %v673
    %v2598 = vunpack.c.l.b16 %v674
    %v2599 = vunpack.c.h.b16 %v674
    %v2600 = vunpack.c.l.b16 %v675
    %v2601 = vunpack.c.h.b16 %v675
    %v2602 = vunpack.c.l.b16 %v676
    %v2603 = vunpack.c.h.b16 %v676
    %v2604 = vunpack.c.l.b16 %v677
    %v2605 = vunpack.c.h.b16 %v677
    %v2606 = vunpack.c.l.b16 %v678
    %v2607 = vunpack.c.h.b16 %v678
    %v2608 = vunpack.c.l.b16 %v679
    %v2609 = vunpack.c.h.b16 %v679
    %v2610 = vunpack.c.l.b16 %v680
    %v2611 = vunpack.c.h.b16 %v680
    %v2612 = vunpack.c.l.b16 %v681
    %v2613 = vunpack.c.h.b16 %v681
    %v2614 = vunpack.c.l.b16 %v682
    %v2615 = vunpack.c.h.b16 %v682
    %v2616 = vunpack.c.l.b16 %v683
    %v2617 = vunpack.c.h.b16 %v683
    %v2618 = vunpack.c.l.b16 %v684
    %v2619 = vunpack.c.h.b16 %v684
    %v2620 = vunpack.c.l.b16 %v685
    %v2621 = vunpack.c.h.b16 %v685
    %v2622 = vunpack.c.l.b16 %v686
    %v2623 = vunpack.c.h.b16 %v686
    %v2624 = vunpack.c.l.b16 %v687
    %v2625 = vunpack.c.h.b16 %v687
    %v2626 = vunpack.c.l.b16 %v688
    %v2627 = vunpack.c.h.b16 %v688
    %v2628 = vunpack.c.l.b16 %v689
    %v2629 = vunpack.c.h.b16 %v689
    %v2630 = vunpack.c.l.b16 %v690
    %v2631 = vunpack.c.h.b16 %v690
    %v2632 = vunpack.c.l.b16 %v691
    %v2633 = vunpack.c.h.b16 %v691
    %v2634 = vunpack.c.l.b16 %v692
    %v2635 = vunpack.c.h.b16 %v692
    %v2636 = vunpack.c.l.b16 %v693
    %v2637 = vunpack.c.h.b16 %v693
    %v2638 = vunpack.c.l.b16 %v694
    %v2639 = vunpack.c.h.b16 %v694
    %v2640 = vunpack.c.l.b16 %v695
    %v2641 = vunpack.c.h.b16 %v695
    %v2642 = vunpack.c.l.b16 %v696
    %v2643 = vunpack.c.h.b16 %v696
    %v2644 = vunpack.c.l.b16 %v697
    %v2645 = vunpack.c.h.b16 %v697
    %v2646 = vunpack.c.l.b16 %v698
    %v2647 = vunpack.c.h.b16 %v698
    %v2648 = vunpack.c.l.b16 %v699
    %v2649 = vunpack.c.h.b16 %v699
    %v2650 = vunpack.c.l.b16 %v700
    %v2651 = vunpack.c.h.b16 %v700
    %v2652 = vunpack.c.l.b16 %v701
    %v2653 = vunpack.c.h.b16 %v701
    %v2654 = vunpack.c.l.b16 %v702
    %v2655 = vunpack.c.h.b16 %v702
    %v2656 = vunpack.c.l.b16 %v703
    %v2657 = vunpack.c.h.b16 %v703
    %v2658 = vunpack.c.l.b16 %v704
    %v2659 = vunpack.c.h.b16 %v704
    %v2660 = vunpack.c.l.b16 %v705
    %v2661 = vunpack.c.h.b16 %v705
    %v2662 = vunpack.c.l.b16 %v706
    %v2663 = vunpack.c.h.b16 %v706
    %v2664 = vunpack.c.l.b16 %v707
    %v2665 = vunpack.c.h.b16 %v707
    %v2666 = vunpack.c.l.b16 %v708
    %v2667 = vunpack.c.h.b16 %v708
    %v2668 = vunpack.c.l.b16 %v709
    %v2669 = vunpack.c.h.b16 %v709
    %v2670 = vpack.c.b16 %v1400, %v1390
    %v2671 = vpack.c.b16 %v1401, %v1391
    %v2672 = vpack.c.b16 %v1402, %v1392
    %v2673 = vpack.c.b16 %v1403, %v1393
    %v2674 = vpack.c.b16 %v1404, %v1394
    %v2675 = vpack.c.b16 %v1405, %v1395
    %v2676 = vpack.c.b16 %v1406, %v1396
    %v2677 = vpack.c.b16 %v1407, %v1397
    %v2678 = vpack.c.b16 %v1408, %v1398
    %v2679 = vpack.c.b16 %v1409, %v1399
    %v2680 = vpack.c.b16 %v1420, %v1410
    %v2681 = vpack.c.b16 %v1421, %v1411
    %v2682 = vpack.c.b16 %v1422, %v1412
    %v2683 = vpack.c.b16 %v1423, %v1413
    %v2684 = vpack.c.b16 %v1424, %v1414
    %v2685 = vpack.c.b16 %v1425, %v1415
    %v2686 = vpack.c.b16 %v1426, %v1416
    %v2687 = vpack.c.b16 %v1427, %v1417
    %v2688 = vpack.c.b16 %v1428, %v1418
    %v2689 = vpack.c.b16 %v1429, %v1419
    %v2690 = vpack.c.b16 %v1440, %v1430
    %v2691 = vpack.c.b16 %v1441, %v1431
    %v2692 = vpack.c.b16 %v1442, %v1432
    %v2693 = vpack.c.b16 %v1443, %v1433
    %v2694 = vpack.c.b16 %v1444, %v1434
    %v2695 = vpack.c.b16 %v1445, %v1435
    %v2696 = vpack.c.b16 %v1446, %v1436
    %v2697 = vpack.c.b16 %v1447, %v1437
    %v2698 = vpack.c.b16 %v1448, %v1438
    %v2699 = vpack.c.b16 %v1449, %v1439
    %v2700 = vpack.c.b16 %v1460, %v1450
    %v2701 = vpack.c.b16 %v1461, %v1451
    %v2702 = vpack.c.b16 %v1462, %v1452
    %v2703 = vpack.c.b16 %v1463, %v1453
    %v2704 = vpack.c.b16 %v1464, %v1454
    %v2705 = vpack.c.b16 %v1465, %v1455
    %v2706 = vpack.c.b16 %v1466, %v1456
    %v2707 = vpack.c.b16 %v1467, %v1457
    %v2708 = vpack.c.b16 %v1468, %v1458
    %v2709 = vpack.c.b16 %v1469, %v1459
    %v2710 = vpack.c.b16 %v1480, %v1470
    %v2711 = vpack.c.b16 %v1481, %v1471
    %v2712 = vpack.c.b16 %v1482, %v1472
    %v2713 = vpack.c.b16 %v1483, %v1473
    %v2714 = vpack.c.b16 %v1484, %v1474
    %v2715 = vpack.c.b16 %v1485, %v1475
    %v2716 = vpack.c.b16 %v1486, %v1476
    %v2717 = vpack.c.b16 %v1487, %v1477
    %v2718 = vpack.c.b16 %v1488, %v1478
    %v2719 = vpack.c.b16 %v1489, %v1479
    %v2720 = vpack.c.b16 %v1500, %v1490
    %v2721 = vpack.c.b16 %v1501, %v1491
    %v2722 = vpack.c.b16 %v1502, %v1492
    %v2723 = vpack.c.b16 %v1503, %v1493
    %v2724 = vpack.c.b16 %v1504, %v1494
    %v2725 = vpack.c.b16 %v1505, %v1495
    %v2726 = vpack.c.b16 %v1506, %v1496
    %v2727 = vpack.c.b16 %v1507, %v1497
    %v2728 = vpack.c.b16 %v1508, %v1498
    %v2729 = vpack.c.b16 %v1509, %v1499
    %v2730 = vpack.c.b16 %v1520, %v1510
    %v2731 = vpack.c.b16 %v1521, %v1511
    %v2732 = vpack.c.b16 %v1522, %v1512
    %v2733 = vpack.c.b16 %v1523, %v1513
    %v2734 = vpack.c.b16 %v1524, %v1514
    %v2735 = vpack.c.b16 %v1525, %v1515
    %v2736 = vpack.c.b16 %v1526, %v1516
    %v2737 = vpack.c.b16 %v1527, %v1517
    %v2738 = vpack.c.b16 %v1528, %v1518
    %v2739 = vpack.c.b16 %v1529, %v1519
    %v2740 = vpack.c.b16 %v1540, %v1530
    %v2741 = vpack.c.b16 %v1541, %v1531
    %v2742 = vpack.c.b16 %v1542, %v1532
    %v2743 = vpack.c.b16 %v1543, %v1533
    %v2744 = vpack.c.b16 %v1544, %v1534
    %v2745 = vpack.c.b16 %v1545, %v1535
    %v2746 = vpack.c.b16 %v1546, %v1536
    %v2747 = vpack.c.b16 %v1547, %v1537
    %v2748 = vpack.c.b16 %v1548, %v1538
    %v2749 = vpack.c.b16 %v1549, %v1539
    %v2750 = vpack.c.b16 %v1560, %v1550
    %v2751 = vpack.c.b16 %v1561, %v1551
    %v2752 = vpack.c.b16 %v1562, %v1552
    %v2753 = vpack.c.b16 %v1563, %v1553
    %v2754 = vpack.c.b16 %v1564, %v1554
    %v2755 = vpack.c.b16 %v1565, %v1555
    %v2756 = vpack.c.b16 %v1566, %v1556
    %v2757 = vpack.c.b16 %v1567, %v1557
    %v2758 = vpack.c.b16 %v1568, %v1558
    %v2759 = vpack.c.b16 %v1569, %v1559
    %v2760 = vpack.c.b16 %v1580, %v1570
    %v2761 = vpack.c.b16 %v1581, %v1571
    %v2762 = vpack.c.b16 %v1582, %v1572
    %v2763 = vpack.c.b16 %v1583, %v1573
    %v2764 = vpack.c.b16 %v1584, %v1574
    %v2765 = vpack.c.b16 %v1585, %v1575
    %v2766 = vpack.c.b16 %v1586, %v1576
    %v2767 = vpack.c.b16 %v1587, %v1577
    %v2768 = vpack.c.b16 %v1588, %v1578
    %v2769 = vpack.c.b16 %v1589, %v1579
    %v2770 = vpack.c.b16 %v1600, %v1590
    %v2771 = vpack.c.b16 %v1601, %v1591
    %v2772 = vpack.c.b16 %v1602, %v1592
    %v2773 = vpack.c.b16 %v1603, %v1593
    %v2774 = vpack.c.b16 %v1604, %v1594
    %v2775 = vpack.c.b16 %v1605, %v1595
    %v2776 = vpack.c.b16 %v1606, %v1596
    %v2777 = vpack.c.b16 %v1607, %v1597
    %v2778 = vpack.c.b16 %v1608, %v1598
    %v2779 = vpack.c.b16 %v1609, %v1599
    %v2780 = vpack.c.b16 %v1620, %v1610
    %v2781 = vpack.c.b16 %v1621, %v1611
    %v2782 = vpack.c.b16 %v1622, %v1612
    %v2783 = vpack.c.b16 %v1623, %v1613
    %v2784 = vpack.c.b16 %v1624, %v1614
    %v2785 = vpack.c.b16 %v1625, %v1615
    %v2786 = vpack.c.b16 %v1626, %v1616
    %v2787 = vpack.c.b16 %v1627, %v1617
    %v2788 = vpack.c.b16 %v1628, %v1618
    %v2789 = vpack.c.b16 %v1629, %v1619
    %v2790 = vpack.c.b16 %v1640, %v1630
    %v2791 = vpack.c.b16 %v1641, %v1631
    %v2792 = vpack.c.b16 %v1642, %v1632
    %v2793 = vpack.c.b16 %v1643, %v1633
    %v2794 = vpack.c.b16 %v1644, %v1634
    %v2795 = vpack.c.b16 %v1645, %v1635
    %v2796 = vpack.c.b16 %v1646, %v1636
    %v2797 = vpack.c.b16 %v1647, %v1637
    %v2798 = vpack.c.b16 %v1648, %v1638
    %v2799 = vpack.c.b16 %v1649, %v1639
    %v2800 = vpack.c.b16 %v1660, %v1650
    %v2801 = vpack.c.b16 %v1661, %v1651
    %v2802 = vpack.c.b16 %v1662, %v1652
    %v2803 = vpack.c.b16 %v1663, %v1653
    %v2804 = vpack.c.b16 %v1664, %v1654
    %v2805 = vpack.c.b16 %v1665, %v1655
    %v2806 = vpack.c.b16 %v1666, %v1656
    %v2807 = vpack.c.b16 %v1667, %v1657
    %v2808 = vpack.c.b16 %v1668, %v1658
    %v2809 = vpack.c.b16 %v1669, %v1659
    %v2810 = vpack.c.b16 %v1680, %v1670
    %v2811 = vpack.c.b16 %v1681, %v1671
    %v2812 = vpack.c.b16 %v1682, %v1672
    %v2813 = vpack.c.b16 %v1683, %v1673
    %v2814 = vpack.c.b16 %v1684, %v1674
    %v2815 = vpack.c.b16 %v1685, %v1675
    %v2816 = vpack.c.b16 %v1686, %v1676
    %v2817 = vpack.c.b16 %v1687, %v1677
    %v2818 = vpack.c.b16 %v1688, %v1678
    %v2819 = vpack.c.b16 %v1689, %v1679
    %v2820 = vpack.c.b16 %v1700, %v1690
    %v2821 = vpack.c.b16 %v1701, %v1691
    %v2822 = vpack.c.b16 %v1702, %v1692
    %v2823 = vpack.c.b16 %v1703, %v1693
    %v2824 = vpack.c.b16 %v1704, %v1694
    %v2825 = vpack.c.b16 %v1705, %v1695
    %v2826 = vpack.c.b16 %v1706, %v1696
    %v2827 = vpack.c.b16 %v1707, %v1697
    %v2828 = vpack.c.b16 %v1708, %v1698
    %v2829 = vpack.c.b16 %v1709, %v1699
    %v2830 = vpack.c.b16 %v1720, %v1710
    %v2831 = vpack.c.b16 %v1721, %v1711
    %v2832 = vpack.c.b16 %v1722, %v1712
    %v2833 = vpack.c.b16 %v1723, %v1713
    %v2834 = vpack.c.b16 %v1724, %v1714
    %v2835 = vpack.c.b16 %v1725, %v1715
    %v2836 = vpack.c.b16 %v1726, %v1716
    %v2837 = vpack.c.b16 %v1727, %v1717
    %v2838 = vpack.c.b16 %v1728, %v1718
    %v2839 = vpack.c.b16 %v1729, %v1719
    %v2840 = vpack.c.b16 %v1740, %v1730
    %v2841 = vpack.c.b16 %v1741, %v1731
    %v2842 = vpack.c.b16 %v1742, %v1732
    %v2843 = vpack.c.b16 %v1743, %v1733
    %v2844 = vpack.c.b16 %v1744, %v1734
    %v2845 = vpack.c.b16 %v1745, %v1735
    %v2846 = vpack.c.b16 %v1746, %v1736
    %v2847 = vpack.c.b16 %v1747, %v1737
    %v2848 = vpack.c.b16 %v1748, %v1738
    %v2849 = vpack.c.b16 %v1749, %v1739
    %v2850 = vpack.c.b16 %v1760, %v1750
    %v2851 = vpack.c.b16 %v1761, %v1751
    %v2852 = vpack.c.b16 %v1762, %v1752
    %v2853 = vpack.c.b16 %v1763, %v1753
    %v2854 = vpack.c.b16 %v1764, %v1754
    %v2855 = vpack.c.b16 %v1765, %v1755
    %v2856 = vpack.c.b16 %v1766, %v1756
    %v2857 = vpack.c.b16 %v1767, %v1757
    %v2858 = vpack.c.b16 %v1768, %v1758
    %v2859 = vpack.c.b16 %v1769, %v1759
    %v2860 = vpack.c.b16 %v1780, %v1770
    %v2861 = vpack.c.b16 %v1781, %v1771
    %v2862 = vpack.c.b16 %v1782, %v1772
    %v2863 = vpack.c.b16 %v1783, %v1773
    %v2864 = vpack.c.b16 %v1784, %v1774
    %v2865 = vpack.c.b16 %v1785, %v1775
    %v2866 = vpack.c.b16 %v1786, %v1776
    %v2867 = vpack.c.b16 %v1787, %v1777
    %v2868 = vpack.c.b16 %v1788, %v1778
    %v2869 = vpack.c.b16 %v1789, %v1779
    %v2870 = vpack.c.b16 %v1800, %v1790
    %v2871 = vpack.c.b16 %v1801, %v1791
    %v2872 = vpack.c.b16 %v1802, %v1792
    %v2873 = vpack.c.b16 %v1803, %v1793
    %v2874 = vpack.c.b16 %v1804, %v1794
    %v2875 = vpack.c.b16 %v1805, %v1795
    %v2876 = vpack.c.b16 %v1806, %v1796
    %v2877 = vpack.c.b16 %v1807, %v1797
    %v2878 = vpack.c.b16 %v1808, %v1798
    %v2879 = vpack.c.b16 %v1809, %v1799
    %v2880 = vpack.c.b16 %v1820, %v1810
    %v2881 = vpack.c.b16 %v1821, %v1811
    %v2882 = vpack.c.b16 %v1822, %v1812
    %v2883 = vpack.c.b16 %v1823, %v1813
    %v2884 = vpack.c.b16 %v1824, %v1814
    %v2885 = vpack.c.b16 %v1825, %v1815
    %v2886 = vpack.c.b16 %v1826, %v1816
    %v2887 = vpack.c.b16 %v1827, %v1817
    %v2888 = vpack.c.b16 %v1828, %v1818
    %v2889 = vpack.c.b16 %v1829, %v1819
    %v2890 = vpack.c.b16 %v1840, %v1830
    %v2891 = vpack.c.b16 %v1841, %v1831
    %v2892 = vpack.c.b16 %v1842, %v1832
    %v2893 = vpack.c.b16 %v1843, %v1833
    %v2894 = vpack.c.b16 %v1844, %v1834
    %v2895 = vpack.c.b16 %v1845, %v1835
    %v2896 = vpack.c.b16 %v1846, %v1836
    %v2897 = vpack.c.b16 %v1847, %v1837
    %v2898 = vpack.c.b16 %v1848, %v1838
    %v2899 = vpack.c.b16 %v1849, %v1839
    %v2900 = vpack.c.b16 %v1860, %v1850
    %v2901 = vpack.c.b16 %v1861, %v1851
    %v2902 = vpack.c.b16 %v1862, %v1852
    %v2903 = vpack.c.b16 %v1863, %v1853
    %v2904 = vpack.c.b16 %v1864, %v1854
    %v2905 = vpack.c.b16 %v1865, %v1855
    %v2906 = vpack.c.b16 %v1866, %v1856
    %v2907 = vpack.c.b16 %v1867, %v1857
    %v2908 = vpack.c.b16 %v1868, %v1858
    %v2909 = vpack.c.b16 %v1869, %v1859
    %v2910 = vpack.c.b16 %v1880, %v1870
    %v2911 = vpack.c.b16 %v1881, %v1871
    %v2912 = vpack.c.b16 %v1882, %v1872
    %v2913 = vpack.c.b16 %v1883, %v1873
    %v2914 = vpack.c.b16 %v1884, %v1874
    %v2915 = vpack.c.b16 %v1885, %v1875
    %v2916 = vpack.c.b16 %v1886, %v1876
    %v2917 = vpack.c.b16 %v1887, %v1877
    %v2918 = vpack.c.b16 %v1888, %v1878
    %v2919 = vpack.c.b16 %v1889, %v1879
    %v2920 = vpack.c.b16 %v1900, %v1890
    %v2921 = vpack.c.b16 %v1901, %v1891
    %v2922 = vpack.c.b16 %v1902, %v1892
    %v2923 = vpack.c.b16 %v1903, %v1893
    %v2924 = vpack.c.b16 %v1904, %v1894
    %v2925 = vpack.c.b16 %v1905, %v1895
    %v2926 = vpack.c.b16 %v1906, %v1896
    %v2927 = vpack.c.b16 %v1907, %v1897
    %v2928 = vpack.c.b16 %v1908, %v1898
    %v2929 = vpack.c.b16 %v1909, %v1899
    %v2930 = vpack.c.b16 %v1920, %v1910
    %v2931 = vpack.c.b16 %v1921, %v1911
    %v2932 = vpack.c.b16 %v1922, %v1912
    %v2933 = vpack.c.b16 %v1923, %v1913
    %v2934 = vpack.c.b16 %v1924, %v1914
    %v2935 = vpack.c.b16 %v1925, %v1915
    %v2936 = vpack.c.b16 %v1926, %v1916
    %v2937 = vpack.c.b16 %v1927, %v1917
    %v2938 = vpack.c.b16 %v1928, %v1918
    %v2939 = vpack.c.b16 %v1929, %v1919
    %v2940 = vpack.c.b16 %v1940, %v1930
    %v2941 = vpack.c.b16 %v1941, %v1931
    %v2942 = vpack.c.b16 %v1942, %v1932
    %v2943 = vpack.c.b16 %v1943, %v1933
    %v2944 = vpack.c.b16 %v1944, %v1934
    %v2945 = vpack.c.b16 %v1945, %v1935
    %v2946 = vpack.c.b16 %v1946, %v1936
    %v2947 = vpack.c.b16 %v1947, %v1937
    %v2948 = vpack.c.b16 %v1948, %v1938
    %v2949 = vpack.c.b16 %v1949, %v1939
    %v2950 = vpack.c.b16 %v1960, %v1950
    %v2951 = vpack.c.b16 %v1961, %v1951
    %v2952 = vpack.c.b16 %v1962, %v1952
    %v2953 = vpack.c.b16 %v1963, %v1953
    %v2954 = vpack.c.b16 %v1964, %v1954
    %v2955 = vpack.c.b16 %v1965, %v1955
    %v2956 = vpack.c.b16 %v1966, %v1956
    %v2957 = vpack.c.b16 %v1967, %v1957
    %v2958 = vpack.c.b16 %v1968, %v1958
    %v2959 = vpack.c.b16 %v1969, %v1959
    %v2960 = vpack.c.b16 %v1980, %v1970
    %v2961 = vpack.c.b16 %v1981, %v1971
    %v2962 = vpack.c.b16 %v1982, %v1972
    %v2963 = vpack.c.b16 %v1983, %v1973
    %v2964 = vpack.c.b16 %v1984, %v1974
    %v2965 = vpack.c.b16 %v1985, %v1975
    %v2966 = vpack.c.b16 %v1986, %v1976
    %v2967 = vpack.c.b16 %v1987, %v1977
    %v2968 = vpack.c.b16 %v1988, %v1978
    %v2969 = vpack.c.b16 %v1989, %v1979
    %v2970 = vpack.c.b16 %v2000, %v1990
    %v2971 = vpack.c.b16 %v2001, %v1991
    %v2972 = vpack.c.b16 %v2002, %v1992
    %v2973 = vpack.c.b16 %v2003, %v1993
    %v2974 = vpack.c.b16 %v2004, %v1994
    %v2975 = vpack.c.b16 %v2005, %v1995
    %v2976 = vpack.c.b16 %v2006, %v1996
    %v2977 = vpack.c.b16 %v2007, %v1997
    %v2978 = vpack.c.b16 %v2008, %v1998
    %v2979 = vpack.c.b16 %v2009, %v1999
    %v2980 = vpack.c.b16 %v2020, %v2010
    %v2981 = vpack.c.b16 %v2021, %v2011
    %v2982 = vpack.c.b16 %v2022, %v2012
    %v2983 = vpack.c.b16 %v2023, %v2013
    %v2984 = vpack.c.b16 %v2024, %v2014
    %v2985 = vpack.c.b16 %v2025, %v2015
    %v2986 = vpack.c.b16 %v2026, %v2016
    %v2987 = vpack.c.b16 %v2027, %v2017
    %v2988 = vpack.c.b16 %v2028, %v2018
    %v2989 = vpack.c.b16 %v2029, %v2019
    %v2990 = vpack.c.b16 %v2040, %v2030
    %v2991 = vpack.c.b16 %v2041, %v2031
    %v2992 = vpack.c.b16 %v2042, %v2032
    %v2993 = vpack.c.b16 %v2043, %v2033
    %v2994 = vpack.c.b16 %v2044, %v2034
    %v2995 = vpack.c.b16 %v2045, %v2035
    %v2996 = vpack.c.b16 %v2046, %v2036
    %v2997 = vpack.c.b16 %v2047, %v2037
    %v2998 = vpack.c.b16 %v2048, %v2038
    %v2999 = vpack.c.b16 %v2049, %v2039
    %v3000 = vpack.c.b16 %v2060, %v2050
    %v3001 = vpack.c.b16 %v2061, %v2051
    %v3002 = vpack.c.b16 %v2062, %v2052
    %v3003 = vpack.c.b16 %v2063, %v2053
    %v3004 = vpack.c.b16 %v2064, %v2054
    %v3005 = vpack.c.b16 %v2065, %v2055
    %v3006 = vpack.c.b16 %v2066, %v2056
    %v3007 = vpack.c.b16 %v2067, %v2057
    %v3008 = vpack.c.b16 %v2068, %v2058
    %v3009 = vpack.c.b16 %v2069, %v2059
    %v3010 = vpack.c.b16 %v2080, %v2070
    %v3011 = vpack.c.b16 %v2081, %v2071
    %v3012 = vpack.c.b16 %v2082, %v2072
    %v3013 = vpack.c.b16 %v2083, %v2073
    %v3014 = vpack.c.b16 %v2084, %v2074
    %v3015 = vpack.c.b16 %v2085, %v2075
    %v3016 = vpack.c.b16 %v2086, %v2076
    %v3017 = vpack.c.b16 %v2087, %v2077
    %v3018 = vpack.c.b16 %v2088, %v2078
    %v3019 = vpack.c.b16 %v2089, %v2079
    %v3020 = vpack.c.b16 %v2100, %v2090
    %v3021 = vpack.c.b16 %v2101, %v2091
    %v3022 = vpack.c.b16 %v2102, %v2092
    %v3023 = vpack.c.b16 %v2103, %v2093
    %v3024 = vpack.c.b16 %v2104, %v2094
    %v3025 = vpack.c.b16 %v2105, %v2095
    %v3026 = vpack.c.b16 %v2106, %v2096
    %v3027 = vpack.c.b16 %v2107, %v2097
    %v3028 = vpack.c.b16 %v2108, %v2098
    %v3029 = vpack.c.b16 %v2109, %v2099
    %v3030 = vpack.c.b16 %v2120, %v2110
    %v3031 = vpack.c.b16 %v2121, %v2111
    %v3032 = vpack.c.b16 %v2122, %v2112
    %v3033 = vpack.c.b16 %v2123, %v2113
    %v3034 = vpack.c.b16 %v2124, %v2114
    %v3035 = vpack.c.b16 %v2125, %v2115
    %v3036 = vpack.c.b16 %v2126, %v2116
    %v3037 = vpack.c.b16 %v2127, %v2117
    %v3038 = vpack.c.b16 %v2128, %v2118
    %v3039 = vpack.c.b16 %v2129, %v2119
    %v3040 = vpack.c.b16 %v2140, %v2130
    %v3041 = vpack.c.b16 %v2141, %v2131
    %v3042 = vpack.c.b16 %v2142, %v2132
    %v3043 = vpack.c.b16 %v2143, %v2133
    %v3044 = vpack.c.b16 %v2144, %v2134
    %v3045 = vpack.c.b16 %v2145, %v2135
    %v3046 = vpack.c.b16 %v2146, %v2136
    %v3047 = vpack.c.b16 %v2147, %v2137
    %v3048 = vpack.c.b16 %v2148, %v2138
    %v3049 = vpack.c.b16 %v2149, %v2139
    %v3050 = vpack.c.b16 %v2160, %v2150
    %v3051 = vpack.c.b16 %v2161, %v2151
    %v3052 = vpack.c.b16 %v2162, %v2152
    %v3053 = vpack.c.b16 %v2163, %v2153
    %v3054 = vpack.c.b16 %v2164, %v2154
    %v3055 = vpack.c.b16 %v2165, %v2155
    %v3056 = vpack.c.b16 %v2166, %v2156
    %v3057 = vpack.c.b16 %v2167, %v2157
    %v3058 = vpack.c.b16 %v2168, %v2158
    %v3059 = vpack.c.b16 %v2169, %v2159
    %v3060 = vpack.c.b16 %v2180, %v2170
    %v3061 = vpack.c.b16 %v2181, %v2171
    %v3062 = vpack.c.b16 %v2182, %v2172
    %v3063 = vpack.c.b16 %v2183, %v2173
    %v3064 = vpack.c.b16 %v2184, %v2174
    %v3065 = vpack.c.b16 %v2185, %v2175
    %v3066 = vpack.c.b16 %v2186, %v2176
    %v3067 = vpack.c.b16 %v2187, %v2177
    %v3068 = vpack.c.b16 %v2188, %v2178
    %v3069 = vpack.c.b16 %v2189, %v2179
    %v3070 = vpack.c.b16 %v2200, %v2190
    %v3071 = vpack.c.b16 %v2201, %v2191
    %v3072 = vpack.c.b16 %v2202, %v2192
    %v3073 = vpack.c.b16 %v2203, %v2193
    %v3074 = vpack.c.b16 %v2204, %v2194
    %v3075 = vpack.c.b16 %v2205, %v2195
    %v3076 = vpack.c.b16 %v2206, %v2196
    %v3077 = vpack.c.b16 %v2207, %v2197
    %v3078 = vpack.c.b16 %v2208, %v2198
    %v3079 = vpack.c.b16 %v2209, %v2199
    %v3080 = vpack.c.b16 %v2220, %v2210
    %v3081 = vpack.c.b16 %v2221, %v2211
    %v3082 = vpack.c.b16 %v2222, %v2212
    %v3083 = vpack.c.b16 %v2223, %v2213
    %v3084 = vpack.c.b16 %v2224, %v2214
    %v3085 = vpack.c.b16 %v2225, %v2215
    %v3086 = vpack.c.b16 %v2226, %v2216
    %v3087 = vpack.c.b16 %v2227, %v2217
    %v3088 = vpack.c.b16 %v2228, %v2218
    %v3089 = vpack.c.b16 %v2229, %v2219
    %v3090 = vpack.c.b16 %v2240, %v2230
    %v3091 = vpack.c.b16 %v2241, %v2231
    %v3092 = vpack.c.b16 %v2242, %v2232
    %v3093 = vpack.c.b16 %v2243, %v2233
    %v3094 = vpack.c.b16 %v2244, %v2234
    %v3095 = vpack.c.b16 %v2245, %v2235
    %v3096 = vpack.c.b16 %v2246, %v2236
    %v3097 = vpack.c.b16 %v2247, %v2237
    %v3098 = vpack.c.b16 %v2248, %v2238
    %v3099 = vpack.c.b16 %v2249, %v2239
    %v3100 = vpack.c.b16 %v2260, %v2250
    %v3101 = vpack.c.b16 %v2261, %v2251
    %v3102 = vpack.c.b16 %v2262, %v2252
    %v3103 = vpack.c.b16 %v2263, %v2253
    %v3104 = vpack.c.b16 %v2264, %v2254
    %v3105 = vpack.c.b16 %v2265, %v2255
    %v3106 = vpack.c.b16 %v2266, %v2256
    %v3107 = vpack.c.b16 %v2267, %v2257
    %v3108 = vpack.c.b16 %v2268, %v2258
    %v3109 = vpack.c.b16 %v2269, %v2259
    %v3110 = vpack.c.b16 %v2280, %v2270
    %v3111 = vpack.c.b16 %v2281, %v2271
    %v3112 = vpack.c.b16 %v2282, %v2272
    %v3113 = vpack.c.b16 %v2283, %v2273
    %v3114 = vpack.c.b16 %v2284, %v2274
    %v3115 = vpack.c.b16 %v2285, %v2275
    %v3116 = vpack.c.b16 %v2286, %v2276
    %v3117 = vpack.c.b16 %v2287, %v2277
    %v3118 = vpack.c.b16 %v2288, %v2278
    %v3119 = vpack.c.b16 %v2289, %v2279
    %v3120 = vpack.c.b16 %v2300, %v2290
    %v3121 = vpack.c.b16 %v2301, %v2291
    %v3122 = vpack.c.b16 %v2302, %v2292
    %v3123 = vpack.c.b16 %v2303, %v2293
    %v3124 = vpack.c.b16 %v2304, %v2294
    %v3125 = vpack.c.b16 %v2305, %v2295
    %v3126 = vpack.c.b16 %v2306, %v2296
    %v3127 = vpack.c.b16 %v2307, %v2297
    %v3128 = vpack.c.b16 %v2308, %v2298
    %v3129 = vpack.c.b16 %v2309, %v2299
    %v3130 = vpack.c.b16 %v2320, %v2310
    %v3131 = vpack.c.b16 %v2321, %v2311
    %v3132 = vpack.c.b16 %v2322, %v2312
    %v3133 = vpack.c.b16 %v2323, %v2313
    %v3134 = vpack.c.b16 %v2324, %v2314
    %v3135 = vpack.c.b16 %v2325, %v2315
    %v3136 = vpack.c.b16 %v2326, %v2316
    %v3137 = vpack.c.b16 %v2327, %v2317
    %v3138 = vpack.c.b16 %v2328, %v2318
    %v3139 = vpack.c.b16 %v2329, %v2319
    %v3140 = vpack.c.b16 %v2340, %v2330
    %v3141 = vpack.c.b16 %v2341, %v2331
    %v3142 = vpack.c.b16 %v2342, %v2332
    %v3143 = vpack.c.b16 %v2343, %v2333
    %v3144 = vpack.c.b16 %v2344, %v2334
    %v3145 = vpack.c.b16 %v2345, %v2335
    %v3146 = vpack.c.b16 %v2346, %v2336
    %v3147 = vpack.c.b16 %v2347, %v2337
    %v3148 = vpack.c.b16 %v2348, %v2338
    %v3149 = vpack.c.b16 %v2349, %v2339
    %v3150 = vpack.c.b16 %v2360, %v2350
    %v3151 = vpack.c.b16 %v2361, %v2351
    %v3152 = vpack.c.b16 %v2362, %v2352
    %v3153 = vpack.c.b16 %v2363, %v2353
    %v3154 = vpack.c.b16 %v2364, %v2354
    %v3155 = vpack.c.b16 %v2365, %v2355
    %v3156 = vpack.c.b16 %v2366, %v2356
    %v3157 = vpack.c.b16 %v2367, %v2357
    %v3158 = vpack.c.b16 %v2368, %v2358
    %v3159 = vpack.c.b16 %v2369, %v2359
    %v3160 = vpack.c.b16 %v2380, %v2370
    %v3161 = vpack.c.b16 %v2381, %v2371
    %v3162 = vpack.c.b16 %v2382, %v2372
    %v3163 = vpack.c.b16 %v2383, %v2373
    %v3164 = vpack.c.b16 %v2384, %v2374
    %v3165 = vpack.c.b16 %v2385, %v2375
    %v3166 = vpack.c.b16 %v2386, %v2376
    %v3167 = vpack.c.b16 %v2387, %v2377
    %v3168 = vpack.c.b16 %v2388, %v2378
    %v3169 = vpack.c.b16 %v2389, %v2379
    %v3170 = vpack.c.b16 %v2400, %v2390
    %v3171 = vpack.c.b16 %v2401, %v2391
    %v3172 = vpack.c.b16 %v2402, %v2392
    %v3173 = vpack.c.b16 %v2403, %v2393
    %v3174 = vpack.c.b16 %v2404, %v2394
    %v3175 = vpack.c.b16 %v2405, %v2395
    %v3176 = vpack.c.b16 %v2406, %v2396
    %v3177 = vpack.c.b16 %v2407, %v2397
    %v3178 = vpack.c.b16 %v2408, %v2398
    %v3179 = vpack.c.b16 %v2409, %v2399
    %v3180 = vpack.c.b16 %v2420, %v2410
    %v3181 = vpack.c.b16 %v2421, %v2411
    %v3182 = vpack.c.b16 %v2422, %v2412
    %v3183 = vpack.c.b16 %v2423, %v2413
    %v3184 = vpack.c.b16 %v2424, %v2414
    %v3185 = vpack.c.b16 %v2425, %v2415
    %v3186 = vpack.c.b16 %v2426, %v2416
    %v3187 = vpack.c.b16 %v2427, %v2417
    %v3188 = vpack.c.b16 %v2428, %v2418
    %v3189 = vpack.c.b16 %v2429, %v2419
    %v3190 = vpack.c.b16 %v2440, %v2430
    %v3191 = vpack.c.b16 %v2441, %v2431
    %v3192 = vpack.c.b16 %v2442, %v2432
    %v3193 = vpack.c.b16 %v2443, %v2433
    %v3194 = vpack.c.b16 %v2444, %v2434
    %v3195 = vpack.c.b16 %v2445, %v2435
    %v3196 = vpack.c.b16 %v2446, %v2436
    %v3197 = vpack.c.b16 %v2447, %v2437
    %v3198 = vpack.c.b16 %v2448, %v2438
    %v3199 = vpack.c.b16 %v2449, %v2439
    %v3200 = vpack.c.b16 %v2460, %v2450
    %v3201 = vpack.c.b16 %v2461, %v2451
    %v3202 = vpack.c.b16 %v2462, %v2452
    %v3203 = vpack.c.b16 %v2463, %v2453
    %v3204 = vpack.c.b16 %v2464, %v2454
    %v3205 = vpack.c.b16 %v2465, %v2455
    %v3206 = vpack.c.b16 %v2466, %v2456
    %v3207 = vpack.c.b16 %v2467, %v2457
    %v3208 = vpack.c.b16 %v2468, %v2458
    %v3209 = vpack.c.b16 %v2469, %v2459
    %v3210 = vpack.c.b16 %v2480, %v2470
    %v3211 = vpack.c.b16 %v2481, %v2471
    %v3212 = vpack.c.b16 %v2482, %v2472
    %v3213 = vpack.c.b16 %v2483, %v2473
    %v3214 = vpack.c.b16 %v2484, %v2474
    %v3215 = vpack.c.b16 %v2485, %v2475
    %v3216 = vpack.c.b16 %v2486, %v2476
    %v3217 = vpack.c.b16 %v2487, %v2477
    %v3218 = vpack.c.b16 %v2488, %v2478
    %v3219 = vpack.c.b16 %v2489, %v2479
    %v3220 = vpack.c.b16 %v2500, %v2490
    %v3221 = vpack.c.b16 %v2501, %v2491
    %v3222 = vpack.c.b16 %v2502, %v2492
    %v3223 = vpack.c.b16 %v2503, %v2493
    %v3224 = vpack.c.b16 %v2504, %v2494
    %v3225 = vpack.c.b16 %v2505, %v2495
    %v3226 = vpack.c.b16 %v2506, %v2496
    %v3227 = vpack.c.b16 %v2507, %v2497
    %v3228 = vpack.c.b16 %v2508, %v2498
    %v3229 = vpack.c.b16 %v2509, %v2499
    %v3230 = vpack.c.b16 %v2520, %v2510
    %v3231 = vpack.c.b16 %v2521, %v2511
    %v3232 = vpack.c.b16 %v2522, %v2512
    %v3233 = vpack.c.b16 %v2523, %v2513
    %v3234 = vpack.c.b16 %v2524, %v2514
    %v3235 = vpack.c.b16 %v2525, %v2515
    %v3236 = vpack.c.b16 %v2526, %v2516
    %v3237 = vpack.c.b16 %v2527, %v2517
    %v3238 = vpack.c.b16 %v2528, %v2518
    %v3239 = vpack.c.b16 %v2529, %v2519
    %v3240 = vpack.c.b16 %v2540, %v2530
    %v3241 = vpack.c.b16 %v2541, %v2531
    %v3242 = vpack.c.b16 %v2542, %v2532
    %v3243 = vpack.c.b16 %v2543, %v2533
    %v3244 = vpack.c.b16 %v2544, %v2534
    %v3245 = vpack.c.b16 %v2545, %v2535
    %v3246 = vpack.c.b16 %v2546, %v2536
    %v3247 = vpack.c.b16 %v2547, %v2537
    %v3248 = vpack.c.b16 %v2548, %v2538
    %v3249 = vpack.c.b16 %v2549, %v2539
    %v3250 = vpack.c.b16 %v2560, %v2550
    %v3251 = vpack.c.b16 %v2561, %v2551
    %v3252 = vpack.c.b16 %v2562, %v2552
    %v3253 = vpack.c.b16 %v2563, %v2553
    %v3254 = vpack.c.b16 %v2564, %v2554
    %v3255 = vpack.c.b16 %v2565, %v2555
    %v3256 = vpack.c.b16 %v2566, %v2556
    %v3257 = vpack.c.b16 %v2567, %v2557
    %v3258 = vpack.c.b16 %v2568, %v2558
    %v3259 = vpack.c.b16 %v2569, %v2559
    %v3260 = vpack.c.b16 %v2580, %v2570
    %v3261 = vpack.c.b16 %v2581, %v2571
    %v3262 = vpack.c.b16 %v2582, %v2572
    %v3263 = vpack.c.b16 %v2583, %v2573
    %v3264 = vpack.c.b16 %v2584, %v2574
    %v3265 = vpack.c.b16 %v2585, %v2575
    %v3266 = vpack.c.b16 %v2586, %v2576
    %v3267 = vpack.c.b16 %v2587, %v2577
    %v3268 = vpack.c.b16 %v2588, %v2578
    %v3269 = vpack.c.b16 %v2589, %v2579
    %v3270 = vpack.c.b16 %v2600, %v2590
    %v3271 = vpack.c.b16 %v2601, %v2591
    %v3272 = vpack.c.b16 %v2602, %v2592
    %v3273 = vpack.c.b16 %v2603, %v2593
    %v3274 = vpack.c.b16 %v2604, %v2594
    %v3275 = vpack.c.b16 %v2605, %v2595
    %v3276 = vpack.c.b16 %v2606, %v2596
    %v3277 = vpack.c.b16 %v2607, %v2597
    %v3278 = vpack.c.b16 %v2608, %v2598
    %v3279 = vpack.c.b16 %v2609, %v2599
    %v3280 = vpack.c.b16 %v2620, %v2610
    %v3281 = vpack.c.b16 %v2621, %v2611
    %v3282 = vpack.c.b16 %v2622, %v2612
    %v3283 = vpack.c.b16 %v2623, %v2613
    %v3284 = vpack.c.b16 %v2624, %v2614
    %v3285 = vpack.c.b16 %v2625, %v2615
    %v3286 = vpack.c.b16 %v2626, %v2616
    %v3287 = vpack.c.b16 %v2627, %v2617
    %v3288 = vpack.c.b16 %v2628, %v2618
    %v3289 = vpack.c.b16 %v2629, %v2619
    %v3290 = vpack.c.b16 %v2640, %v2630
    %v3291 = vpack.c.b16 %v2641, %v2631
    %v3292 = vpack.c.b16 %v2642, %v2632
    %v3293 = vpack.c.b16 %v2643, %v2633
    %v3294 = vpack.c.b16 %v2644, %v2634
    %v3295 = vpack.c.b16 %v2645, %v2635
    %v3296 = vpack.c.b16 %v2646, %v2636
    %v3297 = vpack.c.b16 %v2647, %v2637
    %v3298 = vpack.c.b16 %v2648, %v2638
    %v3299 = vpack.c.b16 %v2649, %v2639
    %v3300 = vpack.c.b16 %v2660, %v2650
    %v3301 = vpack.c.b16 %v2661, %v2651
    %v3302 = vpack.c.b16 %v2662, %v2652
    %v3303 = vpack.c.b16 %v2663, %v2653
    %v3304 = vpack.c.b16 %v2664, %v2654
    %v3305 = vpack.c.b16 %v2665, %v2655
    %v3306 = vpack.c.b16 %v2666, %v2656
    %v3307 = vpack.c.b16 %v2667, %v2657
    %v3308 = vpack.c.b16 %v2668, %v2658
    %v3309 = vpack.c.b16 %v2669, %v2659
    %3950 = vmatpush.bf16.msra.mxu0 %v2740
    %3951 = vmatpush.bf16.msra.mxu0 %v2730
    %3952 = vmatpush.bf16.msra.mxu0 %v2720
    %3953 = vmatpush.bf16.msra.mxu0 %v2710
    %3954 = vmatpush.bf16.msra.mxu0 %v2700
    %3955 = vmatpush.bf16.msra.mxu0 %v2690
    %3956 = vmatpush.bf16.msra.mxu0 %v2680
    %3957 = vmatpush.bf16.msra.mxu0 %v2670
    %3958 = vmatmul.bf16.gmra.mxu0 %v734
    %v3959 = vpop.f32.mrf.mxu0
    %v3960 = vadd.f32 0.0, %v3959
    %v3961 = vpop.f32.mrf.mxu0
    %v3962 = vadd.f32 0.0, %v3961
    %3963 = vdwg.mxu0
    %3964 = vmatpush.bf16.msra.mxu0 %v2820
    %3965 = vmatpush.bf16.msra.mxu0 %v2810
    %3966 = vmatpush.bf16.msra.mxu0 %v2800
    %3967 = vmatpush.bf16.msra.mxu0 %v2790
    %3968 = vmatpush.bf16.msra.mxu0 %v2780
    %3969 = vmatpush.bf16.msra.mxu0 %v2770
    %3970 = vmatpush.bf16.msra.mxu0 %v2760
    %3971 = vmatpush.bf16.msra.mxu0 %v2750
    %3972 = vmatmul.bf16.gmra.mxu0 %v735
    %v3973 = vpop.f32.mrf.mxu0
    %v3974 = vadd.f32 %v3960, %v3973
    %v3975 = vpop.f32.mrf.mxu0
    %v3976 = vadd.f32 %v3962, %v3975
    %3977 = vdwg.mxu0
    %3978 = vmatpush.bf16.msra.mxu0 %v2900
    %3979 = vmatpush.bf16.msra.mxu0 %v2890
    %3980 = vmatpush.bf16.msra.mxu0 %v2880
    %3981 = vmatpush.bf16.msra.mxu0 %v2870
    %3982 = vmatpush.bf16.msra.mxu0 %v2860
    %3983 = vmatpush.bf16.msra.mxu0 %v2850
    %3984 = vmatpush.bf16.msra.mxu0 %v2840
    %3985 = vmatpush.bf16.msra.mxu0 %v2830
    %3986 = vmatmul.bf16.gmra.mxu0 %v736
    %v3987 = vpop.f32.mrf.mxu0
    %v3988 = vadd.f32 %v3974, %v3987
    %v3989 = vpop.f32.mrf.mxu0
    %v3990 = vadd.f32 %v3976, %v3989
    %3991 = vdwg.mxu0
    %3992 = vmatpush.bf16.msra.mxu0 %v2980
    %3993 = vmatpush.bf16.msra.mxu0 %v2970
    %3994 = vmatpush.bf16.msra.mxu0 %v2960
    %3995 = vmatpush.bf16.msra.mxu0 %v2950
    %3996 = vmatpush.bf16.msra.mxu0 %v2940
    %3997 = vmatpush.bf16.msra.mxu0 %v2930
    %3998 = vmatpush.bf16.msra.mxu0 %v2920
    %3999 = vmatpush.bf16.msra.mxu0 %v2910
    %4000 = vmatmul.bf16.gmra.mxu0 %v737
    %v4001 = vpop.f32.mrf.mxu0
    %v4002 = vadd.f32 %v3988, %v4001
    %v4003 = vpop.f32.mrf.mxu0
    %v4004 = vadd.f32 %v3990, %v4003
    %4005 = vdwg.mxu0
    %4006 = vmatpush.bf16.msra.mxu0 %v3060
    %4007 = vmatpush.bf16.msra.mxu0 %v3050
    %4008 = vmatpush.bf16.msra.mxu0 %v3040
    %4009 = vmatpush.bf16.msra.mxu0 %v3030
    %4010 = vmatpush.bf16.msra.mxu0 %v3020
    %4011 = vmatpush.bf16.msra.mxu0 %v3010
    %4012 = vmatpush.bf16.msra.mxu0 %v3000
    %4013 = vmatpush.bf16.msra.mxu0 %v2990
    %4014 = vmatmul.bf16.gmra.mxu0 %v738
    %v4015 = vpop.f32.mrf.mxu0
    %v4016 = vadd.f32 %v4002, %v4015
    %v4017 = vpop.f32.mrf.mxu0
    %v4018 = vadd.f32 %v4004, %v4017
    %4019 = vdwg.mxu0
    %4020 = vmatpush.bf16.msra.mxu0 %v3140
    %4021 = vmatpush.bf16.msra.mxu0 %v3130
    %4022 = vmatpush.bf16.msra.mxu0 %v3120
    %4023 = vmatpush.bf16.msra.mxu0 %v3110
    %4024 = vmatpush.bf16.msra.mxu0 %v3100
    %4025 = vmatpush.bf16.msra.mxu0 %v3090
    %4026 = vmatpush.bf16.msra.mxu0 %v3080
    %4027 = vmatpush.bf16.msra.mxu0 %v3070
    %4028 = vmatmul.bf16.gmra.mxu0 %v739
    %v4029 = vpop.f32.mrf.mxu0
    %v4030 = vadd.f32 %v4016, %v4029
    %v4031 = vpop.f32.mrf.mxu0
    %v4032 = vadd.f32 %v4018, %v4031
    %4033 = vdwg.mxu0
    %4034 = vmatpush.bf16.msra.mxu0 %v3220
    %4035 = vmatpush.bf16.msra.mxu0 %v3210
    %4036 = vmatpush.bf16.msra.mxu0 %v3200
    %4037 = vmatpush.bf16.msra.mxu0 %v3190
    %4038 = vmatpush.bf16.msra.mxu0 %v3180
    %4039 = vmatpush.bf16.msra.mxu0 %v3170
    %4040 = vmatpush.bf16.msra.mxu0 %v3160
    %4041 = vmatpush.bf16.msra.mxu0 %v3150
    %4042 = vmatmul.bf16.gmra.mxu0 %v740
    %v4043 = vpop.f32.mrf.mxu0
    %v4044 = vadd.f32 %v4030, %v4043
    %v4045 = vpop.f32.mrf.mxu0
    %v4046 = vadd.f32 %v4032, %v4045
    %4047 = vdwg.mxu0
    %4048 = vmatpush.bf16.msra.mxu0 %v3300
    %4049 = vmatpush.bf16.msra.mxu0 %v3290
    %4050 = vmatpush.bf16.msra.mxu0 %v3280
    %4051 = vmatpush.bf16.msra.mxu0 %v3270
    %4052 = vmatpush.bf16.msra.mxu0 %v3260
    %4053 = vmatpush.bf16.msra.mxu0 %v3250
    %4054 = vmatpush.bf16.msra.mxu0 %v3240
    %4055 = vmatpush.bf16.msra.mxu0 %v3230
    %4056 = vmatmul.bf16.gmra.mxu0 %v741
    %v4057 = vpop.f32.mrf.mxu0
    %v4058 = vadd.f32 %v4044, %v4057
    %v4059 = vpop.f32.mrf.mxu0
    %v4060 = vadd.f32 %v4046, %v4059
    %4061 = vdwg.mxu0
    %4062 = vmatpush.bf16.msra.mxu0 %v2741
    %4063 = vmatpush.bf16.msra.mxu0 %v2731
    %4064 = vmatpush.bf16.msra.mxu0 %v2721
    %4065 = vmatpush.bf16.msra.mxu0 %v2711
    %4066 = vmatpush.bf16.msra.mxu0 %v2701
    %4067 = vmatpush.bf16.msra.mxu0 %v2691
    %4068 = vmatpush.bf16.msra.mxu0 %v2681
    %4069 = vmatpush.bf16.msra.mxu0 %v2671
    %4070 = vmatmul.bf16.gmra.mxu0 %v734
    %v4071 = vpop.f32.mrf.mxu0
    %v4072 = vadd.f32 0.0, %v4071
    %v4073 = vpop.f32.mrf.mxu0
    %v4074 = vadd.f32 0.0, %v4073
    %4075 = vdwg.mxu0
    %4076 = vmatpush.bf16.msra.mxu0 %v2821
    %4077 = vmatpush.bf16.msra.mxu0 %v2811
    %4078 = vmatpush.bf16.msra.mxu0 %v2801
    %4079 = vmatpush.bf16.msra.mxu0 %v2791
    %4080 = vmatpush.bf16.msra.mxu0 %v2781
    %4081 = vmatpush.bf16.msra.mxu0 %v2771
    %4082 = vmatpush.bf16.msra.mxu0 %v2761
    %4083 = vmatpush.bf16.msra.mxu0 %v2751
    %4084 = vmatmul.bf16.gmra.mxu0 %v735
    %v4085 = vpop.f32.mrf.mxu0
    %v4086 = vadd.f32 %v4072, %v4085
    %v4087 = vpop.f32.mrf.mxu0
    %v4088 = vadd.f32 %v4074, %v4087
    %4089 = vdwg.mxu0
    %4090 = vmatpush.bf16.msra.mxu0 %v2901
    %4091 = vmatpush.bf16.msra.mxu0 %v2891
    %4092 = vmatpush.bf16.msra.mxu0 %v2881
    %4093 = vmatpush.bf16.msra.mxu0 %v2871
    %4094 = vmatpush.bf16.msra.mxu0 %v2861
    %4095 = vmatpush.bf16.msra.mxu0 %v2851
    %4096 = vmatpush.bf16.msra.mxu0 %v2841
    %4097 = vmatpush.bf16.msra.mxu0 %v2831
    %4098 = vmatmul.bf16.gmra.mxu0 %v736
    %v4099 = vpop.f32.mrf.mxu0
    %v4100 = vadd.f32 %v4086, %v4099
    %v4101 = vpop.f32.mrf.mxu0
    %v4102 = vadd.f32 %v4088, %v4101
    %4103 = vdwg.mxu0
    %4104 = vmatpush.bf16.msra.mxu0 %v2981
    %4105 = vmatpush.bf16.msra.mxu0 %v2971
    %4106 = vmatpush.bf16.msra.mxu0 %v2961
    %4107 = vmatpush.bf16.msra.mxu0 %v2951
    %4108 = vmatpush.bf16.msra.mxu0 %v2941
    %4109 = vmatpush.bf16.msra.mxu0 %v2931
    %4110 = vmatpush.bf16.msra.mxu0 %v2921
    %4111 = vmatpush.bf16.msra.mxu0 %v2911
    %4112 = vmatmul.bf16.gmra.mxu0 %v737
    %v4113 = vpop.f32.mrf.mxu0
    %v4114 = vadd.f32 %v4100, %v4113
    %v4115 = vpop.f32.mrf.mxu0
    %v4116 = vadd.f32 %v4102, %v4115
    %4117 = vdwg.mxu0
    %4118 = vmatpush.bf16.msra.mxu0 %v3061
    %4119 = vmatpush.bf16.msra.mxu0 %v3051
    %4120 = vmatpush.bf16.msra.mxu0 %v3041
    %4121 = vmatpush.bf16.msra.mxu0 %v3031
    %4122 = vmatpush.bf16.msra.mxu0 %v3021
    %4123 = vmatpush.bf16.msra.mxu0 %v3011
    %4124 = vmatpush.bf16.msra.mxu0 %v3001
    %4125 = vmatpush.bf16.msra.mxu0 %v2991
    %4126 = vmatmul.bf16.gmra.mxu0 %v738
    %v4127 = vpop.f32.mrf.mxu0
    %v4128 = vadd.f32 %v4114, %v4127
    %v4129 = vpop.f32.mrf.mxu0
    %v4130 = vadd.f32 %v4116, %v4129
    %4131 = vdwg.mxu0
    %4132 = vmatpush.bf16.msra.mxu0 %v3141
    %4133 = vmatpush.bf16.msra.mxu0 %v3131
    %4134 = vmatpush.bf16.msra.mxu0 %v3121
    %4135 = vmatpush.bf16.msra.mxu0 %v3111
    %4136 = vmatpush.bf16.msra.mxu0 %v3101
    %4137 = vmatpush.bf16.msra.mxu0 %v3091
    %4138 = vmatpush.bf16.msra.mxu0 %v3081
    %4139 = vmatpush.bf16.msra.mxu0 %v3071
    %4140 = vmatmul.bf16.gmra.mxu0 %v739
    %v4141 = vpop.f32.mrf.mxu0
    %v4142 = vadd.f32 %v4128, %v4141
    %v4143 = vpop.f32.mrf.mxu0
    %v4144 = vadd.f32 %v4130, %v4143
    %4145 = vdwg.mxu0
    %4146 = vmatpush.bf16.msra.mxu0 %v3221
    %4147 = vmatpush.bf16.msra.mxu0 %v3211
    %4148 = vmatpush.bf16.msra.mxu0 %v3201
    %4149 = vmatpush.bf16.msra.mxu0 %v3191
    %4150 = vmatpush.bf16.msra.mxu0 %v3181
    %4151 = vmatpush.bf16.msra.mxu0 %v3171
    %4152 = vmatpush.bf16.msra.mxu0 %v3161
    %4153 = vmatpush.bf16.msra.mxu0 %v3151
    %4154 = vmatmul.bf16.gmra.mxu0 %v740
    %v4155 = vpop.f32.mrf.mxu0
    %v4156 = vadd.f32 %v4142, %v4155
    %v4157 = vpop.f32.mrf.mxu0
    %v4158 = vadd.f32 %v4144, %v4157
    %4159 = vdwg.mxu0
    %4160 = vmatpush.bf16.msra.mxu0 %v3301
    %4161 = vmatpush.bf16.msra.mxu0 %v3291
    %4162 = vmatpush.bf16.msra.mxu0 %v3281
    %4163 = vmatpush.bf16.msra.mxu0 %v3271
    %4164 = vmatpush.bf16.msra.mxu0 %v3261
    %4165 = vmatpush.bf16.msra.mxu0 %v3251
    %4166 = vmatpush.bf16.msra.mxu0 %v3241
    %4167 = vmatpush.bf16.msra.mxu0 %v3231
    %4168 = vmatmul.bf16.gmra.mxu0 %v741
    %v4169 = vpop.f32.mrf.mxu0
    %v4170 = vadd.f32 %v4156, %v4169
    %v4171 = vpop.f32.mrf.mxu0
    %v4172 = vadd.f32 %v4158, %v4171
    %4173 = vdwg.mxu0
    %4174 = vmatpush.bf16.msra.mxu0 %v2742
    %4175 = vmatpush.bf16.msra.mxu0 %v2732
    %4176 = vmatpush.bf16.msra.mxu0 %v2722
    %4177 = vmatpush.bf16.msra.mxu0 %v2712
    %4178 = vmatpush.bf16.msra.mxu0 %v2702
    %4179 = vmatpush.bf16.msra.mxu0 %v2692
    %4180 = vmatpush.bf16.msra.mxu0 %v2682
    %4181 = vmatpush.bf16.msra.mxu0 %v2672
    %4182 = vmatmul.bf16.gmra.mxu0 %v734
    %v4183 = vpop.f32.mrf.mxu0
    %v4184 = vadd.f32 0.0, %v4183
    %v4185 = vpop.f32.mrf.mxu0
    %v4186 = vadd.f32 0.0, %v4185
    %4187 = vdwg.mxu0
    %4188 = vmatpush.bf16.msra.mxu0 %v2822
    %4189 = vmatpush.bf16.msra.mxu0 %v2812
    %4190 = vmatpush.bf16.msra.mxu0 %v2802
    %4191 = vmatpush.bf16.msra.mxu0 %v2792
    %4192 = vmatpush.bf16.msra.mxu0 %v2782
    %4193 = vmatpush.bf16.msra.mxu0 %v2772
    %4194 = vmatpush.bf16.msra.mxu0 %v2762
    %4195 = vmatpush.bf16.msra.mxu0 %v2752
    %4196 = vmatmul.bf16.gmra.mxu0 %v735
    %v4197 = vpop.f32.mrf.mxu0
    %v4198 = vadd.f32 %v4184, %v4197
    %v4199 = vpop.f32.mrf.mxu0
    %v4200 = vadd.f32 %v4186, %v4199
    %4201 = vdwg.mxu0
    %4202 = vmatpush.bf16.msra.mxu0 %v2902
    %4203 = vmatpush.bf16.msra.mxu0 %v2892
    %4204 = vmatpush.bf16.msra.mxu0 %v2882
    %4205 = vmatpush.bf16.msra.mxu0 %v2872
    %4206 = vmatpush.bf16.msra.mxu0 %v2862
    %4207 = vmatpush.bf16.msra.mxu0 %v2852
    %4208 = vmatpush.bf16.msra.mxu0 %v2842
    %4209 = vmatpush.bf16.msra.mxu0 %v2832
    %4210 = vmatmul.bf16.gmra.mxu0 %v736
    %v4211 = vpop.f32.mrf.mxu0
    %v4212 = vadd.f32 %v4198, %v4211
    %v4213 = vpop.f32.mrf.mxu0
    %v4214 = vadd.f32 %v4200, %v4213
    %4215 = vdwg.mxu0
    %4216 = vmatpush.bf16.msra.mxu0 %v2982
    %4217 = vmatpush.bf16.msra.mxu0 %v2972
    %4218 = vmatpush.bf16.msra.mxu0 %v2962
    %4219 = vmatpush.bf16.msra.mxu0 %v2952
    %4220 = vmatpush.bf16.msra.mxu0 %v2942
    %4221 = vmatpush.bf16.msra.mxu0 %v2932
    %4222 = vmatpush.bf16.msra.mxu0 %v2922
    %4223 = vmatpush.bf16.msra.mxu0 %v2912
    %4224 = vmatmul.bf16.gmra.mxu0 %v737
    %v4225 = vpop.f32.mrf.mxu0
    %v4226 = vadd.f32 %v4212, %v4225
    %v4227 = vpop.f32.mrf.mxu0
    %v4228 = vadd.f32 %v4214, %v4227
    %4229 = vdwg.mxu0
    %4230 = vmatpush.bf16.msra.mxu0 %v3062
    %4231 = vmatpush.bf16.msra.mxu0 %v3052
    %4232 = vmatpush.bf16.msra.mxu0 %v3042
    %4233 = vmatpush.bf16.msra.mxu0 %v3032
    %4234 = vmatpush.bf16.msra.mxu0 %v3022
    %4235 = vmatpush.bf16.msra.mxu0 %v3012
    %4236 = vmatpush.bf16.msra.mxu0 %v3002
    %4237 = vmatpush.bf16.msra.mxu0 %v2992
    %4238 = vmatmul.bf16.gmra.mxu0 %v738
    %v4239 = vpop.f32.mrf.mxu0
    %v4240 = vadd.f32 %v4226, %v4239
    %v4241 = vpop.f32.mrf.mxu0
    %v4242 = vadd.f32 %v4228, %v4241
    %4243 = vdwg.mxu0
    %4244 = vmatpush.bf16.msra.mxu0 %v3142
    %4245 = vmatpush.bf16.msra.mxu0 %v3132
    %4246 = vmatpush.bf16.msra.mxu0 %v3122
    %4247 = vmatpush.bf16.msra.mxu0 %v3112
    %4248 = vmatpush.bf16.msra.mxu0 %v3102
    %4249 = vmatpush.bf16.msra.mxu0 %v3092
    %4250 = vmatpush.bf16.msra.mxu0 %v3082
    %4251 = vmatpush.bf16.msra.mxu0 %v3072
    %4252 = vmatmul.bf16.gmra.mxu0 %v739
    %v4253 = vpop.f32.mrf.mxu0
    %v4254 = vadd.f32 %v4240, %v4253
    %v4255 = vpop.f32.mrf.mxu0
    %v4256 = vadd.f32 %v4242, %v4255
    %4257 = vdwg.mxu0
    %4258 = vmatpush.bf16.msra.mxu0 %v3222
    %4259 = vmatpush.bf16.msra.mxu0 %v3212
    %4260 = vmatpush.bf16.msra.mxu0 %v3202
    %4261 = vmatpush.bf16.msra.mxu0 %v3192
    %4262 = vmatpush.bf16.msra.mxu0 %v3182
    %4263 = vmatpush.bf16.msra.mxu0 %v3172
    %4264 = vmatpush.bf16.msra.mxu0 %v3162
    %4265 = vmatpush.bf16.msra.mxu0 %v3152
    %4266 = vmatmul.bf16.gmra.mxu0 %v740
    %v4267 = vpop.f32.mrf.mxu0
    %v4268 = vadd.f32 %v4254, %v4267
    %v4269 = vpop.f32.mrf.mxu0
    %v4270 = vadd.f32 %v4256, %v4269
    %4271 = vdwg.mxu0
    %4272 = vmatpush.bf16.msra.mxu0 %v3302
    %4273 = vmatpush.bf16.msra.mxu0 %v3292
    %4274 = vmatpush.bf16.msra.mxu0 %v3282
    %4275 = vmatpush.bf16.msra.mxu0 %v3272
    %4276 = vmatpush.bf16.msra.mxu0 %v3262
    %4277 = vmatpush.bf16.msra.mxu0 %v3252
    %4278 = vmatpush.bf16.msra.mxu0 %v3242
    %4279 = vmatpush.bf16.msra.mxu0 %v3232
    %4280 = vmatmul.bf16.gmra.mxu0 %v741
    %v4281 = vpop.f32.mrf.mxu0
    %v4282 = vadd.f32 %v4268, %v4281
    %v4283 = vpop.f32.mrf.mxu0
    %v4284 = vadd.f32 %v4270, %v4283
    %4285 = vdwg.mxu0
    %4286 = vmatpush.bf16.msra.mxu0 %v2743
    %4287 = vmatpush.bf16.msra.mxu0 %v2733
    %4288 = vmatpush.bf16.msra.mxu0 %v2723
    %4289 = vmatpush.bf16.msra.mxu0 %v2713
    %4290 = vmatpush.bf16.msra.mxu0 %v2703
    %4291 = vmatpush.bf16.msra.mxu0 %v2693
    %4292 = vmatpush.bf16.msra.mxu0 %v2683
    %4293 = vmatpush.bf16.msra.mxu0 %v2673
    %4294 = vmatmul.bf16.gmra.mxu0 %v734
    %v4295 = vpop.f32.mrf.mxu0
    %v4296 = vadd.f32 0.0, %v4295
    %v4297 = vpop.f32.mrf.mxu0
    %v4298 = vadd.f32 0.0, %v4297
    %4299 = vdwg.mxu0
    %4300 = vmatpush.bf16.msra.mxu0 %v2823
    %4301 = vmatpush.bf16.msra.mxu0 %v2813
    %4302 = vmatpush.bf16.msra.mxu0 %v2803
    %4303 = vmatpush.bf16.msra.mxu0 %v2793
    %4304 = vmatpush.bf16.msra.mxu0 %v2783
    %4305 = vmatpush.bf16.msra.mxu0 %v2773
    %4306 = vmatpush.bf16.msra.mxu0 %v2763
    %4307 = vmatpush.bf16.msra.mxu0 %v2753
    %4308 = vmatmul.bf16.gmra.mxu0 %v735
    %v4309 = vpop.f32.mrf.mxu0
    %v4310 = vadd.f32 %v4296, %v4309
    %v4311 = vpop.f32.mrf.mxu0
    %v4312 = vadd.f32 %v4298, %v4311
    %4313 = vdwg.mxu0
    %4314 = vmatpush.bf16.msra.mxu0 %v2903
    %4315 = vmatpush.bf16.msra.mxu0 %v2893
    %4316 = vmatpush.bf16.msra.mxu0 %v2883
    %4317 = vmatpush.bf16.msra.mxu0 %v2873
    %4318 = vmatpush.bf16.msra.mxu0 %v2863
    %4319 = vmatpush.bf16.msra.mxu0 %v2853
    %4320 = vmatpush.bf16.msra.mxu0 %v2843
    %4321 = vmatpush.bf16.msra.mxu0 %v2833
    %4322 = vmatmul.bf16.gmra.mxu0 %v736
    %v4323 = vpop.f32.mrf.mxu0
    %v4324 = vadd.f32 %v4310, %v4323
    %v4325 = vpop.f32.mrf.mxu0
    %v4326 = vadd.f32 %v4312, %v4325
    %4327 = vdwg.mxu0
    %4328 = vmatpush.bf16.msra.mxu0 %v2983
    %4329 = vmatpush.bf16.msra.mxu0 %v2973
    %4330 = vmatpush.bf16.msra.mxu0 %v2963
    %4331 = vmatpush.bf16.msra.mxu0 %v2953
    %4332 = vmatpush.bf16.msra.mxu0 %v2943
    %4333 = vmatpush.bf16.msra.mxu0 %v2933
    %4334 = vmatpush.bf16.msra.mxu0 %v2923
    %4335 = vmatpush.bf16.msra.mxu0 %v2913
    %4336 = vmatmul.bf16.gmra.mxu0 %v737
    %v4337 = vpop.f32.mrf.mxu0
    %v4338 = vadd.f32 %v4324, %v4337
    %v4339 = vpop.f32.mrf.mxu0
    %v4340 = vadd.f32 %v4326, %v4339
    %4341 = vdwg.mxu0
    %4342 = vmatpush.bf16.msra.mxu0 %v3063
    %4343 = vmatpush.bf16.msra.mxu0 %v3053
    %4344 = vmatpush.bf16.msra.mxu0 %v3043
    %4345 = vmatpush.bf16.msra.mxu0 %v3033
    %4346 = vmatpush.bf16.msra.mxu0 %v3023
    %4347 = vmatpush.bf16.msra.mxu0 %v3013
    %4348 = vmatpush.bf16.msra.mxu0 %v3003
    %4349 = vmatpush.bf16.msra.mxu0 %v2993
    %4350 = vmatmul.bf16.gmra.mxu0 %v738
    %v4351 = vpop.f32.mrf.mxu0
    %v4352 = vadd.f32 %v4338, %v4351
    %v4353 = vpop.f32.mrf.mxu0
    %v4354 = vadd.f32 %v4340, %v4353
    %4355 = vdwg.mxu0
    %4356 = vmatpush.bf16.msra.mxu0 %v3143
    %4357 = vmatpush.bf16.msra.mxu0 %v3133
    %4358 = vmatpush.bf16.msra.mxu0 %v3123
    %4359 = vmatpush.bf16.msra.mxu0 %v3113
    %4360 = vmatpush.bf16.msra.mxu0 %v3103
    %4361 = vmatpush.bf16.msra.mxu0 %v3093
    %4362 = vmatpush.bf16.msra.mxu0 %v3083
    %4363 = vmatpush.bf16.msra.mxu0 %v3073
    %4364 = vmatmul.bf16.gmra.mxu0 %v739
    %v4365 = vpop.f32.mrf.mxu0
    %v4366 = vadd.f32 %v4352, %v4365
    %v4367 = vpop.f32.mrf.mxu0
    %v4368 = vadd.f32 %v4354, %v4367
    %4369 = vdwg.mxu0
    %4370 = vmatpush.bf16.msra.mxu0 %v3223
    %4371 = vmatpush.bf16.msra.mxu0 %v3213
    %4372 = vmatpush.bf16.msra.mxu0 %v3203
    %4373 = vmatpush.bf16.msra.mxu0 %v3193
    %4374 = vmatpush.bf16.msra.mxu0 %v3183
    %4375 = vmatpush.bf16.msra.mxu0 %v3173
    %4376 = vmatpush.bf16.msra.mxu0 %v3163
    %4377 = vmatpush.bf16.msra.mxu0 %v3153
    %4378 = vmatmul.bf16.gmra.mxu0 %v740
    %v4379 = vpop.f32.mrf.mxu0
    %v4380 = vadd.f32 %v4366, %v4379
    %v4381 = vpop.f32.mrf.mxu0
    %v4382 = vadd.f32 %v4368, %v4381
    %4383 = vdwg.mxu0
    %4384 = vmatpush.bf16.msra.mxu0 %v3303
    %4385 = vmatpush.bf16.msra.mxu0 %v3293
    %4386 = vmatpush.bf16.msra.mxu0 %v3283
    %4387 = vmatpush.bf16.msra.mxu0 %v3273
    %4388 = vmatpush.bf16.msra.mxu0 %v3263
    %4389 = vmatpush.bf16.msra.mxu0 %v3253
    %4390 = vmatpush.bf16.msra.mxu0 %v3243
    %4391 = vmatpush.bf16.msra.mxu0 %v3233
    %4392 = vmatmul.bf16.gmra.mxu0 %v741
    %v4393 = vpop.f32.mrf.mxu0
    %v4394 = vadd.f32 %v4380, %v4393
    %v4395 = vpop.f32.mrf.mxu0
    %v4396 = vadd.f32 %v4382, %v4395
    %4397 = vdwg.mxu0
    %4398 = vmatpush.bf16.msra.mxu0 %v2744
    %4399 = vmatpush.bf16.msra.mxu0 %v2734
    %4400 = vmatpush.bf16.msra.mxu0 %v2724
    %4401 = vmatpush.bf16.msra.mxu0 %v2714
    %4402 = vmatpush.bf16.msra.mxu0 %v2704
    %4403 = vmatpush.bf16.msra.mxu0 %v2694
    %4404 = vmatpush.bf16.msra.mxu0 %v2684
    %4405 = vmatpush.bf16.msra.mxu0 %v2674
    %4406 = vmatmul.bf16.gmra.mxu0 %v734
    %v4407 = vpop.f32.mrf.mxu0
    %v4408 = vadd.f32 0.0, %v4407
    %v4409 = vpop.f32.mrf.mxu0
    %v4410 = vadd.f32 0.0, %v4409
    %4411 = vdwg.mxu0
    %4412 = vmatpush.bf16.msra.mxu0 %v2824
    %4413 = vmatpush.bf16.msra.mxu0 %v2814
    %4414 = vmatpush.bf16.msra.mxu0 %v2804
    %4415 = vmatpush.bf16.msra.mxu0 %v2794
    %4416 = vmatpush.bf16.msra.mxu0 %v2784
    %4417 = vmatpush.bf16.msra.mxu0 %v2774
    %4418 = vmatpush.bf16.msra.mxu0 %v2764
    %4419 = vmatpush.bf16.msra.mxu0 %v2754
    %4420 = vmatmul.bf16.gmra.mxu0 %v735
    %v4421 = vpop.f32.mrf.mxu0
    %v4422 = vadd.f32 %v4408, %v4421
    %v4423 = vpop.f32.mrf.mxu0
    %v4424 = vadd.f32 %v4410, %v4423
    %4425 = vdwg.mxu0
    %4426 = vmatpush.bf16.msra.mxu0 %v2904
    %4427 = vmatpush.bf16.msra.mxu0 %v2894
    %4428 = vmatpush.bf16.msra.mxu0 %v2884
    %4429 = vmatpush.bf16.msra.mxu0 %v2874
    %4430 = vmatpush.bf16.msra.mxu0 %v2864
    %4431 = vmatpush.bf16.msra.mxu0 %v2854
    %4432 = vmatpush.bf16.msra.mxu0 %v2844
    %4433 = vmatpush.bf16.msra.mxu0 %v2834
    %4434 = vmatmul.bf16.gmra.mxu0 %v736
    %v4435 = vpop.f32.mrf.mxu0
    %v4436 = vadd.f32 %v4422, %v4435
    %v4437 = vpop.f32.mrf.mxu0
    %v4438 = vadd.f32 %v4424, %v4437
    %4439 = vdwg.mxu0
    %4440 = vmatpush.bf16.msra.mxu0 %v2984
    %4441 = vmatpush.bf16.msra.mxu0 %v2974
    %4442 = vmatpush.bf16.msra.mxu0 %v2964
    %4443 = vmatpush.bf16.msra.mxu0 %v2954
    %4444 = vmatpush.bf16.msra.mxu0 %v2944
    %4445 = vmatpush.bf16.msra.mxu0 %v2934
    %4446 = vmatpush.bf16.msra.mxu0 %v2924
    %4447 = vmatpush.bf16.msra.mxu0 %v2914
    %4448 = vmatmul.bf16.gmra.mxu0 %v737
    %v4449 = vpop.f32.mrf.mxu0
    %v4450 = vadd.f32 %v4436, %v4449
    %v4451 = vpop.f32.mrf.mxu0
    %v4452 = vadd.f32 %v4438, %v4451
    %4453 = vdwg.mxu0
    %4454 = vmatpush.bf16.msra.mxu0 %v3064
    %4455 = vmatpush.bf16.msra.mxu0 %v3054
    %4456 = vmatpush.bf16.msra.mxu0 %v3044
    %4457 = vmatpush.bf16.msra.mxu0 %v3034
    %4458 = vmatpush.bf16.msra.mxu0 %v3024
    %4459 = vmatpush.bf16.msra.mxu0 %v3014
    %4460 = vmatpush.bf16.msra.mxu0 %v3004
    %4461 = vmatpush.bf16.msra.mxu0 %v2994
    %4462 = vmatmul.bf16.gmra.mxu0 %v738
    %v4463 = vpop.f32.mrf.mxu0
    %v4464 = vadd.f32 %v4450, %v4463
    %v4465 = vpop.f32.mrf.mxu0
    %v4466 = vadd.f32 %v4452, %v4465
    %4467 = vdwg.mxu0
    %4468 = vmatpush.bf16.msra.mxu0 %v3144
    %4469 = vmatpush.bf16.msra.mxu0 %v3134
    %4470 = vmatpush.bf16.msra.mxu0 %v3124
    %4471 = vmatpush.bf16.msra.mxu0 %v3114
    %4472 = vmatpush.bf16.msra.mxu0 %v3104
    %4473 = vmatpush.bf16.msra.mxu0 %v3094
    %4474 = vmatpush.bf16.msra.mxu0 %v3084
    %4475 = vmatpush.bf16.msra.mxu0 %v3074
    %4476 = vmatmul.bf16.gmra.mxu0 %v739
    %v4477 = vpop.f32.mrf.mxu0
    %v4478 = vadd.f32 %v4464, %v4477
    %v4479 = vpop.f32.mrf.mxu0
    %v4480 = vadd.f32 %v4466, %v4479
    %4481 = vdwg.mxu0
    %4482 = vmatpush.bf16.msra.mxu0 %v3224
    %4483 = vmatpush.bf16.msra.mxu0 %v3214
    %4484 = vmatpush.bf16.msra.mxu0 %v3204
    %4485 = vmatpush.bf16.msra.mxu0 %v3194
    %4486 = vmatpush.bf16.msra.mxu0 %v3184
    %4487 = vmatpush.bf16.msra.mxu0 %v3174
    %4488 = vmatpush.bf16.msra.mxu0 %v3164
    %4489 = vmatpush.bf16.msra.mxu0 %v3154
    %4490 = vmatmul.bf16.gmra.mxu0 %v740
    %v4491 = vpop.f32.mrf.mxu0
    %v4492 = vadd.f32 %v4478, %v4491
    %v4493 = vpop.f32.mrf.mxu0
    %v4494 = vadd.f32 %v4480, %v4493
    %4495 = vdwg.mxu0
    %4496 = vmatpush.bf16.msra.mxu0 %v3304
    %4497 = vmatpush.bf16.msra.mxu0 %v3294
    %4498 = vmatpush.bf16.msra.mxu0 %v3284
    %4499 = vmatpush.bf16.msra.mxu0 %v3274
    %4500 = vmatpush.bf16.msra.mxu0 %v3264
    %4501 = vmatpush.bf16.msra.mxu0 %v3254
    %4502 = vmatpush.bf16.msra.mxu0 %v3244
    %4503 = vmatpush.bf16.msra.mxu0 %v3234
    %4504 = vmatmul.bf16.gmra.mxu0 %v741
    %v4505 = vpop.f32.mrf.mxu0
    %v4506 = vadd.f32 %v4492, %v4505
    %v4507 = vpop.f32.mrf.mxu0
    %v4508 = vadd.f32 %v4494, %v4507
    %4509 = vdwg.mxu0
    %4510 = vmatpush.bf16.msra.mxu0 %v2745
    %4511 = vmatpush.bf16.msra.mxu0 %v2735
    %4512 = vmatpush.bf16.msra.mxu0 %v2725
    %4513 = vmatpush.bf16.msra.mxu0 %v2715
    %4514 = vmatpush.bf16.msra.mxu0 %v2705
    %4515 = vmatpush.bf16.msra.mxu0 %v2695
    %4516 = vmatpush.bf16.msra.mxu0 %v2685
    %4517 = vmatpush.bf16.msra.mxu0 %v2675
    %4518 = vmatmul.bf16.gmra.mxu0 %v734
    %v4519 = vpop.f32.mrf.mxu0
    %v4520 = vadd.f32 0.0, %v4519
    %v4521 = vpop.f32.mrf.mxu0
    %v4522 = vadd.f32 0.0, %v4521
    %4523 = vdwg.mxu0
    %4524 = vmatpush.bf16.msra.mxu0 %v2825
    %4525 = vmatpush.bf16.msra.mxu0 %v2815
    %4526 = vmatpush.bf16.msra.mxu0 %v2805
    %4527 = vmatpush.bf16.msra.mxu0 %v2795
    %4528 = vmatpush.bf16.msra.mxu0 %v2785
    %4529 = vmatpush.bf16.msra.mxu0 %v2775
    %4530 = vmatpush.bf16.msra.mxu0 %v2765
    %4531 = vmatpush.bf16.msra.mxu0 %v2755
    %4532 = vmatmul.bf16.gmra.mxu0 %v735
    %v4533 = vpop.f32.mrf.mxu0
    %v4534 = vadd.f32 %v4520, %v4533
    %v4535 = vpop.f32.mrf.mxu0
    %v4536 = vadd.f32 %v4522, %v4535
    %4537 = vdwg.mxu0
    %4538 = vmatpush.bf16.msra.mxu0 %v2905
    %4539 = vmatpush.bf16.msra.mxu0 %v2895
    %4540 = vmatpush.bf16.msra.mxu0 %v2885
    %4541 = vmatpush.bf16.msra.mxu0 %v2875
    %4542 = vmatpush.bf16.msra.mxu0 %v2865
    %4543 = vmatpush.bf16.msra.mxu0 %v2855
    %4544 = vmatpush.bf16.msra.mxu0 %v2845
    %4545 = vmatpush.bf16.msra.mxu0 %v2835
    %4546 = vmatmul.bf16.gmra.mxu0 %v736
    %v4547 = vpop.f32.mrf.mxu0
    %v4548 = vadd.f32 %v4534, %v4547
    %v4549 = vpop.f32.mrf.mxu0
    %v4550 = vadd.f32 %v4536, %v4549
    %4551 = vdwg.mxu0
    %4552 = vmatpush.bf16.msra.mxu0 %v2985
    %4553 = vmatpush.bf16.msra.mxu0 %v2975
    %4554 = vmatpush.bf16.msra.mxu0 %v2965
    %4555 = vmatpush.bf16.msra.mxu0 %v2955
    %4556 = vmatpush.bf16.msra.mxu0 %v2945
    %4557 = vmatpush.bf16.msra.mxu0 %v2935
    %4558 = vmatpush.bf16.msra.mxu0 %v2925
    %4559 = vmatpush.bf16.msra.mxu0 %v2915
    %4560 = vmatmul.bf16.gmra.mxu0 %v737
    %v4561 = vpop.f32.mrf.mxu0
    %v4562 = vadd.f32 %v4548, %v4561
    %v4563 = vpop.f32.mrf.mxu0
    %v4564 = vadd.f32 %v4550, %v4563
    %4565 = vdwg.mxu0
    %4566 = vmatpush.bf16.msra.mxu0 %v3065
    %4567 = vmatpush.bf16.msra.mxu0 %v3055
    %4568 = vmatpush.bf16.msra.mxu0 %v3045
    %4569 = vmatpush.bf16.msra.mxu0 %v3035
    %4570 = vmatpush.bf16.msra.mxu0 %v3025
    %4571 = vmatpush.bf16.msra.mxu0 %v3015
    %4572 = vmatpush.bf16.msra.mxu0 %v3005
    %4573 = vmatpush.bf16.msra.mxu0 %v2995
    %4574 = vmatmul.bf16.gmra.mxu0 %v738
    %v4575 = vpop.f32.mrf.mxu0
    %v4576 = vadd.f32 %v4562, %v4575
    %v4577 = vpop.f32.mrf.mxu0
    %v4578 = vadd.f32 %v4564, %v4577
    %4579 = vdwg.mxu0
    %4580 = vmatpush.bf16.msra.mxu0 %v3145
    %4581 = vmatpush.bf16.msra.mxu0 %v3135
    %4582 = vmatpush.bf16.msra.mxu0 %v3125
    %4583 = vmatpush.bf16.msra.mxu0 %v3115
    %4584 = vmatpush.bf16.msra.mxu0 %v3105
    %4585 = vmatpush.bf16.msra.mxu0 %v3095
    %4586 = vmatpush.bf16.msra.mxu0 %v3085
    %4587 = vmatpush.bf16.msra.mxu0 %v3075
    %4588 = vmatmul.bf16.gmra.mxu0 %v739
    %v4589 = vpop.f32.mrf.mxu0
    %v4590 = vadd.f32 %v4576, %v4589
    %v4591 = vpop.f32.mrf.mxu0
    %v4592 = vadd.f32 %v4578, %v4591
    %4593 = vdwg.mxu0
    %4594 = vmatpush.bf16.msra.mxu0 %v3225
    %4595 = vmatpush.bf16.msra.mxu0 %v3215
    %4596 = vmatpush.bf16.msra.mxu0 %v3205
    %4597 = vmatpush.bf16.msra.mxu0 %v3195
    %4598 = vmatpush.bf16.msra.mxu0 %v3185
    %4599 = vmatpush.bf16.msra.mxu0 %v3175
    %4600 = vmatpush.bf16.msra.mxu0 %v3165
    %4601 = vmatpush.bf16.msra.mxu0 %v3155
    %4602 = vmatmul.bf16.gmra.mxu0 %v740
    %v4603 = vpop.f32.mrf.mxu0
    %v4604 = vadd.f32 %v4590, %v4603
    %v4605 = vpop.f32.mrf.mxu0
    %v4606 = vadd.f32 %v4592, %v4605
    %4607 = vdwg.mxu0
    %4608 = vmatpush.bf16.msra.mxu0 %v3305
    %4609 = vmatpush.bf16.msra.mxu0 %v3295
    %4610 = vmatpush.bf16.msra.mxu0 %v3285
    %4611 = vmatpush.bf16.msra.mxu0 %v3275
    %4612 = vmatpush.bf16.msra.mxu0 %v3265
    %4613 = vmatpush.bf16.msra.mxu0 %v3255
    %4614 = vmatpush.bf16.msra.mxu0 %v3245
    %4615 = vmatpush.bf16.msra.mxu0 %v3235
    %4616 = vmatmul.bf16.gmra.mxu0 %v741
    %v4617 = vpop.f32.mrf.mxu0
    %v4618 = vadd.f32 %v4604, %v4617
    %v4619 = vpop.f32.mrf.mxu0
    %v4620 = vadd.f32 %v4606, %v4619
    %4621 = vdwg.mxu0
    %4622 = vmatpush.bf16.msra.mxu0 %v2746
    %4623 = vmatpush.bf16.msra.mxu0 %v2736
    %4624 = vmatpush.bf16.msra.mxu0 %v2726
    %4625 = vmatpush.bf16.msra.mxu0 %v2716
    %4626 = vmatpush.bf16.msra.mxu0 %v2706
    %4627 = vmatpush.bf16.msra.mxu0 %v2696
    %4628 = vmatpush.bf16.msra.mxu0 %v2686
    %4629 = vmatpush.bf16.msra.mxu0 %v2676
    %4630 = vmatmul.bf16.gmra.mxu0 %v734
    %v4631 = vpop.f32.mrf.mxu0
    %v4632 = vadd.f32 0.0, %v4631
    %v4633 = vpop.f32.mrf.mxu0
    %v4634 = vadd.f32 0.0, %v4633
    %4635 = vdwg.mxu0
    %4636 = vmatpush.bf16.msra.mxu0 %v2826
    %4637 = vmatpush.bf16.msra.mxu0 %v2816
    %4638 = vmatpush.bf16.msra.mxu0 %v2806
    %4639 = vmatpush.bf16.msra.mxu0 %v2796
    %4640 = vmatpush.bf16.msra.mxu0 %v2786
    %4641 = vmatpush.bf16.msra.mxu0 %v2776
    %4642 = vmatpush.bf16.msra.mxu0 %v2766
    %4643 = vmatpush.bf16.msra.mxu0 %v2756
    %4644 = vmatmul.bf16.gmra.mxu0 %v735
    %v4645 = vpop.f32.mrf.mxu0
    %v4646 = vadd.f32 %v4632, %v4645
    %v4647 = vpop.f32.mrf.mxu0
    %v4648 = vadd.f32 %v4634, %v4647
    %4649 = vdwg.mxu0
    %4650 = vmatpush.bf16.msra.mxu0 %v2906
    %4651 = vmatpush.bf16.msra.mxu0 %v2896
    %4652 = vmatpush.bf16.msra.mxu0 %v2886
    %4653 = vmatpush.bf16.msra.mxu0 %v2876
    %4654 = vmatpush.bf16.msra.mxu0 %v2866
    %4655 = vmatpush.bf16.msra.mxu0 %v2856
    %4656 = vmatpush.bf16.msra.mxu0 %v2846
    %4657 = vmatpush.bf16.msra.mxu0 %v2836
    %4658 = vmatmul.bf16.gmra.mxu0 %v736
    %v4659 = vpop.f32.mrf.mxu0
    %v4660 = vadd.f32 %v4646, %v4659
    %v4661 = vpop.f32.mrf.mxu0
    %v4662 = vadd.f32 %v4648, %v4661
    %4663 = vdwg.mxu0
    %4664 = vmatpush.bf16.msra.mxu0 %v2986
    %4665 = vmatpush.bf16.msra.mxu0 %v2976
    %4666 = vmatpush.bf16.msra.mxu0 %v2966
    %4667 = vmatpush.bf16.msra.mxu0 %v2956
    %4668 = vmatpush.bf16.msra.mxu0 %v2946
    %4669 = vmatpush.bf16.msra.mxu0 %v2936
    %4670 = vmatpush.bf16.msra.mxu0 %v2926
    %4671 = vmatpush.bf16.msra.mxu0 %v2916
    %4672 = vmatmul.bf16.gmra.mxu0 %v737
    %v4673 = vpop.f32.mrf.mxu0
    %v4674 = vadd.f32 %v4660, %v4673
    %v4675 = vpop.f32.mrf.mxu0
    %v4676 = vadd.f32 %v4662, %v4675
    %4677 = vdwg.mxu0
    %4678 = vmatpush.bf16.msra.mxu0 %v3066
    %4679 = vmatpush.bf16.msra.mxu0 %v3056
    %4680 = vmatpush.bf16.msra.mxu0 %v3046
    %4681 = vmatpush.bf16.msra.mxu0 %v3036
    %4682 = vmatpush.bf16.msra.mxu0 %v3026
    %4683 = vmatpush.bf16.msra.mxu0 %v3016
    %4684 = vmatpush.bf16.msra.mxu0 %v3006
    %4685 = vmatpush.bf16.msra.mxu0 %v2996
    %4686 = vmatmul.bf16.gmra.mxu0 %v738
    %v4687 = vpop.f32.mrf.mxu0
    %v4688 = vadd.f32 %v4674, %v4687
    %v4689 = vpop.f32.mrf.mxu0
    %v4690 = vadd.f32 %v4676, %v4689
    %4691 = vdwg.mxu0
    %4692 = vmatpush.bf16.msra.mxu0 %v3146
    %4693 = vmatpush.bf16.msra.mxu0 %v3136
    %4694 = vmatpush.bf16.msra.mxu0 %v3126
    %4695 = vmatpush.bf16.msra.mxu0 %v3116
    %4696 = vmatpush.bf16.msra.mxu0 %v3106
    %4697 = vmatpush.bf16.msra.mxu0 %v3096
    %4698 = vmatpush.bf16.msra.mxu0 %v3086
    %4699 = vmatpush.bf16.msra.mxu0 %v3076
    %4700 = vmatmul.bf16.gmra.mxu0 %v739
    %v4701 = vpop.f32.mrf.mxu0
    %v4702 = vadd.f32 %v4688, %v4701
    %v4703 = vpop.f32.mrf.mxu0
    %v4704 = vadd.f32 %v4690, %v4703
    %4705 = vdwg.mxu0
    %4706 = vmatpush.bf16.msra.mxu0 %v3226
    %4707 = vmatpush.bf16.msra.mxu0 %v3216
    %4708 = vmatpush.bf16.msra.mxu0 %v3206
    %4709 = vmatpush.bf16.msra.mxu0 %v3196
    %4710 = vmatpush.bf16.msra.mxu0 %v3186
    %4711 = vmatpush.bf16.msra.mxu0 %v3176
    %4712 = vmatpush.bf16.msra.mxu0 %v3166
    %4713 = vmatpush.bf16.msra.mxu0 %v3156
    %4714 = vmatmul.bf16.gmra.mxu0 %v740
    %v4715 = vpop.f32.mrf.mxu0
    %v4716 = vadd.f32 %v4702, %v4715
    %v4717 = vpop.f32.mrf.mxu0
    %v4718 = vadd.f32 %v4704, %v4717
    %4719 = vdwg.mxu0
    %4720 = vmatpush.bf16.msra.mxu0 %v3306
    %4721 = vmatpush.bf16.msra.mxu0 %v3296
    %4722 = vmatpush.bf16.msra.mxu0 %v3286
    %4723 = vmatpush.bf16.msra.mxu0 %v3276
    %4724 = vmatpush.bf16.msra.mxu0 %v3266
    %4725 = vmatpush.bf16.msra.mxu0 %v3256
    %4726 = vmatpush.bf16.msra.mxu0 %v3246
    %4727 = vmatpush.bf16.msra.mxu0 %v3236
    %4728 = vmatmul.bf16.gmra.mxu0 %v741
    %v4729 = vpop.f32.mrf.mxu0
    %v4730 = vadd.f32 %v4716, %v4729
    %v4731 = vpop.f32.mrf.mxu0
    %v4732 = vadd.f32 %v4718, %v4731
    %4733 = vdwg.mxu0
    %4734 = vmatpush.bf16.msra.mxu0 %v2747
    %4735 = vmatpush.bf16.msra.mxu0 %v2737
    %4736 = vmatpush.bf16.msra.mxu0 %v2727
    %4737 = vmatpush.bf16.msra.mxu0 %v2717
    %4738 = vmatpush.bf16.msra.mxu0 %v2707
    %4739 = vmatpush.bf16.msra.mxu0 %v2697
    %4740 = vmatpush.bf16.msra.mxu0 %v2687
    %4741 = vmatpush.bf16.msra.mxu0 %v2677
    %4742 = vmatmul.bf16.gmra.mxu0 %v734
    %v4743 = vpop.f32.mrf.mxu0
    %v4744 = vadd.f32 0.0, %v4743
    %v4745 = vpop.f32.mrf.mxu0
    %v4746 = vadd.f32 0.0, %v4745
    %4747 = vdwg.mxu0
    %4748 = vmatpush.bf16.msra.mxu0 %v2827
    %4749 = vmatpush.bf16.msra.mxu0 %v2817
    %4750 = vmatpush.bf16.msra.mxu0 %v2807
    %4751 = vmatpush.bf16.msra.mxu0 %v2797
    %4752 = vmatpush.bf16.msra.mxu0 %v2787
    %4753 = vmatpush.bf16.msra.mxu0 %v2777
    %4754 = vmatpush.bf16.msra.mxu0 %v2767
    %4755 = vmatpush.bf16.msra.mxu0 %v2757
    %4756 = vmatmul.bf16.gmra.mxu0 %v735
    %v4757 = vpop.f32.mrf.mxu0
    %v4758 = vadd.f32 %v4744, %v4757
    %v4759 = vpop.f32.mrf.mxu0
    %v4760 = vadd.f32 %v4746, %v4759
    %4761 = vdwg.mxu0
    %4762 = vmatpush.bf16.msra.mxu0 %v2907
    %4763 = vmatpush.bf16.msra.mxu0 %v2897
    %4764 = vmatpush.bf16.msra.mxu0 %v2887
    %4765 = vmatpush.bf16.msra.mxu0 %v2877
    %4766 = vmatpush.bf16.msra.mxu0 %v2867
    %4767 = vmatpush.bf16.msra.mxu0 %v2857
    %4768 = vmatpush.bf16.msra.mxu0 %v2847
    %4769 = vmatpush.bf16.msra.mxu0 %v2837
    %4770 = vmatmul.bf16.gmra.mxu0 %v736
    %v4771 = vpop.f32.mrf.mxu0
    %v4772 = vadd.f32 %v4758, %v4771
    %v4773 = vpop.f32.mrf.mxu0
    %v4774 = vadd.f32 %v4760, %v4773
    %4775 = vdwg.mxu0
    %4776 = vmatpush.bf16.msra.mxu0 %v2987
    %4777 = vmatpush.bf16.msra.mxu0 %v2977
    %4778 = vmatpush.bf16.msra.mxu0 %v2967
    %4779 = vmatpush.bf16.msra.mxu0 %v2957
    %4780 = vmatpush.bf16.msra.mxu0 %v2947
    %4781 = vmatpush.bf16.msra.mxu0 %v2937
    %4782 = vmatpush.bf16.msra.mxu0 %v2927
    %4783 = vmatpush.bf16.msra.mxu0 %v2917
    %4784 = vmatmul.bf16.gmra.mxu0 %v737
    %v4785 = vpop.f32.mrf.mxu0
    %v4786 = vadd.f32 %v4772, %v4785
    %v4787 = vpop.f32.mrf.mxu0
    %v4788 = vadd.f32 %v4774, %v4787
    %4789 = vdwg.mxu0
    %4790 = vmatpush.bf16.msra.mxu0 %v3067
    %4791 = vmatpush.bf16.msra.mxu0 %v3057
    %4792 = vmatpush.bf16.msra.mxu0 %v3047
    %4793 = vmatpush.bf16.msra.mxu0 %v3037
    %4794 = vmatpush.bf16.msra.mxu0 %v3027
    %4795 = vmatpush.bf16.msra.mxu0 %v3017
    %4796 = vmatpush.bf16.msra.mxu0 %v3007
    %4797 = vmatpush.bf16.msra.mxu0 %v2997
    %4798 = vmatmul.bf16.gmra.mxu0 %v738
    %v4799 = vpop.f32.mrf.mxu0
    %v4800 = vadd.f32 %v4786, %v4799
    %v4801 = vpop.f32.mrf.mxu0
    %v4802 = vadd.f32 %v4788, %v4801
    %4803 = vdwg.mxu0
    %4804 = vmatpush.bf16.msra.mxu0 %v3147
    %4805 = vmatpush.bf16.msra.mxu0 %v3137
    %4806 = vmatpush.bf16.msra.mxu0 %v3127
    %4807 = vmatpush.bf16.msra.mxu0 %v3117
    %4808 = vmatpush.bf16.msra.mxu0 %v3107
    %4809 = vmatpush.bf16.msra.mxu0 %v3097
    %4810 = vmatpush.bf16.msra.mxu0 %v3087
    %4811 = vmatpush.bf16.msra.mxu0 %v3077
    %4812 = vmatmul.bf16.gmra.mxu0 %v739
    %v4813 = vpop.f32.mrf.mxu0
    %v4814 = vadd.f32 %v4800, %v4813
    %v4815 = vpop.f32.mrf.mxu0
    %v4816 = vadd.f32 %v4802, %v4815
    %4817 = vdwg.mxu0
    %4818 = vmatpush.bf16.msra.mxu0 %v3227
    %4819 = vmatpush.bf16.msra.mxu0 %v3217
    %4820 = vmatpush.bf16.msra.mxu0 %v3207
    %4821 = vmatpush.bf16.msra.mxu0 %v3197
    %4822 = vmatpush.bf16.msra.mxu0 %v3187
    %4823 = vmatpush.bf16.msra.mxu0 %v3177
    %4824 = vmatpush.bf16.msra.mxu0 %v3167
    %4825 = vmatpush.bf16.msra.mxu0 %v3157
    %4826 = vmatmul.bf16.gmra.mxu0 %v740
    %v4827 = vpop.f32.mrf.mxu0
    %v4828 = vadd.f32 %v4814, %v4827
    %v4829 = vpop.f32.mrf.mxu0
    %v4830 = vadd.f32 %v4816, %v4829
    %4831 = vdwg.mxu0
    %4832 = vmatpush.bf16.msra.mxu0 %v3307
    %4833 = vmatpush.bf16.msra.mxu0 %v3297
    %4834 = vmatpush.bf16.msra.mxu0 %v3287
    %4835 = vmatpush.bf16.msra.mxu0 %v3277
    %4836 = vmatpush.bf16.msra.mxu0 %v3267
    %4837 = vmatpush.bf16.msra.mxu0 %v3257
    %4838 = vmatpush.bf16.msra.mxu0 %v3247
    %4839 = vmatpush.bf16.msra.mxu0 %v3237
    %4840 = vmatmul.bf16.gmra.mxu0 %v741
    %v4841 = vpop.f32.mrf.mxu0
    %v4842 = vadd.f32 %v4828, %v4841
    %v4843 = vpop.f32.mrf.mxu0
    %v4844 = vadd.f32 %v4830, %v4843
    %4845 = vdwg.mxu0
    %4846 = vmatpush.bf16.msra.mxu0 %v2748
    %4847 = vmatpush.bf16.msra.mxu0 %v2738
    %4848 = vmatpush.bf16.msra.mxu0 %v2728
    %4849 = vmatpush.bf16.msra.mxu0 %v2718
    %4850 = vmatpush.bf16.msra.mxu0 %v2708
    %4851 = vmatpush.bf16.msra.mxu0 %v2698
    %4852 = vmatpush.bf16.msra.mxu0 %v2688
    %4853 = vmatpush.bf16.msra.mxu0 %v2678
    %4854 = vmatmul.bf16.gmra.mxu0 %v734
    %v4855 = vpop.f32.mrf.mxu0
    %v4856 = vadd.f32 0.0, %v4855
    %v4857 = vpop.f32.mrf.mxu0
    %v4858 = vadd.f32 0.0, %v4857
    %4859 = vdwg.mxu0
    %4860 = vmatpush.bf16.msra.mxu0 %v2828
    %4861 = vmatpush.bf16.msra.mxu0 %v2818
    %4862 = vmatpush.bf16.msra.mxu0 %v2808
    %4863 = vmatpush.bf16.msra.mxu0 %v2798
    %4864 = vmatpush.bf16.msra.mxu0 %v2788
    %4865 = vmatpush.bf16.msra.mxu0 %v2778
    %4866 = vmatpush.bf16.msra.mxu0 %v2768
    %4867 = vmatpush.bf16.msra.mxu0 %v2758
    %4868 = vmatmul.bf16.gmra.mxu0 %v735
    %v4869 = vpop.f32.mrf.mxu0
    %v4870 = vadd.f32 %v4856, %v4869
    %v4871 = vpop.f32.mrf.mxu0
    %v4872 = vadd.f32 %v4858, %v4871
    %4873 = vdwg.mxu0
    %4874 = vmatpush.bf16.msra.mxu0 %v2908
    %4875 = vmatpush.bf16.msra.mxu0 %v2898
    %4876 = vmatpush.bf16.msra.mxu0 %v2888
    %4877 = vmatpush.bf16.msra.mxu0 %v2878
    %4878 = vmatpush.bf16.msra.mxu0 %v2868
    %4879 = vmatpush.bf16.msra.mxu0 %v2858
    %4880 = vmatpush.bf16.msra.mxu0 %v2848
    %4881 = vmatpush.bf16.msra.mxu0 %v2838
    %4882 = vmatmul.bf16.gmra.mxu0 %v736
    %v4883 = vpop.f32.mrf.mxu0
    %v4884 = vadd.f32 %v4870, %v4883
    %v4885 = vpop.f32.mrf.mxu0
    %v4886 = vadd.f32 %v4872, %v4885
    %4887 = vdwg.mxu0
    %4888 = vmatpush.bf16.msra.mxu0 %v2988
    %4889 = vmatpush.bf16.msra.mxu0 %v2978
    %4890 = vmatpush.bf16.msra.mxu0 %v2968
    %4891 = vmatpush.bf16.msra.mxu0 %v2958
    %4892 = vmatpush.bf16.msra.mxu0 %v2948
    %4893 = vmatpush.bf16.msra.mxu0 %v2938
    %4894 = vmatpush.bf16.msra.mxu0 %v2928
    %4895 = vmatpush.bf16.msra.mxu0 %v2918
    %4896 = vmatmul.bf16.gmra.mxu0 %v737
    %v4897 = vpop.f32.mrf.mxu0
    %v4898 = vadd.f32 %v4884, %v4897
    %v4899 = vpop.f32.mrf.mxu0
    %v4900 = vadd.f32 %v4886, %v4899
    %4901 = vdwg.mxu0
    %4902 = vmatpush.bf16.msra.mxu0 %v3068
    %4903 = vmatpush.bf16.msra.mxu0 %v3058
    %4904 = vmatpush.bf16.msra.mxu0 %v3048
    %4905 = vmatpush.bf16.msra.mxu0 %v3038
    %4906 = vmatpush.bf16.msra.mxu0 %v3028
    %4907 = vmatpush.bf16.msra.mxu0 %v3018
    %4908 = vmatpush.bf16.msra.mxu0 %v3008
    %4909 = vmatpush.bf16.msra.mxu0 %v2998
    %4910 = vmatmul.bf16.gmra.mxu0 %v738
    %v4911 = vpop.f32.mrf.mxu0
    %v4912 = vadd.f32 %v4898, %v4911
    %v4913 = vpop.f32.mrf.mxu0
    %v4914 = vadd.f32 %v4900, %v4913
    %4915 = vdwg.mxu0
    %4916 = vmatpush.bf16.msra.mxu0 %v3148
    %4917 = vmatpush.bf16.msra.mxu0 %v3138
    %4918 = vmatpush.bf16.msra.mxu0 %v3128
    %4919 = vmatpush.bf16.msra.mxu0 %v3118
    %4920 = vmatpush.bf16.msra.mxu0 %v3108
    %4921 = vmatpush.bf16.msra.mxu0 %v3098
    %4922 = vmatpush.bf16.msra.mxu0 %v3088
    %4923 = vmatpush.bf16.msra.mxu0 %v3078
    %4924 = vmatmul.bf16.gmra.mxu0 %v739
    %v4925 = vpop.f32.mrf.mxu0
    %v4926 = vadd.f32 %v4912, %v4925
    %v4927 = vpop.f32.mrf.mxu0
    %v4928 = vadd.f32 %v4914, %v4927
    %4929 = vdwg.mxu0
    %4930 = vmatpush.bf16.msra.mxu0 %v3228
    %4931 = vmatpush.bf16.msra.mxu0 %v3218
    %4932 = vmatpush.bf16.msra.mxu0 %v3208
    %4933 = vmatpush.bf16.msra.mxu0 %v3198
    %4934 = vmatpush.bf16.msra.mxu0 %v3188
    %4935 = vmatpush.bf16.msra.mxu0 %v3178
    %4936 = vmatpush.bf16.msra.mxu0 %v3168
    %4937 = vmatpush.bf16.msra.mxu0 %v3158
    %4938 = vmatmul.bf16.gmra.mxu0 %v740
    %v4939 = vpop.f32.mrf.mxu0
    %v4940 = vadd.f32 %v4926, %v4939
    %v4941 = vpop.f32.mrf.mxu0
    %v4942 = vadd.f32 %v4928, %v4941
    %4943 = vdwg.mxu0
    %4944 = vmatpush.bf16.msra.mxu0 %v3308
    %4945 = vmatpush.bf16.msra.mxu0 %v3298
    %4946 = vmatpush.bf16.msra.mxu0 %v3288
    %4947 = vmatpush.bf16.msra.mxu0 %v3278
    %4948 = vmatpush.bf16.msra.mxu0 %v3268
    %4949 = vmatpush.bf16.msra.mxu0 %v3258
    %4950 = vmatpush.bf16.msra.mxu0 %v3248
    %4951 = vmatpush.bf16.msra.mxu0 %v3238
    %4952 = vmatmul.bf16.gmra.mxu0 %v741
    %v4953 = vpop.f32.mrf.mxu0
    %v4954 = vadd.f32 %v4940, %v4953
    %v4955 = vpop.f32.mrf.mxu0
    %v4956 = vadd.f32 %v4942, %v4955
    %4957 = vdwg.mxu0
    %4958 = vmatpush.bf16.msra.mxu0 %v2749
    %4959 = vmatpush.bf16.msra.mxu0 %v2739
    %4960 = vmatpush.bf16.msra.mxu0 %v2729
    %4961 = vmatpush.bf16.msra.mxu0 %v2719
    %4962 = vmatpush.bf16.msra.mxu0 %v2709
    %4963 = vmatpush.bf16.msra.mxu0 %v2699
    %4964 = vmatpush.bf16.msra.mxu0 %v2689
    %4965 = vmatpush.bf16.msra.mxu0 %v2679
    %4966 = vmatmul.bf16.gmra.mxu0 %v734
    %v4967 = vpop.f32.mrf.mxu0
    %v4968 = vadd.f32 0.0, %v4967
    %v4969 = vpop.f32.mrf.mxu0
    %v4970 = vadd.f32 0.0, %v4969
    %4971 = vdwg.mxu0
    %4972 = vmatpush.bf16.msra.mxu0 %v2829
    %4973 = vmatpush.bf16.msra.mxu0 %v2819
    %4974 = vmatpush.bf16.msra.mxu0 %v2809
    %4975 = vmatpush.bf16.msra.mxu0 %v2799
    %4976 = vmatpush.bf16.msra.mxu0 %v2789
    %4977 = vmatpush.bf16.msra.mxu0 %v2779
    %4978 = vmatpush.bf16.msra.mxu0 %v2769
    %4979 = vmatpush.bf16.msra.mxu0 %v2759
    %4980 = vmatmul.bf16.gmra.mxu0 %v735
    %v4981 = vpop.f32.mrf.mxu0
    %v4982 = vadd.f32 %v4968, %v4981
    %v4983 = vpop.f32.mrf.mxu0
    %v4984 = vadd.f32 %v4970, %v4983
    %4985 = vdwg.mxu0
    %4986 = vmatpush.bf16.msra.mxu0 %v2909
    %4987 = vmatpush.bf16.msra.mxu0 %v2899
    %4988 = vmatpush.bf16.msra.mxu0 %v2889
    %4989 = vmatpush.bf16.msra.mxu0 %v2879
    %4990 = vmatpush.bf16.msra.mxu0 %v2869
    %4991 = vmatpush.bf16.msra.mxu0 %v2859
    %4992 = vmatpush.bf16.msra.mxu0 %v2849
    %4993 = vmatpush.bf16.msra.mxu0 %v2839
    %4994 = vmatmul.bf16.gmra.mxu0 %v736
    %v4995 = vpop.f32.mrf.mxu0
    %v4996 = vadd.f32 %v4982, %v4995
    %v4997 = vpop.f32.mrf.mxu0
    %v4998 = vadd.f32 %v4984, %v4997
    %4999 = vdwg.mxu0
    %5000 = vmatpush.bf16.msra.mxu0 %v2989
    %5001 = vmatpush.bf16.msra.mxu0 %v2979
    %5002 = vmatpush.bf16.msra.mxu0 %v2969
    %5003 = vmatpush.bf16.msra.mxu0 %v2959
    %5004 = vmatpush.bf16.msra.mxu0 %v2949
    %5005 = vmatpush.bf16.msra.mxu0 %v2939
    %5006 = vmatpush.bf16.msra.mxu0 %v2929
    %5007 = vmatpush.bf16.msra.mxu0 %v2919
    %5008 = vmatmul.bf16.gmra.mxu0 %v737
    %v5009 = vpop.f32.mrf.mxu0
    %v5010 = vadd.f32 %v4996, %v5009
    %v5011 = vpop.f32.mrf.mxu0
    %v5012 = vadd.f32 %v4998, %v5011
    %5013 = vdwg.mxu0
    %5014 = vmatpush.bf16.msra.mxu0 %v3069
    %5015 = vmatpush.bf16.msra.mxu0 %v3059
    %5016 = vmatpush.bf16.msra.mxu0 %v3049
    %5017 = vmatpush.bf16.msra.mxu0 %v3039
    %5018 = vmatpush.bf16.msra.mxu0 %v3029
    %5019 = vmatpush.bf16.msra.mxu0 %v3019
    %5020 = vmatpush.bf16.msra.mxu0 %v3009
    %5021 = vmatpush.bf16.msra.mxu0 %v2999
    %5022 = vmatmul.bf16.gmra.mxu0 %v738
    %v5023 = vpop.f32.mrf.mxu0
    %v5024 = vadd.f32 %v5010, %v5023
    %v5025 = vpop.f32.mrf.mxu0
    %v5026 = vadd.f32 %v5012, %v5025
    %5027 = vdwg.mxu0
    %5028 = vmatpush.bf16.msra.mxu0 %v3149
    %5029 = vmatpush.bf16.msra.mxu0 %v3139
    %5030 = vmatpush.bf16.msra.mxu0 %v3129
    %5031 = vmatpush.bf16.msra.mxu0 %v3119
    %5032 = vmatpush.bf16.msra.mxu0 %v3109
    %5033 = vmatpush.bf16.msra.mxu0 %v3099
    %5034 = vmatpush.bf16.msra.mxu0 %v3089
    %5035 = vmatpush.bf16.msra.mxu0 %v3079
    %5036 = vmatmul.bf16.gmra.mxu0 %v739
    %v5037 = vpop.f32.mrf.mxu0
    %v5038 = vadd.f32 %v5024, %v5037
    %v5039 = vpop.f32.mrf.mxu0
    %v5040 = vadd.f32 %v5026, %v5039
    %5041 = vdwg.mxu0
    %5042 = vmatpush.bf16.msra.mxu0 %v3229
    %5043 = vmatpush.bf16.msra.mxu0 %v3219
    %5044 = vmatpush.bf16.msra.mxu0 %v3209
    %5045 = vmatpush.bf16.msra.mxu0 %v3199
    %5046 = vmatpush.bf16.msra.mxu0 %v3189
    %5047 = vmatpush.bf16.msra.mxu0 %v3179
    %5048 = vmatpush.bf16.msra.mxu0 %v3169
    %5049 = vmatpush.bf16.msra.mxu0 %v3159
    %5050 = vmatmul.bf16.gmra.mxu0 %v740
    %v5051 = vpop.f32.mrf.mxu0
    %v5052 = vadd.f32 %v5038, %v5051
    %v5053 = vpop.f32.mrf.mxu0
    %v5054 = vadd.f32 %v5040, %v5053
    %5055 = vdwg.mxu0
    %5056 = vmatpush.bf16.msra.mxu0 %v3309
    %5057 = vmatpush.bf16.msra.mxu0 %v3299
    %5058 = vmatpush.bf16.msra.mxu0 %v3289
    %5059 = vmatpush.bf16.msra.mxu0 %v3279
    %5060 = vmatpush.bf16.msra.mxu0 %v3269
    %5061 = vmatpush.bf16.msra.mxu0 %v3259
    %5062 = vmatpush.bf16.msra.mxu0 %v3249
    %5063 = vmatpush.bf16.msra.mxu0 %v3239
    %5064 = vmatmul.bf16.gmra.mxu0 %v741
    %v5065 = vpop.f32.mrf.mxu0
    %v5066 = vadd.f32 %v5052, %v5065
    %v5067 = vpop.f32.mrf.mxu0
    %v5068 = vadd.f32 %v5054, %v5067
    %5069 = vdwg.mxu0
    %v5070 = vmul.f32 %v4058, %v4058
    %v5071 = vmul.f32 %v4170, %v4170
    %v5072 = vmul.f32 %v4282, %v4282
    %v5073 = vmul.f32 %v4394, %v4394
    %v5074 = vmul.f32 %v4506, %v4506
    %v5075 = vmul.f32 %v4060, %v4060
    %v5076 = vmul.f32 %v4172, %v4172
    %v5077 = vmul.f32 %v4284, %v4284
    %v5078 = vmul.f32 %v4396, %v4396
    %v5079 = vmul.f32 %v4508, %v4508
    %v5080 = vmul.f32 %v4618, %v4618
    %v5081 = vmul.f32 %v4730, %v4730
    %v5082 = vmul.f32 %v4842, %v4842
    %v5083 = vmul.f32 %v4954, %v4954
    %v5084 = vmul.f32 %v5066, %v5066
    %v5085 = vmul.f32 %v4620, %v4620
    %v5086 = vmul.f32 %v4732, %v4732
    %v5087 = vmul.f32 %v4844, %v4844
    %v5088 = vmul.f32 %v4956, %v4956
    %v5089 = vmul.f32 %v5068, %v5068
    %v5090 = vadd.f32 %v5070, %v5080
    %v5091 = vadd.f32 %v5071, %v5081
    %v5092 = vadd.f32 %v5072, %v5082
    %v5093 = vadd.f32 %v5073, %v5083
    %v5094 = vadd.f32 %v5074, %v5084
    %v5095 = vadd.f32 %v5075, %v5085
    %v5096 = vadd.f32 %v5076, %v5086
    %v5097 = vadd.f32 %v5077, %v5087
    %v5098 = vadd.f32 %v5078, %v5088
    %v5099 = vadd.f32 %v5079, %v5089
    %v5100 = vpack.c.bf16 %v5095, %v5090
    %v5101 = vpack.c.bf16 %v5096, %v5091
    %v5102 = vpack.c.bf16 %v5097, %v5092
    %v5103 = vpack.c.bf16 %v5098, %v5093
    %v5104 = vpack.c.bf16 %v5099, %v5094
    %v5105 = vld [vmem:[#allocation7] sm:$0xf]
    %v5106 = vld [vmem:[#allocation7 + $0x4] sm:$0xf]
    %v5107 = vld [vmem:[#allocation7 + $0x8] sm:$0xf]
    %v5108 = vld [vmem:[#allocation7 + $0xc] sm:$0xf]
    %v5109 = vld [vmem:[#allocation7 + $0x10] sm:$0xf]
    %v5110 = vld [vmem:[#allocation7 + $0x14] sm:$0xf]
    %v5111 = vld [vmem:[#allocation7 + $0x18] sm:$0xf]
    %v5112 = vld [vmem:[#allocation7 + $0x1c] sm:$0xf]
    %v5113 = vld [vmem:[#allocation7 + $0x20] sm:$0xf]
    %v5114 = vld [vmem:[#allocation7 + $0x24] sm:$0xf]
    %v5115 = vld [vmem:[#allocation7 + $0x28] sm:$0xf]
    %v5116 = vld [vmem:[#allocation7 + $0x2c] sm:$0xf]
    %v5117 = vld [vmem:[#allocation7 + $0x30] sm:$0xf]
    %v5118 = vld [vmem:[#allocation7 + $0x34] sm:$0xf]
    %v5119 = vld [vmem:[#allocation7 + $0x38] sm:$0xf]
    %v5120 = vld [vmem:[#allocation7 + $0x3c] sm:$0xf]
    %v5121 = vld [vmem:[#allocation7 + $0x40] sm:$0xf]
    %v5122 = vld [vmem:[#allocation7 + $0x44] sm:$0xf]
    %v5123 = vld [vmem:[#allocation7 + $0x48] sm:$0xf]
    %v5124 = vld [vmem:[#allocation7 + $0x4c] sm:$0xf]
    %v5125 = vld [vmem:[#allocation7 + $0x50] sm:$0xf]
    %v5126 = vld [vmem:[#allocation7 + $0x54] sm:$0xf]
    %v5127 = vld [vmem:[#allocation7 + $0x58] sm:$0xf]
    %v5128 = vld [vmem:[#allocation7 + $0x5c] sm:$0xf]
    %v5129 = vld [vmem:[#allocation7 + $0x60] sm:$0xf]
    %v5130 = vld [vmem:[#allocation7 + $0x64] sm:$0xf]
    %v5131 = vld [vmem:[#allocation7 + $0x68] sm:$0xf]
    %v5132 = vld [vmem:[#allocation7 + $0x6c] sm:$0xf]
    %v5133 = vld [vmem:[#allocation7 + $0x70] sm:$0xf]
    %v5134 = vld [vmem:[#allocation7 + $0x74] sm:$0xf]
    %v5135 = vld [vmem:[#allocation7 + $0x78] sm:$0xf]
    %v5136 = vld [vmem:[#allocation7 + $0x7c] sm:$0xf]
    %v5137 = vld [vmem:[#allocation7 + $0x80] sm:$0xf]
    %v5138 = vld [vmem:[#allocation7 + $0x84] sm:$0xf]
    %v5139 = vld [vmem:[#allocation7 + $0x88] sm:$0xf]
    %v5140 = vld [vmem:[#allocation7 + $0x8c] sm:$0xf]
    %v5141 = vld [vmem:[#allocation7 + $0x90] sm:$0xf]
    %v5142 = vld [vmem:[#allocation7 + $0x94] sm:$0xf]
    %v5143 = vld [vmem:[#allocation7 + $0x98] sm:$0xf]
    %v5144 = vld [vmem:[#allocation7 + $0x9c] sm:$0xf]
    %v5145 = vld [vmem:[#allocation7 + $0xa0] sm:$0xf]
    %v5146 = vld [vmem:[#allocation7 + $0xa4] sm:$0xf]
    %v5147 = vld [vmem:[#allocation7 + $0xa8] sm:$0xf]
    %v5148 = vld [vmem:[#allocation7 + $0xac] sm:$0xf]
    %v5149 = vld [vmem:[#allocation7 + $0xb0] sm:$0xf]
    %v5150 = vld [vmem:[#allocation7 + $0xb4] sm:$0xf]
    %v5151 = vld [vmem:[#allocation7 + $0xb8] sm:$0xf]
    %v5152 = vld [vmem:[#allocation7 + $0xbc] sm:$0xf]
    %v5153 = vld [vmem:[#allocation7 + $0xc0] sm:$0xf]
    %v5154 = vld [vmem:[#allocation7 + $0xc4] sm:$0xf]
    %v5155 = vld [vmem:[#allocation7 + $0xc8] sm:$0xf]
    %v5156 = vld [vmem:[#allocation7 + $0xcc] sm:$0xf]
    %v5157 = vld [vmem:[#allocation7 + $0xd0] sm:$0xf]
    %v5158 = vld [vmem:[#allocation7 + $0xd4] sm:$0xf]
    %v5159 = vld [vmem:[#allocation7 + $0xd8] sm:$0xf]
    %v5160 = vld [vmem:[#allocation7 + $0xdc] sm:$0xf]
    %v5161 = vld [vmem:[#allocation7 + $0xe0] sm:$0xf]
    %v5162 = vld [vmem:[#allocation7 + $0xe4] sm:$0xf]
    %v5163 = vld [vmem:[#allocation7 + $0xe8] sm:$0xf]
    %v5164 = vld [vmem:[#allocation7 + $0xec] sm:$0xf]
    %v5165 = vld [vmem:[#allocation7 + $0xf0] sm:$0xf]
    %v5166 = vld [vmem:[#allocation7 + $0xf4] sm:$0xf]
    %v5167 = vld [vmem:[#allocation7 + $0xf8] sm:$0xf]
    %v5168 = vld [vmem:[#allocation7 + $0xfc] sm:$0xf]
    %v5169 = vld [vmem:[#allocation7 + $0x100] sm:$0xf]
    %v5170 = vld [vmem:[#allocation7 + $0x104] sm:$0xf]
    %v5171 = vld [vmem:[#allocation7 + $0x108] sm:$0xf]
    %v5172 = vld [vmem:[#allocation7 + $0x10c] sm:$0xf]
    %v5173 = vld [vmem:[#allocation7 + $0x110] sm:$0xf]
    %v5174 = vld [vmem:[#allocation7 + $0x114] sm:$0xf]
    %v5175 = vld [vmem:[#allocation7 + $0x118] sm:$0xf]
    %v5176 = vld [vmem:[#allocation7 + $0x11c] sm:$0xf]
    %v5177 = vld [vmem:[#allocation7 + $0x120] sm:$0xf]
    %v5178 = vld [vmem:[#allocation7 + $0x124] sm:$0xf]
    %v5179 = vld [vmem:[#allocation7 + $0x128] sm:$0xf]
    %v5180 = vld [vmem:[#allocation7 + $0x12c] sm:$0xf]
    %v5181 = vld [vmem:[#allocation7 + $0x130] sm:$0xf]
    %v5182 = vld [vmem:[#allocation7 + $0x134] sm:$0xf]
    %v5183 = vld [vmem:[#allocation7 + $0x138] sm:$0xf]
    %v5184 = vld [vmem:[#allocation7 + $0x13c] sm:$0xf]
    %v5265 = vunpack.c.l.b16 %v5105
    %v5266 = vunpack.c.l.b16 %v5106
    %v5267 = vunpack.c.l.b16 %v5107
    %v5268 = vunpack.c.l.b16 %v5108
    %v5269 = vunpack.c.l.b16 %v5109
    %v5270 = vunpack.c.l.b16 %v5110
    %v5271 = vunpack.c.l.b16 %v5111
    %v5272 = vunpack.c.l.b16 %v5112
    %v5273 = vunpack.c.l.b16 %v5113
    %v5274 = vunpack.c.l.b16 %v5114
    %v5275 = vunpack.c.l.b16 %v5115
    %v5276 = vunpack.c.l.b16 %v5116
    %v5277 = vunpack.c.l.b16 %v5117
    %v5278 = vunpack.c.l.b16 %v5118
    %v5279 = vunpack.c.l.b16 %v5119
    %v5280 = vunpack.c.l.b16 %v5120
    %v5281 = vunpack.c.l.b16 %v5121
    %v5282 = vunpack.c.l.b16 %v5122
    %v5283 = vunpack.c.l.b16 %v5123
    %v5284 = vunpack.c.l.b16 %v5124
    %v5285 = vunpack.c.l.b16 %v5125
    %v5286 = vunpack.c.l.b16 %v5126
    %v5287 = vunpack.c.l.b16 %v5127
    %v5288 = vunpack.c.l.b16 %v5128
    %v5289 = vunpack.c.l.b16 %v5129
    %v5290 = vunpack.c.l.b16 %v5130
    %v5291 = vunpack.c.l.b16 %v5131
    %v5292 = vunpack.c.l.b16 %v5132
    %v5293 = vunpack.c.l.b16 %v5133
    %v5294 = vunpack.c.l.b16 %v5134
    %v5295 = vunpack.c.l.b16 %v5135
    %v5296 = vunpack.c.l.b16 %v5136
    %v5297 = vunpack.c.l.b16 %v5137
    %v5298 = vunpack.c.l.b16 %v5138
    %v5299 = vunpack.c.l.b16 %v5139
    %v5300 = vunpack.c.l.b16 %v5140
    %v5301 = vunpack.c.l.b16 %v5141
    %v5302 = vunpack.c.l.b16 %v5142
    %v5303 = vunpack.c.l.b16 %v5143
    %v5304 = vunpack.c.l.b16 %v5144
    %v5305 = vunpack.c.l.b16 %v5145
    %v5306 = vunpack.c.l.b16 %v5146
    %v5307 = vunpack.c.l.b16 %v5147
    %v5308 = vunpack.c.l.b16 %v5148
    %v5309 = vunpack.c.l.b16 %v5149
    %v5310 = vunpack.c.l.b16 %v5150
    %v5311 = vunpack.c.l.b16 %v5151
    %v5312 = vunpack.c.l.b16 %v5152
    %v5313 = vunpack.c.l.b16 %v5153
    %v5314 = vunpack.c.l.b16 %v5154
    %v5315 = vunpack.c.l.b16 %v5155
    %v5316 = vunpack.c.l.b16 %v5156
    %v5317 = vunpack.c.l.b16 %v5157
    %v5318 = vunpack.c.l.b16 %v5158
    %v5319 = vunpack.c.l.b16 %v5159
    %v5320 = vunpack.c.l.b16 %v5160
    %v5321 = vunpack.c.l.b16 %v5161
    %v5322 = vunpack.c.l.b16 %v5162
    %v5323 = vunpack.c.l.b16 %v5163
    %v5324 = vunpack.c.l.b16 %v5164
    %v5325 = vunpack.c.l.b16 %v5165
    %v5326 = vunpack.c.l.b16 %v5166
    %v5327 = vunpack.c.l.b16 %v5167
    %v5328 = vunpack.c.l.b16 %v5168
    %v5329 = vunpack.c.l.b16 %v5169
    %v5330 = vunpack.c.l.b16 %v5170
    %v5331 = vunpack.c.l.b16 %v5171
    %v5332 = vunpack.c.l.b16 %v5172
    %v5333 = vunpack.c.l.b16 %v5173
    %v5334 = vunpack.c.l.b16 %v5174
    %v5335 = vunpack.c.l.b16 %v5175
    %v5336 = vunpack.c.l.b16 %v5176
    %v5337 = vunpack.c.l.b16 %v5177
    %v5338 = vunpack.c.l.b16 %v5178
    %v5339 = vunpack.c.l.b16 %v5179
    %v5340 = vunpack.c.l.b16 %v5180
    %v5341 = vunpack.c.l.b16 %v5181
    %v5342 = vunpack.c.l.b16 %v5182
    %v5343 = vunpack.c.l.b16 %v5183
    %v5344 = vunpack.c.l.b16 %v5184
    %v5345 = vpack.c.b16 %v5266, %v5265
    %v5346 = vpack.c.b16 %v5268, %v5267
    %v5347 = vpack.c.b16 %v5270, %v5269
    %v5348 = vpack.c.b16 %v5272, %v5271
    %v5349 = vpack.c.b16 %v5274, %v5273
    %v5350 = vpack.c.b16 %v5276, %v5275
    %v5351 = vpack.c.b16 %v5278, %v5277
    %v5352 = vpack.c.b16 %v5280, %v5279
    %v5353 = vpack.c.b16 %v5282, %v5281
    %v5354 = vpack.c.b16 %v5284, %v5283
    %v5355 = vpack.c.b16 %v5286, %v5285
    %v5356 = vpack.c.b16 %v5288, %v5287
    %v5357 = vpack.c.b16 %v5290, %v5289
    %v5358 = vpack.c.b16 %v5292, %v5291
    %v5359 = vpack.c.b16 %v5294, %v5293
    %v5360 = vpack.c.b16 %v5296, %v5295
    %v5361 = vpack.c.b16 %v5298, %v5297
    %v5362 = vpack.c.b16 %v5300, %v5299
    %v5363 = vpack.c.b16 %v5302, %v5301
    %v5364 = vpack.c.b16 %v5304, %v5303
    %v5365 = vpack.c.b16 %v5306, %v5305
    %v5366 = vpack.c.b16 %v5308, %v5307
    %v5367 = vpack.c.b16 %v5310, %v5309
    %v5368 = vpack.c.b16 %v5312, %v5311
    %v5369 = vpack.c.b16 %v5314, %v5313
    %v5370 = vpack.c.b16 %v5316, %v5315
    %v5371 = vpack.c.b16 %v5318, %v5317
    %v5372 = vpack.c.b16 %v5320, %v5319
    %v5373 = vpack.c.b16 %v5322, %v5321
    %v5374 = vpack.c.b16 %v5324, %v5323
    %v5375 = vpack.c.b16 %v5326, %v5325
    %v5376 = vpack.c.b16 %v5328, %v5327
    %v5377 = vpack.c.b16 %v5330, %v5329
    %v5378 = vpack.c.b16 %v5332, %v5331
    %v5379 = vpack.c.b16 %v5334, %v5333
    %v5380 = vpack.c.b16 %v5336, %v5335
    %v5381 = vpack.c.b16 %v5338, %v5337
    %v5382 = vpack.c.b16 %v5340, %v5339
    %v5383 = vpack.c.b16 %v5342, %v5341
    %v5384 = vpack.c.b16 %v5344, %v5343
    %5425 = vmatpush.bf16.msra.mxu0 %v5352
    %5426 = vmatpush.bf16.msra.mxu0 %v5351
    %5427 = vmatpush.bf16.msra.mxu0 %v5350
    %5428 = vmatpush.bf16.msra.mxu0 %v5349
    %5429 = vmatpush.bf16.msra.mxu0 %v5348
    %5430 = vmatpush.bf16.msra.mxu0 %v5347
    %5431 = vmatpush.bf16.msra.mxu0 %v5346
    %5432 = vmatpush.bf16.msra.mxu0 %v5345
    %5433 = vmatmul.bf16.gmra.mxu0 %v5100
    %v5434 = vpop.f32.mrf.mxu0
    %v5435 = vadd.f32 0.0, %v5434
    %v5436 = vpop.f32.mrf.mxu0
    %v5437 = vadd.f32 0.0, %v5436
    %5438 = vdwg.mxu0
    %5439 = vmatpush.bf16.msra.mxu0 %v5360
    %5440 = vmatpush.bf16.msra.mxu0 %v5359
    %5441 = vmatpush.bf16.msra.mxu0 %v5358
    %5442 = vmatpush.bf16.msra.mxu0 %v5357
    %5443 = vmatpush.bf16.msra.mxu0 %v5356
    %5444 = vmatpush.bf16.msra.mxu0 %v5355
    %5445 = vmatpush.bf16.msra.mxu0 %v5354
    %5446 = vmatpush.bf16.msra.mxu0 %v5353
    %5447 = vmatmul.bf16.gmra.mxu0 %v5101
    %v5448 = vpop.f32.mrf.mxu0
    %v5449 = vadd.f32 %v5435, %v5448
    %v5450 = vpop.f32.mrf.mxu0
    %v5451 = vadd.f32 %v5437, %v5450
    %5452 = vdwg.mxu0
    %5453 = vmatpush.bf16.msra.mxu0 %v5368
    %5454 = vmatpush.bf16.msra.mxu0 %v5367
    %5455 = vmatpush.bf16.msra.mxu0 %v5366
    %5456 = vmatpush.bf16.msra.mxu0 %v5365
    %5457 = vmatpush.bf16.msra.mxu0 %v5364
    %5458 = vmatpush.bf16.msra.mxu0 %v5363
    %5459 = vmatpush.bf16.msra.mxu0 %v5362
    %5460 = vmatpush.bf16.msra.mxu0 %v5361
    %5461 = vmatmul.bf16.gmra.mxu0 %v5102
    %v5462 = vpop.f32.mrf.mxu0
    %v5463 = vadd.f32 %v5449, %v5462
    %v5464 = vpop.f32.mrf.mxu0
    %v5465 = vadd.f32 %v5451, %v5464
    %5466 = vdwg.mxu0
    %5467 = vmatpush.bf16.msra.mxu0 %v5376
    %5468 = vmatpush.bf16.msra.mxu0 %v5375
    %5469 = vmatpush.bf16.msra.mxu0 %v5374
    %5470 = vmatpush.bf16.msra.mxu0 %v5373
    %5471 = vmatpush.bf16.msra.mxu0 %v5372
    %5472 = vmatpush.bf16.msra.mxu0 %v5371
    %5473 = vmatpush.bf16.msra.mxu0 %v5370
    %5474 = vmatpush.bf16.msra.mxu0 %v5369
    %5475 = vmatmul.bf16.gmra.mxu0 %v5103
    %v5476 = vpop.f32.mrf.mxu0
    %v5477 = vadd.f32 %v5463, %v5476
    %v5478 = vpop.f32.mrf.mxu0
    %v5479 = vadd.f32 %v5465, %v5478
    %5480 = vdwg.mxu0
    %5481 = vmatpush.bf16.msra.mxu0 %v5384
    %5482 = vmatpush.bf16.msra.mxu0 %v5383
    %5483 = vmatpush.bf16.msra.mxu0 %v5382
    %5484 = vmatpush.bf16.msra.mxu0 %v5381
    %5485 = vmatpush.bf16.msra.mxu0 %v5380
    %5486 = vmatpush.bf16.msra.mxu0 %v5379
    %5487 = vmatpush.bf16.msra.mxu0 %v5378
    %5488 = vmatpush.bf16.msra.mxu0 %v5377
    %5489 = vmatmul.bf16.gmra.mxu0 %v5104
    %v5490 = vpop.f32.mrf.mxu0
    %v5491 = vadd.f32 %v5477, %v5490
    %v5492 = vpop.f32.mrf.mxu0
    %v5493 = vadd.f32 %v5479, %v5492
    %5494 = vdwg.mxu0
    %5495 = vst [vmem:[#allocation8] sm:$0xff] %v5491
    %5496 = vst [vmem:[#allocation8 + $0x8] sm:$0xff] %v5493
    // Predicated region
    $region26: #{tpu_custom_call.1} parent=1 // pred_check
      _
    $region27: #{tpu_custom_call.1} parent=1 // pred_check_branch
      %5498 = sbr.rel (0) target = $region29
    $region28: #{tpu_custom_call.1} parent=1 // pred_region
      %5500 = vsyncadd [#allocation4], 0
      %s5501 = sshll.u32 [#allocation8], 4
      %s5502 = int_to_ptr.vmem [resolvable:$true] %s5501
      %s5503 = sshll.u32 %s3, 4
      %s5504 = int_to_ptr.hbm [resolvable:$true] %s5503
      %5509 = dma.vmem_to_hbm [thread:$0]  %s5502, 256, %s5504, [#allocation4], 128, 128, 8
    $region29: #{tpu_custom_call.1} parent=1 // pred_fallthru
      _
    // Predicated region
    $region30: #{tpu_custom_call.1} parent=1 // pred_check
      _
    $region31: #{tpu_custom_call.1} parent=1 // pred_check_branch
      %5511 = sbr.rel (0) target = $region33
    $region32: #{tpu_custom_call.1} parent=1 // pred_region
      %5513 = dma.done [#allocation4], 256
    $region33: #{tpu_custom_call.1} parent=1 // pred_fallthru
      _
    %5514 = vsyncpa [#allocation3], 1
    %5515 = vsyncpa [#allocation6], 1
    %5516 = vsyncpa [#allocation4], 1

</llo_original>
